<compile_context>
chip_gen: v6e
topology: v6e:2x2x1
jax: 0.10.0
libtpu: 0.0.40
codegen_flags: <defaults>
</compile_context>

<pallas_src>
import jax
import jax.numpy as jnp
from jax.experimental import pallas as pl
from jax.experimental.pallas import tpu as pltpu


def _round_up(n, m):
    return ((n + m - 1) // m) * m


def mlp_skin_kernel(x_ref,
                    w1_ref, b1_ref,
                    w2_ref, b2_ref,
                    w3_ref, b3_ref,
                    o_ref):
    # x arrives as f32 straight from HBM; cast to bf16 in-kernel (saves a full
    # HBM round-trip versus a wrapper-side astype/pad pass).
    x = x_ref[...].astype(jnp.bfloat16)
    # fc1: bf16 matmul, f32 accumulate, f32 bias, then cast -> relu in bf16.
    h = jnp.dot(x, w1_ref[...], preferred_element_type=jnp.float32) + b1_ref[...]
    h = jnp.maximum(h.astype(jnp.bfloat16), 0.0)
    # fc2 + relu
    h = jnp.dot(h, w2_ref[...], preferred_element_type=jnp.float32) + b2_ref[...]
    h = jnp.maximum(h.astype(jnp.bfloat16), 0.0)
    # fc3 (no activation), lane-dense padded bf16 output
    o_ref[...] = (jnp.dot(h, w3_ref[...], preferred_element_type=jnp.float32)
                  + b3_ref[...]).astype(o_ref.dtype)


def prepare_params(params):
    """One-time constant folding + padding + bf16 cast of LinearGroupNJ params.

    Folds the eval-mode z_mu scale into the (in, out) weight matrices, zero-pads
    all hidden/output widths up to multiples of 128, and casts weights to bf16
    (biases stay f32 and are added after the f32 accumulation).
    """
    h1 = params["w1"].shape[1]
    h2 = params["w2"].shape[1]
    dout = params["w3"].shape[1]
    H1, H2, DO = _round_up(h1, 128), _round_up(h2, 128), _round_up(dout, 128)

    # (x * z) @ W  ==  x @ (diag(z) @ W)  -> fold z into the weights.
    w1 = params["z1"].reshape(-1, 1) * params["w1"]
    w2 = params["z2"].reshape(-1, 1) * params["w2"]
    w3 = params["z3"].reshape(-1, 1) * params["w3"]

    # Zero-pad: padded hidden columns produce relu(0)=0 and feed zero weight
    # rows of the next layer, so results in the real columns are unchanged.
    prepped = {
        "w1": jnp.pad(w1, ((0, 0), (0, H1 - h1))).astype(jnp.bfloat16),
        "b1": jnp.pad(params["b1"], ((0, 0), (0, H1 - h1))),
        "w2": jnp.pad(w2, ((0, H1 - h1), (0, H2 - h2))).astype(jnp.bfloat16),
        "b2": jnp.pad(params["b2"], ((0, 0), (0, H2 - h2))),
        "w3": jnp.pad(w3, ((0, H2 - h2), (0, DO - dout))).astype(jnp.bfloat16),
        "b3": jnp.pad(params["b3"], ((0, 0), (0, DO - dout))),
    }
    return prepped, dout


def _pick_batch_tile(B, tile_b):
    """8-aligned batch tile: minimal padding, and >=2 grid steps whenever B
    allows it (so the 'parallel' batch axis shards across both v7x TCs)."""
    if B <= 2 * tile_b:
        return max(8, _round_up(pl.cdiv(B, 2), 8))
    return tile_b


def mlp_skin_forward(x, prepped, dim_out, tile_b=512):
    """x: [B, 2048] float32. prepped: output of prepare_params. Returns bf16."""
    B, DIN = x.shape
    H1 = prepped["w1"].shape[1]
    H2 = prepped["w2"].shape[1]
    DO = prepped["w3"].shape[1]

    tb = _pick_batch_tile(B, tile_b)
    Bp = _round_up(B, tb)
    xb = x if Bp == B else jnp.pad(x, ((0, Bp - B), (0, 0)))

    # Rough VMEM footprint; only raise the scoped limit above the 32 MiB
    # default when needed (keep well under v7x's 64 MiB physical VMEM).
    vmem_est = (tb * DIN * 4 * 2                          # f32 x tile, 2-buffered
                + (DIN * H1 + H1 * H2 + H2 * DO) * 2      # bf16 weights, 1-buffered
                + (H1 + H2 + DO) * 4                      # f32 biases
                + tb * DO * 2 * 2                         # bf16 out tile, 2-buffered
                + tb * (H1 + H2) * 4)                     # intermediate activations
    vmem_limit = None
    if vmem_est > 24 * 1024 * 1024:
        vmem_limit = min(int(vmem_est * 3 // 2), 56 * 1024 * 1024)

    const = lambda i: (0, 0)                # weights/biases: fetched once
    resident = dict(pipeline_mode=pl.Buffered(1))   # ... and single-buffered

    out = pl.pallas_call(
        mlp_skin_kernel,
        out_shape=jax.ShapeDtypeStruct((Bp, DO), jnp.bfloat16),
        grid=(Bp // tb,),
        in_specs=[
            # x tile (f32, pipelined; bump to pl.Buffered(3) if DMA shows exposed)
            pl.BlockSpec((tb, DIN), lambda i: (i, 0)),
            pl.BlockSpec((DIN, H1), const, **resident),
            pl.BlockSpec((1, H1), const, **resident),
            pl.BlockSpec((H1, H2), const, **resident),
            pl.BlockSpec((1, H2), const, **resident),
            pl.BlockSpec((H2, DO), const, **resident),
            pl.BlockSpec((1, DO), const, **resident),
        ],
        out_specs=pl.BlockSpec((tb, DO), lambda i: (i, 0)),
        compiler_params=pltpu.CompilerParams(
            dimension_semantics=("parallel",),
            vmem_limit_bytes=vmem_limit),
    )(xb, prepped["w1"], prepped["b1"],
      prepped["w2"], prepped["b2"],
      prepped["w3"], prepped["b3"])

    return out[:B, :dim_out]


def init_params(key, dim_encoder_out=7):
    """Deterministic synthetic init matching LinearGroupNJ shapes.
    Weights are stored pre-transposed to (in, out)."""
    dims = [(2048, 300), (300, 100), (100, dim_encoder_out)]
    params = {}
    for i, (din, dout) in enumerate(dims, start=1):
        key, kw, kz = jax.random.split(key, 3)
        params[f"w{i}"] = jax.random.normal(kw, (din, dout), jnp.float32) * 0.02
        params[f"b{i}"] = jnp.zeros((1, dout), jnp.float32)
        # z_mu ~ N(1, 0.01) as in the group-NJ layer init
        params[f"z{i}"] = 1.0 + 0.1 * jax.random.normal(kz, (1, din), jnp.float32)
    return params


def reference_forward(x, p):
    """Full-precision eval-mode reference (original module semantics)."""
    h = jnp.maximum((x * p["z1"]) @ p["w1"] + p["b1"], 0.0)
    h = jnp.maximum((h * p["z2"]) @ p["w2"] + p["b2"], 0.0)
    return (h * p["z3"]) @ p["w3"] + p["b3"]


if __name__ == "__main__":
    key = jax.random.PRNGKey(0)
    key, kx = jax.random.split(key)
    B = 8
    dim_encoder_out = 7
    x = jax.random.normal(kx, (B, 2048), jnp.float32)
    params = init_params(key, dim_encoder_out)

    prepped, dout = prepare_params(params)
    out = mlp_skin_forward(x, prepped, dout)
    out = jax.block_until_ready(out)

    ref = reference_forward(x, params)
    assert out.shape == (B, dim_encoder_out), out.shape
    # bf16 matmuls/activations/output (f32 accumulate) -> loosened tolerance
    # vs the f32 reference.
    out_f32 = out.astype(jnp.float32)
    assert jnp.allclose(out_f32, ref, atol=5e-2, rtol=5e-2), (
        "mismatch vs reference, max abs diff "
        f"{float(jnp.max(jnp.abs(out_f32 - ref)))}")
    print("KERNEL_OK")
</pallas_src>

<mosaic_0001>
module attributes {stable_mosaic.version = 11 : i64} {
  func.func @mlp_skin_kernel(%arg0: i32, %arg1: memref<8x2048xf32, #tpu.memory_space<vmem>>, %arg2: memref<2048x384xbf16, #tpu.memory_space<vmem>>, %arg3: memref<1x384xf32, #tpu.memory_space<vmem>>, %arg4: memref<384x128xbf16, #tpu.memory_space<vmem>>, %arg5: memref<1x128xf32, #tpu.memory_space<vmem>>, %arg6: memref<128x128xbf16, #tpu.memory_space<vmem>>, %arg7: memref<1x128xf32, #tpu.memory_space<vmem>>, %arg8: memref<8x128xbf16, #tpu.memory_space<vmem>>) attributes {dimension_semantics = [#tpu.dimension_semantics<parallel>], iteration_bounds = array<i64: 1>, scalar_prefetch = 0 : i64, scratch_operands = 0 : i64, tpu.core_type = #tpu.core_type<tc>, window_params = [{transform_indices = @transform_0, window_bounds = array<i64: 8, 2048>}, {pipeline_mode = #tpu.pipeline_mode<synchronous>, transform_indices = @transform_1, window_bounds = array<i64: 2048, 384>}, {pipeline_mode = #tpu.pipeline_mode<synchronous>, transform_indices = @transform_2, window_bounds = array<i64: 1, 384>}, {pipeline_mode = #tpu.pipeline_mode<synchronous>, transform_indices = @transform_3, window_bounds = array<i64: 384, 128>}, {pipeline_mode = #tpu.pipeline_mode<synchronous>, transform_indices = @transform_4, window_bounds = array<i64: 1, 128>}, {pipeline_mode = #tpu.pipeline_mode<synchronous>, transform_indices = @transform_5, window_bounds = array<i64: 128, 128>}, {pipeline_mode = #tpu.pipeline_mode<synchronous>, transform_indices = @transform_6, window_bounds = array<i64: 1, 128>}, {transform_indices = @transform_7, window_bounds = array<i64: 8, 128>}]} {
    %c0 = arith.constant 0 : index
    %c0_0 = arith.constant 0 : index
    %0 = vector.load %arg1[%c0, %c0_0] : memref<8x2048xf32, #tpu.memory_space<vmem>>, vector<8x2048xf32>
    %1 = arith.truncf %0 : vector<8x2048xf32> to vector<8x2048xbf16>
    %c0_1 = arith.constant 0 : index
    %c0_2 = arith.constant 0 : index
    %2 = vector.load %arg2[%c0_1, %c0_2] : memref<2048x384xbf16, #tpu.memory_space<vmem>>, vector<2048x384xbf16>
    %cst = arith.constant dense<0.000000e+00> : vector<8x384xf32>
    %3 = tpu.matmul %1, %2, %cst {dimension_numbers = #tpu.dot_dimension_numbers<[1], [0], [0], [1], [0, 0, 1, 1], [], []>} : vector<8x2048xbf16>, vector<2048x384xbf16>, vector<8x384xf32> -> vector<8x384xf32>
    %c0_3 = arith.constant 0 : index
    %c0_4 = arith.constant 0 : index
    %4 = vector.load %arg3[%c0_3, %c0_4] : memref<1x384xf32, #tpu.memory_space<vmem>>, vector<1x384xf32>
    %5 = vector.broadcast %4 : vector<1x384xf32> to vector<8x384xf32>
    %6 = arith.addf %3, %5 : vector<8x384xf32>
    %7 = arith.truncf %6 : vector<8x384xf32> to vector<8x384xbf16>
    %cst_5 = arith.constant 0.000000e+00 : bf16
    %8 = vector.broadcast %cst_5 : bf16 to vector<8x384xbf16>
    %9 = arith.maximumf %7, %8 : vector<8x384xbf16>
    %c0_6 = arith.constant 0 : index
    %c0_7 = arith.constant 0 : index
    %10 = vector.load %arg4[%c0_6, %c0_7] : memref<384x128xbf16, #tpu.memory_space<vmem>>, vector<384x128xbf16>
    %cst_8 = arith.constant dense<0.000000e+00> : vector<8x128xf32>
    %11 = tpu.matmul %9, %10, %cst_8 {dimension_numbers = #tpu.dot_dimension_numbers<[1], [0], [0], [1], [0, 0, 1, 1], [], []>} : vector<8x384xbf16>, vector<384x128xbf16>, vector<8x128xf32> -> vector<8x128xf32>
    %c0_9 = arith.constant 0 : index
    %c0_10 = arith.constant 0 : index
    %12 = vector.load %arg5[%c0_9, %c0_10] : memref<1x128xf32, #tpu.memory_space<vmem>>, vector<1x128xf32>
    %13 = vector.broadcast %12 : vector<1x128xf32> to vector<8x128xf32>
    %14 = arith.addf %11, %13 : vector<8x128xf32>
    %15 = arith.truncf %14 : vector<8x128xf32> to vector<8x128xbf16>
    %cst_11 = arith.constant 0.000000e+00 : bf16
    %16 = vector.broadcast %cst_11 : bf16 to vector<8x128xbf16>
    %17 = arith.maximumf %15, %16 : vector<8x128xbf16>
    %c0_12 = arith.constant 0 : index
    %c0_13 = arith.constant 0 : index
    %18 = vector.load %arg6[%c0_12, %c0_13] : memref<128x128xbf16, #tpu.memory_space<vmem>>, vector<128x128xbf16>
    %cst_14 = arith.constant dense<0.000000e+00> : vector<8x128xf32>
    %19 = tpu.matmul %17, %18, %cst_14 {dimension_numbers = #tpu.dot_dimension_numbers<[1], [0], [0], [1], [0, 0, 1, 1], [], []>} : vector<8x128xbf16>, vector<128x128xbf16>, vector<8x128xf32> -> vector<8x128xf32>
    %c0_15 = arith.constant 0 : index
    %c0_16 = arith.constant 0 : index
    %20 = vector.load %arg7[%c0_15, %c0_16] : memref<1x128xf32, #tpu.memory_space<vmem>>, vector<1x128xf32>
    %21 = vector.broadcast %20 : vector<1x128xf32> to vector<8x128xf32>
    %22 = arith.addf %19, %21 : vector<8x128xf32>
    %23 = arith.truncf %22 : vector<8x128xf32> to vector<8x128xbf16>
    %c0_17 = arith.constant 0 : index
    %c0_18 = arith.constant 0 : index
    %24 = vector.load %arg8[%c0_17, %c0_18] : memref<8x128xbf16, #tpu.memory_space<vmem>>, vector<8x128xbf16>
    tpu.vector_store %arg8[%c0_17, %c0_18], %23 {strides = array<i32>} : memref<8x128xbf16, #tpu.memory_space<vmem>>, vector<8x128xbf16>,
    return
  }
  func.func @transform_0(%arg0: i32) -> (i32, i32) {
    %c0_i32 = arith.constant 0 : i32
    %c0_i32_0 = arith.constant 0 : i32
    return %arg0, %c0_i32 : i32, i32
  }
  func.func @transform_1(%arg0: i32) -> (i32, i32) {
    %c0_i32 = arith.constant 0 : i32
    %c0_i32_0 = arith.constant 0 : i32
    %c0_i32_1 = arith.constant 0 : i32
    return %c0_i32, %c0_i32_0 : i32, i32
  }
  func.func @transform_2(%arg0: i32) -> (i32, i32) {
    %c0_i32 = arith.constant 0 : i32
    %c0_i32_0 = arith.constant 0 : i32
    %c0_i32_1 = arith.constant 0 : i32
    return %c0_i32, %c0_i32_0 : i32, i32
  }
  func.func @transform_3(%arg0: i32) -> (i32, i32) {
    %c0_i32 = arith.constant 0 : i32
    %c0_i32_0 = arith.constant 0 : i32
    %c0_i32_1 = arith.constant 0 : i32
    return %c0_i32, %c0_i32_0 : i32, i32
  }
  func.func @transform_4(%arg0: i32) -> (i32, i32) {
    %c0_i32 = arith.constant 0 : i32
    %c0_i32_0 = arith.constant 0 : i32
    %c0_i32_1 = arith.constant 0 : i32
    return %c0_i32, %c0_i32_0 : i32, i32
  }
  func.func @transform_5(%arg0: i32) -> (i32, i32) {
    %c0_i32 = arith.constant 0 : i32
    %c0_i32_0 = arith.constant 0 : i32
    %c0_i32_1 = arith.constant 0 : i32
    return %c0_i32, %c0_i32_0 : i32, i32
  }
  func.func @transform_6(%arg0: i32) -> (i32, i32) {
    %c0_i32 = arith.constant 0 : i32
    %c0_i32_0 = arith.constant 0 : i32
    %c0_i32_1 = arith.constant 0 : i32
    return %c0_i32, %c0_i32_0 : i32, i32
  }
  func.func @transform_7(%arg0: i32) -> (i32, i32) {
    %c0_i32 = arith.constant 0 : i32
    %c0_i32_0 = arith.constant 0 : i32
    return %arg0, %c0_i32 : i32, i32
  }
}

</mosaic_0001>

<llo_original>
// kernel: tpu_custom_call.1
$region0: #{tpu_custom_call.1}
  #allocation0 [shape = 'u32[]', space=smem, size = 0x4, offset = 0x4, fixed_abs, tag = 'smem constant byte address 0x4 - core index']
  #allocation1 [shape = 'u32[144,128]{1,0:T(1,128)}', space=vmem, size = 0x12000, scoped, tag = 'internal scratch']
  %s0 = inlined_call_operand.hbm [shape: f32[8,2048], index: 0, kind: input, shape index: {}]
  %s1 = inlined_call_operand.hbm [shape: bf16[2048,384], index: 1, kind: input, shape index: {}]
  %s2 = inlined_call_operand.hbm [shape: f32[1,384], index: 2, kind: input, shape index: {}]
  %s3 = inlined_call_operand.hbm [shape: bf16[384,128], index: 3, kind: input, shape index: {}]
  %s4 = inlined_call_operand.hbm [shape: f32[1,128], index: 4, kind: input, shape index: {}]
  %s5 = inlined_call_operand.hbm [shape: bf16[128,128], index: 5, kind: input, shape index: {}]
  %s6 = inlined_call_operand.hbm [shape: f32[1,128], index: 6, kind: input, shape index: {}]
  %s7 = inlined_call_operand.hbm [shape: bf16[8,128], index: 7, kind: output, shape index: {}]
  %s8 = sld [smem:[#allocation0]]
  $region66: #{tpu_custom_call.1} parent=0
    _
  %s10 = ssub.s32 1, %s8
  %s11 = scalar_select 0, %s10, %s8
  $region1: #{tpu_custom_call.1} parent=0
    #allocation2 [shape = 'u8[65536]{0}', space=vmem, size = 0x10000, scoped, tag = 'input window, operand 0, single buffered']
    #allocation3 [shape = 's32[1]{0}', space=sflag, size = 0x4, scoped, tag = 'scoped memory for tpu_custom_call.1']
    #allocation4 [shape = 's32[1]{0}', space=sflag, size = 0x4, scoped, tag = 'scoped memory for tpu_custom_call.1']
    #allocation5 [shape = 'u8[1572864]{0}', space=vmem, size = 0x180000, scoped, tag = 'input window, operand 1, single buffered']
    #allocation6 [shape = 's32[1]{0}', space=sflag, size = 0x4, scoped, tag = 'scoped memory for tpu_custom_call.1']
    #allocation7 [shape = 'u8[1536]{0}', space=vmem, size = 0x800, scoped, tag = 'input window, operand 2, single buffered']
    #allocation8 [shape = 'u8[98304]{0}', space=vmem, size = 0x18000, scoped, tag = 'input window, operand 3, single buffered']
    #allocation9 [shape = 's32[1]{0}', space=sflag, size = 0x4, scoped, tag = 'scoped memory for tpu_custom_call.1']
    #allocation10 [shape = 'u8[512]{0}', space=vmem, size = 0x400, scoped, tag = 'input window, operand 4, single buffered']
    #allocation11 [shape = 'u8[32768]{0}', space=vmem, size = 0x8000, scoped, tag = 'input window, operand 5, single buffered']
    #allocation12 [shape = 's32[1]{0}', space=sflag, size = 0x4, scoped, tag = 'scoped memory for tpu_custom_call.1']
    #allocation13 [shape = 'u8[512]{0}', space=vmem, size = 0x400, scoped, tag = 'input window, operand 6, single buffered']
    #allocation14 [shape = 'u8[2048]{0}', space=vmem, size = 0x800, scoped, tag = 'output window, operand 0, single buffered']
    %12 = vsyncpa [#allocation3], 0
    %13 = vsyncpa [#allocation6], 0
    %14 = vsyncpa [#allocation9], 0
    %15 = vsyncpa [#allocation12], 0
    %16 = vsyncpa [#allocation4], 0
    // Predicated region
    $region2: #{tpu_custom_call.1} parent=1 // pred_check
      _
    $region3: #{tpu_custom_call.1} parent=1 // pred_check_branch
      %18 = sbr.rel (0) target = $region5
    $region4: #{tpu_custom_call.1} parent=1 // pred_region
      %s20 = ssub.s32 2048, 2048
      %21 = vsyncadd [#allocation3], %s20
      %s23 = sshll.u32 [#allocation2], 4
      %s24 = int_to_ptr.vmem [resolvable:$true] %s23
      %26 = dma.hbm_to_vmem [thread:$0]  %s0, 2048, %s24, [#allocation3]
    $region5: #{tpu_custom_call.1} parent=1 // pred_fallthru
      _
    // Predicated region
    $region6: #{tpu_custom_call.1} parent=1 // pred_check
      _
    $region7: #{tpu_custom_call.1} parent=1 // pred_check_branch
      %28 = sbr.rel (0) target = $region9
    $region8: #{tpu_custom_call.1} parent=1 // pred_region
      %s30 = ssub.s32 49152, 49152
      %31 = vsyncadd [#allocation6], %s30
      %s32 = sshll.u32 [#allocation5], 4
      %s33 = int_to_ptr.vmem [resolvable:$true] %s32
      %38 = dma.hbm_to_vmem [thread:$0]  %s1, 49152, %s33, [#allocation6], 192, 192, 12
    $region9: #{tpu_custom_call.1} parent=1 // pred_fallthru
      _
    // Predicated region
    $region10: #{tpu_custom_call.1} parent=1 // pred_check
      _
    $region11: #{tpu_custom_call.1} parent=1 // pred_check_branch
      %40 = sbr.rel (0) target = $region13
    $region12: #{tpu_custom_call.1} parent=1 // pred_region
      %s42 = ssub.s32 48, 48
      %43 = vsyncadd [#allocation6], %s42
      %s45 = sshll.u32 [#allocation7], 4
      %s46 = int_to_ptr.vmem [resolvable:$true] %s45
      %48 = dma.hbm_to_vmem [thread:$0]  %s2, 48, %s46, [#allocation6]
    $region13: #{tpu_custom_call.1} parent=1 // pred_fallthru
      _
    // Predicated region
    $region14: #{tpu_custom_call.1} parent=1 // pred_check
      _
    $region15: #{tpu_custom_call.1} parent=1 // pred_check_branch
      %50 = sbr.rel (0) target = $region17
    $region16: #{tpu_custom_call.1} parent=1 // pred_region
      %s52 = ssub.s32 3072, 3072
      %53 = vsyncadd [#allocation9], %s52
      %s54 = sshll.u32 [#allocation8], 4
      %s55 = int_to_ptr.vmem [resolvable:$true] %s54
      %60 = dma.hbm_to_vmem [thread:$0]  %s3, 3072, %s55, [#allocation9], 64, 64, 4
    $region17: #{tpu_custom_call.1} parent=1 // pred_fallthru
      _
    // Predicated region
    $region18: #{tpu_custom_call.1} parent=1 // pred_check
      _
    $region19: #{tpu_custom_call.1} parent=1 // pred_check_branch
      %62 = sbr.rel (0) target = $region21
    $region20: #{tpu_custom_call.1} parent=1 // pred_region
      %s64 = ssub.s32 16, 16
      %65 = vsyncadd [#allocation9], %s64
      %s67 = sshll.u32 [#allocation10], 4
      %s68 = int_to_ptr.vmem [resolvable:$true] %s67
      %70 = dma.hbm_to_vmem [thread:$0]  %s4, 16, %s68, [#allocation9]
    $region21: #{tpu_custom_call.1} parent=1 // pred_fallthru
      _
    // Predicated region
    $region22: #{tpu_custom_call.1} parent=1 // pred_check
      _
    $region23: #{tpu_custom_call.1} parent=1 // pred_check_branch
      %72 = sbr.rel (0) target = $region25
    $region24: #{tpu_custom_call.1} parent=1 // pred_region
      %s74 = ssub.s32 1024, 1024
      %75 = vsyncadd [#allocation12], %s74
      %s76 = sshll.u32 [#allocation11], 4
      %s77 = int_to_ptr.vmem [resolvable:$true] %s76
      %82 = dma.hbm_to_vmem [thread:$0]  %s5, 1024, %s77, [#allocation12], 64, 64, 4
    $region25: #{tpu_custom_call.1} parent=1 // pred_fallthru
      _
    // Predicated region
    $region26: #{tpu_custom_call.1} parent=1 // pred_check
      _
    $region27: #{tpu_custom_call.1} parent=1 // pred_check_branch
      %84 = sbr.rel (0) target = $region29
    $region28: #{tpu_custom_call.1} parent=1 // pred_region
      %s86 = ssub.s32 16, 16
      %87 = vsyncadd [#allocation12], %s86
      %s89 = sshll.u32 [#allocation13], 4
      %s90 = int_to_ptr.vmem [resolvable:$true] %s89
      %92 = dma.hbm_to_vmem [thread:$0]  %s6, 16, %s90, [#allocation12]
    $region29: #{tpu_custom_call.1} parent=1 // pred_fallthru
      _
    // Predicated region
    $region30: #{tpu_custom_call.1} parent=1 // pred_check
      _
    $region31: #{tpu_custom_call.1} parent=1 // pred_check_branch
      %94 = sbr.rel (0) target = $region33
    $region32: #{tpu_custom_call.1} parent=1 // pred_region
      %95 = dma.done [#allocation3], 2048
    $region33: #{tpu_custom_call.1} parent=1 // pred_fallthru
      _
    // Predicated region
    $region34: #{tpu_custom_call.1} parent=1 // pred_check
      _
    $region35: #{tpu_custom_call.1} parent=1 // pred_check_branch
      %97 = sbr.rel (0) target = $region37
    $region36: #{tpu_custom_call.1} parent=1 // pred_region
      %98 = dma.done [#allocation6], 49152
    $region37: #{tpu_custom_call.1} parent=1 // pred_fallthru
      _
    // Predicated region
    $region38: #{tpu_custom_call.1} parent=1 // pred_check
      _
    $region39: #{tpu_custom_call.1} parent=1 // pred_check_branch
      %100 = sbr.rel (0) target = $region41
    $region40: #{tpu_custom_call.1} parent=1 // pred_region
      %101 = dma.done [#allocation6], 48
    $region41: #{tpu_custom_call.1} parent=1 // pred_fallthru
      _
    // Predicated region
    $region42: #{tpu_custom_call.1} parent=1 // pred_check
      _
    $region43: #{tpu_custom_call.1} parent=1 // pred_check_branch
      %103 = sbr.rel (0) target = $region45
    $region44: #{tpu_custom_call.1} parent=1 // pred_region
      %104 = dma.done [#allocation9], 3072
    $region45: #{tpu_custom_call.1} parent=1 // pred_fallthru
      _
    // Predicated region
    $region46: #{tpu_custom_call.1} parent=1 // pred_check
      _
    $region47: #{tpu_custom_call.1} parent=1 // pred_check_branch
      %106 = sbr.rel (0) target = $region49
    $region48: #{tpu_custom_call.1} parent=1 // pred_region
      %107 = dma.done [#allocation9], 16
    $region49: #{tpu_custom_call.1} parent=1 // pred_fallthru
      _
    // Predicated region
    $region50: #{tpu_custom_call.1} parent=1 // pred_check
      _
    $region51: #{tpu_custom_call.1} parent=1 // pred_check_branch
      %109 = sbr.rel (0) target = $region53
    $region52: #{tpu_custom_call.1} parent=1 // pred_region
      %110 = dma.done [#allocation12], 1024
    $region53: #{tpu_custom_call.1} parent=1 // pred_fallthru
      _
    // Predicated region
    $region54: #{tpu_custom_call.1} parent=1 // pred_check
      _
    $region55: #{tpu_custom_call.1} parent=1 // pred_check_branch
      %112 = sbr.rel (0) target = $region57
    $region56: #{tpu_custom_call.1} parent=1 // pred_region
      %113 = dma.done [#allocation12], 16
    $region57: #{tpu_custom_call.1} parent=1 // pred_fallthru
      _
    %v115 = vld [vmem:[#allocation2] sm:$0xff]
    %v116 = vld [vmem:[#allocation2 + $0x8] sm:$0xff]
    %v117 = vld [vmem:[#allocation2 + $0x10] sm:$0xff]
    %v118 = vld [vmem:[#allocation2 + $0x18] sm:$0xff]
    %v119 = vld [vmem:[#allocation2 + $0x20] sm:$0xff]
    %v120 = vld [vmem:[#allocation2 + $0x28] sm:$0xff]
    %v121 = vld [vmem:[#allocation2 + $0x30] sm:$0xff]
    %v122 = vld [vmem:[#allocation2 + $0x38] sm:$0xff]
    %v123 = vld [vmem:[#allocation2 + $0x40] sm:$0xff]
    %v124 = vld [vmem:[#allocation2 + $0x48] sm:$0xff]
    %v125 = vld [vmem:[#allocation2 + $0x50] sm:$0xff]
    %v126 = vld [vmem:[#allocation2 + $0x58] sm:$0xff]
    %v127 = vld [vmem:[#allocation2 + $0x60] sm:$0xff]
    %v128 = vld [vmem:[#allocation2 + $0x68] sm:$0xff]
    %v129 = vld [vmem:[#allocation2 + $0x70] sm:$0xff]
    %v130 = vld [vmem:[#allocation2 + $0x78] sm:$0xff]
    %v131 = vpack.c.bf16 %v115, %v115
    %v132 = vpack.c.bf16 %v116, %v116
    %v133 = vpack.c.bf16 %v117, %v117
    %v134 = vpack.c.bf16 %v118, %v118
    %v135 = vpack.c.bf16 %v119, %v119
    %v136 = vpack.c.bf16 %v120, %v120
    %v137 = vpack.c.bf16 %v121, %v121
    %v138 = vpack.c.bf16 %v122, %v122
    %v139 = vpack.c.bf16 %v123, %v123
    %v140 = vpack.c.bf16 %v124, %v124
    %v141 = vpack.c.bf16 %v125, %v125
    %v142 = vpack.c.bf16 %v126, %v126
    %v143 = vpack.c.bf16 %v127, %v127
    %v144 = vpack.c.bf16 %v128, %v128
    %v145 = vpack.c.bf16 %v129, %v129
    %v146 = vpack.c.bf16 %v130, %v130
    %v147 = vld [vmem:[#allocation5] sm:$0xff]
    %v148 = vld [vmem:[#allocation5 + $0x8] sm:$0xf]
    %v149 = vld [vmem:[#allocation5 + $0xc] sm:$0xff]
    %v150 = vld [vmem:[#allocation5 + $0x14] sm:$0xf]
    %v151 = vld [vmem:[#allocation5 + $0x18] sm:$0xff]
    %v152 = vld [vmem:[#allocation5 + $0x20] sm:$0xf]
    %v153 = vld [vmem:[#allocation5 + $0x24] sm:$0xff]
    %v154 = vld [vmem:[#allocation5 + $0x2c] sm:$0xf]
    %v155 = vld [vmem:[#allocation5 + $0x30] sm:$0xff]
    %v156 = vld [vmem:[#allocation5 + $0x38] sm:$0xf]
    %v157 = vld [vmem:[#allocation5 + $0x3c] sm:$0xff]
    %v158 = vld [vmem:[#allocation5 + $0x44] sm:$0xf]
    %v159 = vld [vmem:[#allocation5 + $0x48] sm:$0xff]
    %v160 = vld [vmem:[#allocation5 + $0x50] sm:$0xf]
    %v161 = vld [vmem:[#allocation5 + $0x54] sm:$0xff]
    %v162 = vld [vmem:[#allocation5 + $0x5c] sm:$0xf]
    %v163 = vld [vmem:[#allocation5 + $0x60] sm:$0xff]
    %v164 = vld [vmem:[#allocation5 + $0x68] sm:$0xf]
    %v165 = vld [vmem:[#allocation5 + $0x6c] sm:$0xff]
    %v166 = vld [vmem:[#allocation5 + $0x74] sm:$0xf]
    %v167 = vld [vmem:[#allocation5 + $0x78] sm:$0xff]
    %v168 = vld [vmem:[#allocation5 + $0x80] sm:$0xf]
    %v169 = vld [vmem:[#allocation5 + $0x84] sm:$0xff]
    %v170 = vld [vmem:[#allocation5 + $0x8c] sm:$0xf]
    %v171 = vld [vmem:[#allocation5 + $0x90] sm:$0xff]
    %v172 = vld [vmem:[#allocation5 + $0x98] sm:$0xf]
    %v173 = vld [vmem:[#allocation5 + $0x9c] sm:$0xff]
    %v174 = vld [vmem:[#allocation5 + $0xa4] sm:$0xf]
    %v175 = vld [vmem:[#allocation5 + $0xa8] sm:$0xff]
    %v176 = vld [vmem:[#allocation5 + $0xb0] sm:$0xf]
    %v177 = vld [vmem:[#allocation5 + $0xb4] sm:$0xff]
    %v178 = vld [vmem:[#allocation5 + $0xbc] sm:$0xf]
    %v179 = vld [vmem:[#allocation5 + $0xc0] sm:$0xff]
    %v180 = vld [vmem:[#allocation5 + $0xc8] sm:$0xf]
    %v181 = vld [vmem:[#allocation5 + $0xcc] sm:$0xff]
    %v182 = vld [vmem:[#allocation5 + $0xd4] sm:$0xf]
    %v183 = vld [vmem:[#allocation5 + $0xd8] sm:$0xff]
    %v184 = vld [vmem:[#allocation5 + $0xe0] sm:$0xf]
    %v185 = vld [vmem:[#allocation5 + $0xe4] sm:$0xff]
    %v186 = vld [vmem:[#allocation5 + $0xec] sm:$0xf]
    %v187 = vld [vmem:[#allocation5 + $0xf0] sm:$0xff]
    %v188 = vld [vmem:[#allocation5 + $0xf8] sm:$0xf]
    %v189 = vld [vmem:[#allocation5 + $0xfc] sm:$0xff]
    %v190 = vld [vmem:[#allocation5 + $0x104] sm:$0xf]
    %v191 = vld [vmem:[#allocation5 + $0x108] sm:$0xff]
    %v192 = vld [vmem:[#allocation5 + $0x110] sm:$0xf]
    %v193 = vld [vmem:[#allocation5 + $0x114] sm:$0xff]
    %v194 = vld [vmem:[#allocation5 + $0x11c] sm:$0xf]
    %v195 = vld [vmem:[#allocation5 + $0x120] sm:$0xff]
    %v196 = vld [vmem:[#allocation5 + $0x128] sm:$0xf]
    %v197 = vld [vmem:[#allocation5 + $0x12c] sm:$0xff]
    %v198 = vld [vmem:[#allocation5 + $0x134] sm:$0xf]
    %v199 = vld [vmem:[#allocation5 + $0x138] sm:$0xff]
    %v200 = vld [vmem:[#allocation5 + $0x140] sm:$0xf]
    %v201 = vld [vmem:[#allocation5 + $0x144] sm:$0xff]
    %v202 = vld [vmem:[#allocation5 + $0x14c] sm:$0xf]
    %v203 = vld [vmem:[#allocation5 + $0x150] sm:$0xff]
    %v204 = vld [vmem:[#allocation5 + $0x158] sm:$0xf]
    %v205 = vld [vmem:[#allocation5 + $0x15c] sm:$0xff]
    %v206 = vld [vmem:[#allocation5 + $0x164] sm:$0xf]
    %v207 = vld [vmem:[#allocation5 + $0x168] sm:$0xff]
    %v208 = vld [vmem:[#allocation5 + $0x170] sm:$0xf]
    %v209 = vld [vmem:[#allocation5 + $0x174] sm:$0xff]
    %v210 = vld [vmem:[#allocation5 + $0x17c] sm:$0xf]
    %v211 = vld [vmem:[#allocation5 + $0x180] sm:$0xff]
    %v212 = vld [vmem:[#allocation5 + $0x188] sm:$0xf]
    %v213 = vld [vmem:[#allocation5 + $0x18c] sm:$0xff]
    %v214 = vld [vmem:[#allocation5 + $0x194] sm:$0xf]
    %v215 = vld [vmem:[#allocation5 + $0x198] sm:$0xff]
    %v216 = vld [vmem:[#allocation5 + $0x1a0] sm:$0xf]
    %v217 = vld [vmem:[#allocation5 + $0x1a4] sm:$0xff]
    %v218 = vld [vmem:[#allocation5 + $0x1ac] sm:$0xf]
    %v219 = vld [vmem:[#allocation5 + $0x1b0] sm:$0xff]
    %v220 = vld [vmem:[#allocation5 + $0x1b8] sm:$0xf]
    %v221 = vld [vmem:[#allocation5 + $0x1bc] sm:$0xff]
    %v222 = vld [vmem:[#allocation5 + $0x1c4] sm:$0xf]
    %v223 = vld [vmem:[#allocation5 + $0x1c8] sm:$0xff]
    %v224 = vld [vmem:[#allocation5 + $0x1d0] sm:$0xf]
    %v225 = vld [vmem:[#allocation5 + $0x1d4] sm:$0xff]
    %v226 = vld [vmem:[#allocation5 + $0x1dc] sm:$0xf]
    %v227 = vld [vmem:[#allocation5 + $0x1e0] sm:$0xff]
    %v228 = vld [vmem:[#allocation5 + $0x1e8] sm:$0xf]
    %v229 = vld [vmem:[#allocation5 + $0x1ec] sm:$0xff]
    %v230 = vld [vmem:[#allocation5 + $0x1f4] sm:$0xf]
    %v231 = vld [vmem:[#allocation5 + $0x1f8] sm:$0xff]
    %v232 = vld [vmem:[#allocation5 + $0x200] sm:$0xf]
    %v233 = vld [vmem:[#allocation5 + $0x204] sm:$0xff]
    %v234 = vld [vmem:[#allocation5 + $0x20c] sm:$0xf]
    %v235 = vld [vmem:[#allocation5 + $0x210] sm:$0xff]
    %v236 = vld [vmem:[#allocation5 + $0x218] sm:$0xf]
    %v237 = vld [vmem:[#allocation5 + $0x21c] sm:$0xff]
    %v238 = vld [vmem:[#allocation5 + $0x224] sm:$0xf]
    %v239 = vld [vmem:[#allocation5 + $0x228] sm:$0xff]
    %v240 = vld [vmem:[#allocation5 + $0x230] sm:$0xf]
    %v241 = vld [vmem:[#allocation5 + $0x234] sm:$0xff]
    %v242 = vld [vmem:[#allocation5 + $0x23c] sm:$0xf]
    %v243 = vld [vmem:[#allocation5 + $0x240] sm:$0xff]
    %v244 = vld [vmem:[#allocation5 + $0x248] sm:$0xf]
    %v245 = vld [vmem:[#allocation5 + $0x24c] sm:$0xff]
    %v246 = vld [vmem:[#allocation5 + $0x254] sm:$0xf]
    %v247 = vld [vmem:[#allocation5 + $0x258] sm:$0xff]
    %v248 = vld [vmem:[#allocation5 + $0x260] sm:$0xf]
    %v249 = vld [vmem:[#allocation5 + $0x264] sm:$0xff]
    %v250 = vld [vmem:[#allocation5 + $0x26c] sm:$0xf]
    %v251 = vld [vmem:[#allocation5 + $0x270] sm:$0xff]
    %v252 = vld [vmem:[#allocation5 + $0x278] sm:$0xf]
    %v253 = vld [vmem:[#allocation5 + $0x27c] sm:$0xff]
    %v254 = vld [vmem:[#allocation5 + $0x284] sm:$0xf]
    %v255 = vld [vmem:[#allocation5 + $0x288] sm:$0xff]
    %v256 = vld [vmem:[#allocation5 + $0x290] sm:$0xf]
    %v257 = vld [vmem:[#allocation5 + $0x294] sm:$0xff]
    %v258 = vld [vmem:[#allocation5 + $0x29c] sm:$0xf]
    %v259 = vld [vmem:[#allocation5 + $0x2a0] sm:$0xff]
    %v260 = vld [vmem:[#allocation5 + $0x2a8] sm:$0xf]
    %v261 = vld [vmem:[#allocation5 + $0x2ac] sm:$0xff]
    %v262 = vld [vmem:[#allocation5 + $0x2b4] sm:$0xf]
    %v263 = vld [vmem:[#allocation5 + $0x2b8] sm:$0xff]
    %v264 = vld [vmem:[#allocation5 + $0x2c0] sm:$0xf]
    %v265 = vld [vmem:[#allocation5 + $0x2c4] sm:$0xff]
    %v266 = vld [vmem:[#allocation5 + $0x2cc] sm:$0xf]
    %v267 = vld [vmem:[#allocation5 + $0x2d0] sm:$0xff]
    %v268 = vld [vmem:[#allocation5 + $0x2d8] sm:$0xf]
    %v269 = vld [vmem:[#allocation5 + $0x2dc] sm:$0xff]
    %v270 = vld [vmem:[#allocation5 + $0x2e4] sm:$0xf]
    %v271 = vld [vmem:[#allocation5 + $0x2e8] sm:$0xff]
    %v272 = vld [vmem:[#allocation5 + $0x2f0] sm:$0xf]
    %v273 = vld [vmem:[#allocation5 + $0x2f4] sm:$0xff]
    %v274 = vld [vmem:[#allocation5 + $0x2fc] sm:$0xf]
    %v275 = vld [vmem:[#allocation5 + $0x300] sm:$0xff]
    %v276 = vld [vmem:[#allocation5 + $0x308] sm:$0xf]
    %v277 = vld [vmem:[#allocation5 + $0x30c] sm:$0xff]
    %v278 = vld [vmem:[#allocation5 + $0x314] sm:$0xf]
    %v279 = vld [vmem:[#allocation5 + $0x318] sm:$0xff]
    %v280 = vld [vmem:[#allocation5 + $0x320] sm:$0xf]
    %v281 = vld [vmem:[#allocation5 + $0x324] sm:$0xff]
    %v282 = vld [vmem:[#allocation5 + $0x32c] sm:$0xf]
    %v283 = vld [vmem:[#allocation5 + $0x330] sm:$0xff]
    %v284 = vld [vmem:[#allocation5 + $0x338] sm:$0xf]
    %v285 = vld [vmem:[#allocation5 + $0x33c] sm:$0xff]
    %v286 = vld [vmem:[#allocation5 + $0x344] sm:$0xf]
    %v287 = vld [vmem:[#allocation5 + $0x348] sm:$0xff]
    %v288 = vld [vmem:[#allocation5 + $0x350] sm:$0xf]
    %v289 = vld [vmem:[#allocation5 + $0x354] sm:$0xff]
    %v290 = vld [vmem:[#allocation5 + $0x35c] sm:$0xf]
    %v291 = vld [vmem:[#allocation5 + $0x360] sm:$0xff]
    %v292 = vld [vmem:[#allocation5 + $0x368] sm:$0xf]
    %v293 = vld [vmem:[#allocation5 + $0x36c] sm:$0xff]
    %v294 = vld [vmem:[#allocation5 + $0x374] sm:$0xf]
    %v295 = vld [vmem:[#allocation5 + $0x378] sm:$0xff]
    %v296 = vld [vmem:[#allocation5 + $0x380] sm:$0xf]
    %v297 = vld [vmem:[#allocation5 + $0x384] sm:$0xff]
    %v298 = vld [vmem:[#allocation5 + $0x38c] sm:$0xf]
    %v299 = vld [vmem:[#allocation5 + $0x390] sm:$0xff]
    %v300 = vld [vmem:[#allocation5 + $0x398] sm:$0xf]
    %v301 = vld [vmem:[#allocation5 + $0x39c] sm:$0xff]
    %v302 = vld [vmem:[#allocation5 + $0x3a4] sm:$0xf]
    %v303 = vld [vmem:[#allocation5 + $0x3a8] sm:$0xff]
    %v304 = vld [vmem:[#allocation5 + $0x3b0] sm:$0xf]
    %v305 = vld [vmem:[#allocation5 + $0x3b4] sm:$0xff]
    %v306 = vld [vmem:[#allocation5 + $0x3bc] sm:$0xf]
    %v307 = vld [vmem:[#allocation5 + $0x3c0] sm:$0xff]
    %v308 = vld [vmem:[#allocation5 + $0x3c8] sm:$0xf]
    %v309 = vld [vmem:[#allocation5 + $0x3cc] sm:$0xff]
    %v310 = vld [vmem:[#allocation5 + $0x3d4] sm:$0xf]
    %v311 = vld [vmem:[#allocation5 + $0x3d8] sm:$0xff]
    %v312 = vld [vmem:[#allocation5 + $0x3e0] sm:$0xf]
    %v313 = vld [vmem:[#allocation5 + $0x3e4] sm:$0xff]
    %v314 = vld [vmem:[#allocation5 + $0x3ec] sm:$0xf]
    %v315 = vld [vmem:[#allocation5 + $0x3f0] sm:$0xff]
    %v316 = vld [vmem:[#allocation5 + $0x3f8] sm:$0xf]
    %v317 = vld [vmem:[#allocation5 + $0x3fc] sm:$0xff]
    %v318 = vld [vmem:[#allocation5 + $0x404] sm:$0xf]
    %v319 = vld [vmem:[#allocation5 + $0x408] sm:$0xff]
    %v320 = vld [vmem:[#allocation5 + $0x410] sm:$0xf]
    %v321 = vld [vmem:[#allocation5 + $0x414] sm:$0xff]
    %v322 = vld [vmem:[#allocation5 + $0x41c] sm:$0xf]
    %v323 = vld [vmem:[#allocation5 + $0x420] sm:$0xff]
    %v324 = vld [vmem:[#allocation5 + $0x428] sm:$0xf]
    %v325 = vld [vmem:[#allocation5 + $0x42c] sm:$0xff]
    %v326 = vld [vmem:[#allocation5 + $0x434] sm:$0xf]
    %v327 = vld [vmem:[#allocation5 + $0x438] sm:$0xff]
    %v328 = vld [vmem:[#allocation5 + $0x440] sm:$0xf]
    %v329 = vld [vmem:[#allocation5 + $0x444] sm:$0xff]
    %v330 = vld [vmem:[#allocation5 + $0x44c] sm:$0xf]
    %v331 = vld [vmem:[#allocation5 + $0x450] sm:$0xff]
    %v332 = vld [vmem:[#allocation5 + $0x458] sm:$0xf]
    %v333 = vld [vmem:[#allocation5 + $0x45c] sm:$0xff]
    %v334 = vld [vmem:[#allocation5 + $0x464] sm:$0xf]
    %v335 = vld [vmem:[#allocation5 + $0x468] sm:$0xff]
    %v336 = vld [vmem:[#allocation5 + $0x470] sm:$0xf]
    %v337 = vld [vmem:[#allocation5 + $0x474] sm:$0xff]
    %v338 = vld [vmem:[#allocation5 + $0x47c] sm:$0xf]
    %v339 = vld [vmem:[#allocation5 + $0x480] sm:$0xff]
    %v340 = vld [vmem:[#allocation5 + $0x488] sm:$0xf]
    %v341 = vld [vmem:[#allocation5 + $0x48c] sm:$0xff]
    %v342 = vld [vmem:[#allocation5 + $0x494] sm:$0xf]
    %v343 = vld [vmem:[#allocation5 + $0x498] sm:$0xff]
    %v344 = vld [vmem:[#allocation5 + $0x4a0] sm:$0xf]
    %v345 = vld [vmem:[#allocation5 + $0x4a4] sm:$0xff]
    %v346 = vld [vmem:[#allocation5 + $0x4ac] sm:$0xf]
    %v347 = vld [vmem:[#allocation5 + $0x4b0] sm:$0xff]
    %v348 = vld [vmem:[#allocation5 + $0x4b8] sm:$0xf]
    %v349 = vld [vmem:[#allocation5 + $0x4bc] sm:$0xff]
    %v350 = vld [vmem:[#allocation5 + $0x4c4] sm:$0xf]
    %v351 = vld [vmem:[#allocation5 + $0x4c8] sm:$0xff]
    %v352 = vld [vmem:[#allocation5 + $0x4d0] sm:$0xf]
    %v353 = vld [vmem:[#allocation5 + $0x4d4] sm:$0xff]
    %v354 = vld [vmem:[#allocation5 + $0x4dc] sm:$0xf]
    %v355 = vld [vmem:[#allocation5 + $0x4e0] sm:$0xff]
    %v356 = vld [vmem:[#allocation5 + $0x4e8] sm:$0xf]
    %v357 = vld [vmem:[#allocation5 + $0x4ec] sm:$0xff]
    %v358 = vld [vmem:[#allocation5 + $0x4f4] sm:$0xf]
    %v359 = vld [vmem:[#allocation5 + $0x4f8] sm:$0xff]
    %v360 = vld [vmem:[#allocation5 + $0x500] sm:$0xf]
    %v361 = vld [vmem:[#allocation5 + $0x504] sm:$0xff]
    %v362 = vld [vmem:[#allocation5 + $0x50c] sm:$0xf]
    %v363 = vld [vmem:[#allocation5 + $0x510] sm:$0xff]
    %v364 = vld [vmem:[#allocation5 + $0x518] sm:$0xf]
    %v365 = vld [vmem:[#allocation5 + $0x51c] sm:$0xff]
    %v366 = vld [vmem:[#allocation5 + $0x524] sm:$0xf]
    %v367 = vld [vmem:[#allocation5 + $0x528] sm:$0xff]
    %v368 = vld [vmem:[#allocation5 + $0x530] sm:$0xf]
    %v369 = vld [vmem:[#allocation5 + $0x534] sm:$0xff]
    %v370 = vld [vmem:[#allocation5 + $0x53c] sm:$0xf]
    %v371 = vld [vmem:[#allocation5 + $0x540] sm:$0xff]
    %v372 = vld [vmem:[#allocation5 + $0x548] sm:$0xf]
    %v373 = vld [vmem:[#allocation5 + $0x54c] sm:$0xff]
    %v374 = vld [vmem:[#allocation5 + $0x554] sm:$0xf]
    %v375 = vld [vmem:[#allocation5 + $0x558] sm:$0xff]
    %v376 = vld [vmem:[#allocation5 + $0x560] sm:$0xf]
    %v377 = vld [vmem:[#allocation5 + $0x564] sm:$0xff]
    %v378 = vld [vmem:[#allocation5 + $0x56c] sm:$0xf]
    %v379 = vld [vmem:[#allocation5 + $0x570] sm:$0xff]
    %v380 = vld [vmem:[#allocation5 + $0x578] sm:$0xf]
    %v381 = vld [vmem:[#allocation5 + $0x57c] sm:$0xff]
    %v382 = vld [vmem:[#allocation5 + $0x584] sm:$0xf]
    %v383 = vld [vmem:[#allocation5 + $0x588] sm:$0xff]
    %v384 = vld [vmem:[#allocation5 + $0x590] sm:$0xf]
    %v385 = vld [vmem:[#allocation5 + $0x594] sm:$0xff]
    %v386 = vld [vmem:[#allocation5 + $0x59c] sm:$0xf]
    %v387 = vld [vmem:[#allocation5 + $0x5a0] sm:$0xff]
    %v388 = vld [vmem:[#allocation5 + $0x5a8] sm:$0xf]
    %v389 = vld [vmem:[#allocation5 + $0x5ac] sm:$0xff]
    %v390 = vld [vmem:[#allocation5 + $0x5b4] sm:$0xf]
    %v391 = vld [vmem:[#allocation5 + $0x5b8] sm:$0xff]
    %v392 = vld [vmem:[#allocation5 + $0x5c0] sm:$0xf]
    %v393 = vld [vmem:[#allocation5 + $0x5c4] sm:$0xff]
    %v394 = vld [vmem:[#allocation5 + $0x5cc] sm:$0xf]
    %v395 = vld [vmem:[#allocation5 + $0x5d0] sm:$0xff]
    %v396 = vld [vmem:[#allocation5 + $0x5d8] sm:$0xf]
    %v397 = vld [vmem:[#allocation5 + $0x5dc] sm:$0xff]
    %v398 = vld [vmem:[#allocation5 + $0x5e4] sm:$0xf]
    %v399 = vld [vmem:[#allocation5 + $0x5e8] sm:$0xff]
    %v400 = vld [vmem:[#allocation5 + $0x5f0] sm:$0xf]
    %v401 = vld [vmem:[#allocation5 + $0x5f4] sm:$0xff]
    %v402 = vld [vmem:[#allocation5 + $0x5fc] sm:$0xf]
    %v403 = vld [vmem:[#allocation5 + $0x600] sm:$0xff]
    %v404 = vld [vmem:[#allocation5 + $0x608] sm:$0xf]
    %v405 = vld [vmem:[#allocation5 + $0x60c] sm:$0xff]
    %v406 = vld [vmem:[#allocation5 + $0x614] sm:$0xf]
    %v407 = vld [vmem:[#allocation5 + $0x618] sm:$0xff]
    %v408 = vld [vmem:[#allocation5 + $0x620] sm:$0xf]
    %v409 = vld [vmem:[#allocation5 + $0x624] sm:$0xff]
    %v410 = vld [vmem:[#allocation5 + $0x62c] sm:$0xf]
    %v411 = vld [vmem:[#allocation5 + $0x630] sm:$0xff]
    %v412 = vld [vmem:[#allocation5 + $0x638] sm:$0xf]
    %v413 = vld [vmem:[#allocation5 + $0x63c] sm:$0xff]
    %v414 = vld [vmem:[#allocation5 + $0x644] sm:$0xf]
    %v415 = vld [vmem:[#allocation5 + $0x648] sm:$0xff]
    %v416 = vld [vmem:[#allocation5 + $0x650] sm:$0xf]
    %v417 = vld [vmem:[#allocation5 + $0x654] sm:$0xff]
    %v418 = vld [vmem:[#allocation5 + $0x65c] sm:$0xf]
    %v419 = vld [vmem:[#allocation5 + $0x660] sm:$0xff]
    %v420 = vld [vmem:[#allocation5 + $0x668] sm:$0xf]
    %v421 = vld [vmem:[#allocation5 + $0x66c] sm:$0xff]
    %v422 = vld [vmem:[#allocation5 + $0x674] sm:$0xf]
    %v423 = vld [vmem:[#allocation5 + $0x678] sm:$0xff]
    %v424 = vld [vmem:[#allocation5 + $0x680] sm:$0xf]
    %v425 = vld [vmem:[#allocation5 + $0x684] sm:$0xff]
    %v426 = vld [vmem:[#allocation5 + $0x68c] sm:$0xf]
    %v427 = vld [vmem:[#allocation5 + $0x690] sm:$0xff]
    %v428 = vld [vmem:[#allocation5 + $0x698] sm:$0xf]
    %v429 = vld [vmem:[#allocation5 + $0x69c] sm:$0xff]
    %v430 = vld [vmem:[#allocation5 + $0x6a4] sm:$0xf]
    %v431 = vld [vmem:[#allocation5 + $0x6a8] sm:$0xff]
    %v432 = vld [vmem:[#allocation5 + $0x6b0] sm:$0xf]
    %v433 = vld [vmem:[#allocation5 + $0x6b4] sm:$0xff]
    %v434 = vld [vmem:[#allocation5 + $0x6bc] sm:$0xf]
    %v435 = vld [vmem:[#allocation5 + $0x6c0] sm:$0xff]
    %v436 = vld [vmem:[#allocation5 + $0x6c8] sm:$0xf]
    %v437 = vld [vmem:[#allocation5 + $0x6cc] sm:$0xff]
    %v438 = vld [vmem:[#allocation5 + $0x6d4] sm:$0xf]
    %v439 = vld [vmem:[#allocation5 + $0x6d8] sm:$0xff]
    %v440 = vld [vmem:[#allocation5 + $0x6e0] sm:$0xf]
    %v441 = vld [vmem:[#allocation5 + $0x6e4] sm:$0xff]
    %v442 = vld [vmem:[#allocation5 + $0x6ec] sm:$0xf]
    %v443 = vld [vmem:[#allocation5 + $0x6f0] sm:$0xff]
    %v444 = vld [vmem:[#allocation5 + $0x6f8] sm:$0xf]
    %v445 = vld [vmem:[#allocation5 + $0x6fc] sm:$0xff]
    %v446 = vld [vmem:[#allocation5 + $0x704] sm:$0xf]
    %v447 = vld [vmem:[#allocation5 + $0x708] sm:$0xff]
    %v448 = vld [vmem:[#allocation5 + $0x710] sm:$0xf]
    %v449 = vld [vmem:[#allocation5 + $0x714] sm:$0xff]
    %v450 = vld [vmem:[#allocation5 + $0x71c] sm:$0xf]
    %v451 = vld [vmem:[#allocation5 + $0x720] sm:$0xff]
    %v452 = vld [vmem:[#allocation5 + $0x728] sm:$0xf]
    %v453 = vld [vmem:[#allocation5 + $0x72c] sm:$0xff]
    %v454 = vld [vmem:[#allocation5 + $0x734] sm:$0xf]
    %v455 = vld [vmem:[#allocation5 + $0x738] sm:$0xff]
    %v456 = vld [vmem:[#allocation5 + $0x740] sm:$0xf]
    %v457 = vld [vmem:[#allocation5 + $0x744] sm:$0xff]
    %v458 = vld [vmem:[#allocation5 + $0x74c] sm:$0xf]
    %v459 = vld [vmem:[#allocation5 + $0x750] sm:$0xff]
    %v460 = vld [vmem:[#allocation5 + $0x758] sm:$0xf]
    %v461 = vld [vmem:[#allocation5 + $0x75c] sm:$0xff]
    %v462 = vld [vmem:[#allocation5 + $0x764] sm:$0xf]
    %v463 = vld [vmem:[#allocation5 + $0x768] sm:$0xff]
    %v464 = vld [vmem:[#allocation5 + $0x770] sm:$0xf]
    %v465 = vld [vmem:[#allocation5 + $0x774] sm:$0xff]
    %v466 = vld [vmem:[#allocation5 + $0x77c] sm:$0xf]
    %v467 = vld [vmem:[#allocation5 + $0x780] sm:$0xff]
    %v468 = vld [vmem:[#allocation5 + $0x788] sm:$0xf]
    %v469 = vld [vmem:[#allocation5 + $0x78c] sm:$0xff]
    %v470 = vld [vmem:[#allocation5 + $0x794] sm:$0xf]
    %v471 = vld [vmem:[#allocation5 + $0x798] sm:$0xff]
    %v472 = vld [vmem:[#allocation5 + $0x7a0] sm:$0xf]
    %v473 = vld [vmem:[#allocation5 + $0x7a4] sm:$0xff]
    %v474 = vld [vmem:[#allocation5 + $0x7ac] sm:$0xf]
    %v475 = vld [vmem:[#allocation5 + $0x7b0] sm:$0xff]
    %v476 = vld [vmem:[#allocation5 + $0x7b8] sm:$0xf]
    %v477 = vld [vmem:[#allocation5 + $0x7bc] sm:$0xff]
    %v478 = vld [vmem:[#allocation5 + $0x7c4] sm:$0xf]
    %v479 = vld [vmem:[#allocation5 + $0x7c8] sm:$0xff]
    %v480 = vld [vmem:[#allocation5 + $0x7d0] sm:$0xf]
    %v481 = vld [vmem:[#allocation5 + $0x7d4] sm:$0xff]
    %v482 = vld [vmem:[#allocation5 + $0x7dc] sm:$0xf]
    %v483 = vld [vmem:[#allocation5 + $0x7e0] sm:$0xff]
    %v484 = vld [vmem:[#allocation5 + $0x7e8] sm:$0xf]
    %v485 = vld [vmem:[#allocation5 + $0x7ec] sm:$0xff]
    %v486 = vld [vmem:[#allocation5 + $0x7f4] sm:$0xf]
    %v487 = vld [vmem:[#allocation5 + $0x7f8] sm:$0xff]
    %v488 = vld [vmem:[#allocation5 + $0x800] sm:$0xf]
    %v489 = vld [vmem:[#allocation5 + $0x804] sm:$0xff]
    %v490 = vld [vmem:[#allocation5 + $0x80c] sm:$0xf]
    %v491 = vld [vmem:[#allocation5 + $0x810] sm:$0xff]
    %v492 = vld [vmem:[#allocation5 + $0x818] sm:$0xf]
    %v493 = vld [vmem:[#allocation5 + $0x81c] sm:$0xff]
    %v494 = vld [vmem:[#allocation5 + $0x824] sm:$0xf]
    %v495 = vld [vmem:[#allocation5 + $0x828] sm:$0xff]
    %v496 = vld [vmem:[#allocation5 + $0x830] sm:$0xf]
    %v497 = vld [vmem:[#allocation5 + $0x834] sm:$0xff]
    %v498 = vld [vmem:[#allocation5 + $0x83c] sm:$0xf]
    %v499 = vld [vmem:[#allocation5 + $0x840] sm:$0xff]
    %v500 = vld [vmem:[#allocation5 + $0x848] sm:$0xf]
    %v501 = vld [vmem:[#allocation5 + $0x84c] sm:$0xff]
    %v502 = vld [vmem:[#allocation5 + $0x854] sm:$0xf]
    %v503 = vld [vmem:[#allocation5 + $0x858] sm:$0xff]
    %v504 = vld [vmem:[#allocation5 + $0x860] sm:$0xf]
    %v505 = vld [vmem:[#allocation5 + $0x864] sm:$0xff]
    %v506 = vld [vmem:[#allocation5 + $0x86c] sm:$0xf]
    %v507 = vld [vmem:[#allocation5 + $0x870] sm:$0xff]
    %v508 = vld [vmem:[#allocation5 + $0x878] sm:$0xf]
    %v509 = vld [vmem:[#allocation5 + $0x87c] sm:$0xff]
    %v510 = vld [vmem:[#allocation5 + $0x884] sm:$0xf]
    %v511 = vld [vmem:[#allocation5 + $0x888] sm:$0xff]
    %v512 = vld [vmem:[#allocation5 + $0x890] sm:$0xf]
    %v513 = vld [vmem:[#allocation5 + $0x894] sm:$0xff]
    %v514 = vld [vmem:[#allocation5 + $0x89c] sm:$0xf]
    %v515 = vld [vmem:[#allocation5 + $0x8a0] sm:$0xff]
    %v516 = vld [vmem:[#allocation5 + $0x8a8] sm:$0xf]
    %v517 = vld [vmem:[#allocation5 + $0x8ac] sm:$0xff]
    %v518 = vld [vmem:[#allocation5 + $0x8b4] sm:$0xf]
    %v519 = vld [vmem:[#allocation5 + $0x8b8] sm:$0xff]
    %v520 = vld [vmem:[#allocation5 + $0x8c0] sm:$0xf]
    %v521 = vld [vmem:[#allocation5 + $0x8c4] sm:$0xff]
    %v522 = vld [vmem:[#allocation5 + $0x8cc] sm:$0xf]
    %v523 = vld [vmem:[#allocation5 + $0x8d0] sm:$0xff]
    %v524 = vld [vmem:[#allocation5 + $0x8d8] sm:$0xf]
    %v525 = vld [vmem:[#allocation5 + $0x8dc] sm:$0xff]
    %v526 = vld [vmem:[#allocation5 + $0x8e4] sm:$0xf]
    %v527 = vld [vmem:[#allocation5 + $0x8e8] sm:$0xff]
    %v528 = vld [vmem:[#allocation5 + $0x8f0] sm:$0xf]
    %v529 = vld [vmem:[#allocation5 + $0x8f4] sm:$0xff]
    %v530 = vld [vmem:[#allocation5 + $0x8fc] sm:$0xf]
    %v531 = vld [vmem:[#allocation5 + $0x900] sm:$0xff]
    %v532 = vld [vmem:[#allocation5 + $0x908] sm:$0xf]
    %v533 = vld [vmem:[#allocation5 + $0x90c] sm:$0xff]
    %v534 = vld [vmem:[#allocation5 + $0x914] sm:$0xf]
    %v535 = vld [vmem:[#allocation5 + $0x918] sm:$0xff]
    %v536 = vld [vmem:[#allocation5 + $0x920] sm:$0xf]
    %v537 = vld [vmem:[#allocation5 + $0x924] sm:$0xff]
    %v538 = vld [vmem:[#allocation5 + $0x92c] sm:$0xf]
    %v539 = vld [vmem:[#allocation5 + $0x930] sm:$0xff]
    %v540 = vld [vmem:[#allocation5 + $0x938] sm:$0xf]
    %v541 = vld [vmem:[#allocation5 + $0x93c] sm:$0xff]
    %v542 = vld [vmem:[#allocation5 + $0x944] sm:$0xf]
    %v543 = vld [vmem:[#allocation5 + $0x948] sm:$0xff]
    %v544 = vld [vmem:[#allocation5 + $0x950] sm:$0xf]
    %v545 = vld [vmem:[#allocation5 + $0x954] sm:$0xff]
    %v546 = vld [vmem:[#allocation5 + $0x95c] sm:$0xf]
    %v547 = vld [vmem:[#allocation5 + $0x960] sm:$0xff]
    %v548 = vld [vmem:[#allocation5 + $0x968] sm:$0xf]
    %v549 = vld [vmem:[#allocation5 + $0x96c] sm:$0xff]
    %v550 = vld [vmem:[#allocation5 + $0x974] sm:$0xf]
    %v551 = vld [vmem:[#allocation5 + $0x978] sm:$0xff]
    %v552 = vld [vmem:[#allocation5 + $0x980] sm:$0xf]
    %v553 = vld [vmem:[#allocation5 + $0x984] sm:$0xff]
    %v554 = vld [vmem:[#allocation5 + $0x98c] sm:$0xf]
    %v555 = vld [vmem:[#allocation5 + $0x990] sm:$0xff]
    %v556 = vld [vmem:[#allocation5 + $0x998] sm:$0xf]
    %v557 = vld [vmem:[#allocation5 + $0x99c] sm:$0xff]
    %v558 = vld [vmem:[#allocation5 + $0x9a4] sm:$0xf]
    %v559 = vld [vmem:[#allocation5 + $0x9a8] sm:$0xff]
    %v560 = vld [vmem:[#allocation5 + $0x9b0] sm:$0xf]
    %v561 = vld [vmem:[#allocation5 + $0x9b4] sm:$0xff]
    %v562 = vld [vmem:[#allocation5 + $0x9bc] sm:$0xf]
    %v563 = vld [vmem:[#allocation5 + $0x9c0] sm:$0xff]
    %v564 = vld [vmem:[#allocation5 + $0x9c8] sm:$0xf]
    %v565 = vld [vmem:[#allocation5 + $0x9cc] sm:$0xff]
    %v566 = vld [vmem:[#allocation5 + $0x9d4] sm:$0xf]
    %v567 = vld [vmem:[#allocation5 + $0x9d8] sm:$0xff]
    %v568 = vld [vmem:[#allocation5 + $0x9e0] sm:$0xf]
    %v569 = vld [vmem:[#allocation5 + $0x9e4] sm:$0xff]
    %v570 = vld [vmem:[#allocation5 + $0x9ec] sm:$0xf]
    %v571 = vld [vmem:[#allocation5 + $0x9f0] sm:$0xff]
    %v572 = vld [vmem:[#allocation5 + $0x9f8] sm:$0xf]
    %v573 = vld [vmem:[#allocation5 + $0x9fc] sm:$0xff]
    %v574 = vld [vmem:[#allocation5 + $0xa04] sm:$0xf]
    %v575 = vld [vmem:[#allocation5 + $0xa08] sm:$0xff]
    %v576 = vld [vmem:[#allocation5 + $0xa10] sm:$0xf]
    %v577 = vld [vmem:[#allocation5 + $0xa14] sm:$0xff]
    %v578 = vld [vmem:[#allocation5 + $0xa1c] sm:$0xf]
    %v579 = vld [vmem:[#allocation5 + $0xa20] sm:$0xff]
    %v580 = vld [vmem:[#allocation5 + $0xa28] sm:$0xf]
    %v581 = vld [vmem:[#allocation5 + $0xa2c] sm:$0xff]
    %v582 = vld [vmem:[#allocation5 + $0xa34] sm:$0xf]
    %v583 = vld [vmem:[#allocation5 + $0xa38] sm:$0xff]
    %v584 = vld [vmem:[#allocation5 + $0xa40] sm:$0xf]
    %v585 = vld [vmem:[#allocation5 + $0xa44] sm:$0xff]
    %v586 = vld [vmem:[#allocation5 + $0xa4c] sm:$0xf]
    %v587 = vld [vmem:[#allocation5 + $0xa50] sm:$0xff]
    %v588 = vld [vmem:[#allocation5 + $0xa58] sm:$0xf]
    %v589 = vld [vmem:[#allocation5 + $0xa5c] sm:$0xff]
    %v590 = vld [vmem:[#allocation5 + $0xa64] sm:$0xf]
    %v591 = vld [vmem:[#allocation5 + $0xa68] sm:$0xff]
    %v592 = vld [vmem:[#allocation5 + $0xa70] sm:$0xf]
    %v593 = vld [vmem:[#allocation5 + $0xa74] sm:$0xff]
    %v594 = vld [vmem:[#allocation5 + $0xa7c] sm:$0xf]
    %v595 = vld [vmem:[#allocation5 + $0xa80] sm:$0xff]
    %v596 = vld [vmem:[#allocation5 + $0xa88] sm:$0xf]
    %v597 = vld [vmem:[#allocation5 + $0xa8c] sm:$0xff]
    %v598 = vld [vmem:[#allocation5 + $0xa94] sm:$0xf]
    %v599 = vld [vmem:[#allocation5 + $0xa98] sm:$0xff]
    %v600 = vld [vmem:[#allocation5 + $0xaa0] sm:$0xf]
    %v601 = vld [vmem:[#allocation5 + $0xaa4] sm:$0xff]
    %v602 = vld [vmem:[#allocation5 + $0xaac] sm:$0xf]
    %v603 = vld [vmem:[#allocation5 + $0xab0] sm:$0xff]
    %v604 = vld [vmem:[#allocation5 + $0xab8] sm:$0xf]
    %v605 = vld [vmem:[#allocation5 + $0xabc] sm:$0xff]
    %v606 = vld [vmem:[#allocation5 + $0xac4] sm:$0xf]
    %v607 = vld [vmem:[#allocation5 + $0xac8] sm:$0xff]
    %v608 = vld [vmem:[#allocation5 + $0xad0] sm:$0xf]
    %v609 = vld [vmem:[#allocation5 + $0xad4] sm:$0xff]
    %v610 = vld [vmem:[#allocation5 + $0xadc] sm:$0xf]
    %v611 = vld [vmem:[#allocation5 + $0xae0] sm:$0xff]
    %v612 = vld [vmem:[#allocation5 + $0xae8] sm:$0xf]
    %v613 = vld [vmem:[#allocation5 + $0xaec] sm:$0xff]
    %v614 = vld [vmem:[#allocation5 + $0xaf4] sm:$0xf]
    %v615 = vld [vmem:[#allocation5 + $0xaf8] sm:$0xff]
    %v616 = vld [vmem:[#allocation5 + $0xb00] sm:$0xf]
    %v617 = vld [vmem:[#allocation5 + $0xb04] sm:$0xff]
    %v618 = vld [vmem:[#allocation5 + $0xb0c] sm:$0xf]
    %v619 = vld [vmem:[#allocation5 + $0xb10] sm:$0xff]
    %v620 = vld [vmem:[#allocation5 + $0xb18] sm:$0xf]
    %v621 = vld [vmem:[#allocation5 + $0xb1c] sm:$0xff]
    %v622 = vld [vmem:[#allocation5 + $0xb24] sm:$0xf]
    %v623 = vld [vmem:[#allocation5 + $0xb28] sm:$0xff]
    %v624 = vld [vmem:[#allocation5 + $0xb30] sm:$0xf]
    %v625 = vld [vmem:[#allocation5 + $0xb34] sm:$0xff]
    %v626 = vld [vmem:[#allocation5 + $0xb3c] sm:$0xf]
    %v627 = vld [vmem:[#allocation5 + $0xb40] sm:$0xff]
    %v628 = vld [vmem:[#allocation5 + $0xb48] sm:$0xf]
    %v629 = vld [vmem:[#allocation5 + $0xb4c] sm:$0xff]
    %v630 = vld [vmem:[#allocation5 + $0xb54] sm:$0xf]
    %v631 = vld [vmem:[#allocation5 + $0xb58] sm:$0xff]
    %v632 = vld [vmem:[#allocation5 + $0xb60] sm:$0xf]
    %v633 = vld [vmem:[#allocation5 + $0xb64] sm:$0xff]
    %v634 = vld [vmem:[#allocation5 + $0xb6c] sm:$0xf]
    %v635 = vld [vmem:[#allocation5 + $0xb70] sm:$0xff]
    %v636 = vld [vmem:[#allocation5 + $0xb78] sm:$0xf]
    %v637 = vld [vmem:[#allocation5 + $0xb7c] sm:$0xff]
    %v638 = vld [vmem:[#allocation5 + $0xb84] sm:$0xf]
    %v639 = vld [vmem:[#allocation5 + $0xb88] sm:$0xff]
    %v640 = vld [vmem:[#allocation5 + $0xb90] sm:$0xf]
    %v641 = vld [vmem:[#allocation5 + $0xb94] sm:$0xff]
    %v642 = vld [vmem:[#allocation5 + $0xb9c] sm:$0xf]
    %v643 = vld [vmem:[#allocation5 + $0xba0] sm:$0xff]
    %v644 = vld [vmem:[#allocation5 + $0xba8] sm:$0xf]
    %v645 = vld [vmem:[#allocation5 + $0xbac] sm:$0xff]
    %v646 = vld [vmem:[#allocation5 + $0xbb4] sm:$0xf]
    %v647 = vld [vmem:[#allocation5 + $0xbb8] sm:$0xff]
    %v648 = vld [vmem:[#allocation5 + $0xbc0] sm:$0xf]
    %v649 = vld [vmem:[#allocation5 + $0xbc4] sm:$0xff]
    %v650 = vld [vmem:[#allocation5 + $0xbcc] sm:$0xf]
    %v651 = vld [vmem:[#allocation5 + $0xbd0] sm:$0xff]
    %v652 = vld [vmem:[#allocation5 + $0xbd8] sm:$0xf]
    %v653 = vld [vmem:[#allocation5 + $0xbdc] sm:$0xff]
    %v654 = vld [vmem:[#allocation5 + $0xbe4] sm:$0xf]
    %v655 = vld [vmem:[#allocation5 + $0xbe8] sm:$0xff]
    %v656 = vld [vmem:[#allocation5 + $0xbf0] sm:$0xf]
    %v657 = vld [vmem:[#allocation5 + $0xbf4] sm:$0xff]
    %v658 = vld [vmem:[#allocation5 + $0xbfc] sm:$0xf]
    %v659 = vld [vmem:[#allocation7] sm:$0x7]
    %v661 = vlaneseq
    %v662 = vshrl.u32 %v661, 7
    %v663 = vsub.s32 0, %v662
    %v664 = vrot.slane %v659, %v663
    %v665 = vlaneseq
    %v666 = vshrl.u32 %v665, 7
    %v667 = vsub.s32 1, %v666
    %v668 = vrot.slane %v659, %v667
    %v669 = vlaneseq
    %v670 = vshrl.u32 %v669, 7
    %v671 = vsub.s32 2, %v670
    %v672 = vrot.slane %v659, %v671
    %v1188 = vunpack.c.l.b16 %v147
    %v1189 = vunpack.c.h.b16 %v147
    %v1190 = vunpack.c.l.b16 %v148
    %v1191 = vunpack.c.l.b16 %v149
    %v1192 = vunpack.c.h.b16 %v149
    %v1193 = vunpack.c.l.b16 %v150
    %v1194 = vunpack.c.l.b16 %v151
    %v1195 = vunpack.c.h.b16 %v151
    %v1196 = vunpack.c.l.b16 %v152
    %v1197 = vunpack.c.l.b16 %v153
    %v1198 = vunpack.c.h.b16 %v153
    %v1199 = vunpack.c.l.b16 %v154
    %v1200 = vunpack.c.l.b16 %v155
    %v1201 = vunpack.c.h.b16 %v155
    %v1202 = vunpack.c.l.b16 %v156
    %v1203 = vunpack.c.l.b16 %v157
    %v1204 = vunpack.c.h.b16 %v157
    %v1205 = vunpack.c.l.b16 %v158
    %v1206 = vunpack.c.l.b16 %v159
    %v1207 = vunpack.c.h.b16 %v159
    %v1208 = vunpack.c.l.b16 %v160
    %v1209 = vunpack.c.l.b16 %v161
    %v1210 = vunpack.c.h.b16 %v161
    %v1211 = vunpack.c.l.b16 %v162
    %v1212 = vunpack.c.l.b16 %v163
    %v1213 = vunpack.c.h.b16 %v163
    %v1214 = vunpack.c.l.b16 %v164
    %v1215 = vunpack.c.l.b16 %v165
    %v1216 = vunpack.c.h.b16 %v165
    %v1217 = vunpack.c.l.b16 %v166
    %v1218 = vunpack.c.l.b16 %v167
    %v1219 = vunpack.c.h.b16 %v167
    %v1220 = vunpack.c.l.b16 %v168
    %v1221 = vunpack.c.l.b16 %v169
    %v1222 = vunpack.c.h.b16 %v169
    %v1223 = vunpack.c.l.b16 %v170
    %v1224 = vunpack.c.l.b16 %v171
    %v1225 = vunpack.c.h.b16 %v171
    %v1226 = vunpack.c.l.b16 %v172
    %v1227 = vunpack.c.l.b16 %v173
    %v1228 = vunpack.c.h.b16 %v173
    %v1229 = vunpack.c.l.b16 %v174
    %v1230 = vunpack.c.l.b16 %v175
    %v1231 = vunpack.c.h.b16 %v175
    %v1232 = vunpack.c.l.b16 %v176
    %v1233 = vunpack.c.l.b16 %v177
    %v1234 = vunpack.c.h.b16 %v177
    %v1235 = vunpack.c.l.b16 %v178
    %v1236 = vunpack.c.l.b16 %v179
    %v1237 = vunpack.c.h.b16 %v179
    %v1238 = vunpack.c.l.b16 %v180
    %v1239 = vunpack.c.l.b16 %v181
    %v1240 = vunpack.c.h.b16 %v181
    %v1241 = vunpack.c.l.b16 %v182
    %v1242 = vunpack.c.l.b16 %v183
    %v1243 = vunpack.c.h.b16 %v183
    %v1244 = vunpack.c.l.b16 %v184
    %v1245 = vunpack.c.l.b16 %v185
    %v1246 = vunpack.c.h.b16 %v185
    %v1247 = vunpack.c.l.b16 %v186
    %v1248 = vunpack.c.l.b16 %v187
    %v1249 = vunpack.c.h.b16 %v187
    %v1250 = vunpack.c.l.b16 %v188
    %v1251 = vunpack.c.l.b16 %v189
    %v1252 = vunpack.c.h.b16 %v189
    %v1253 = vunpack.c.l.b16 %v190
    %v1254 = vunpack.c.l.b16 %v191
    %v1255 = vunpack.c.h.b16 %v191
    %v1256 = vunpack.c.l.b16 %v192
    %v1257 = vunpack.c.l.b16 %v193
    %v1258 = vunpack.c.h.b16 %v193
    %v1259 = vunpack.c.l.b16 %v194
    %v1260 = vunpack.c.l.b16 %v195
    %v1261 = vunpack.c.h.b16 %v195
    %v1262 = vunpack.c.l.b16 %v196
    %v1263 = vunpack.c.l.b16 %v197
    %v1264 = vunpack.c.h.b16 %v197
    %v1265 = vunpack.c.l.b16 %v198
    %v1266 = vunpack.c.l.b16 %v199
    %v1267 = vunpack.c.h.b16 %v199
    %v1268 = vunpack.c.l.b16 %v200
    %v1269 = vunpack.c.l.b16 %v201
    %v1270 = vunpack.c.h.b16 %v201
    %v1271 = vunpack.c.l.b16 %v202
    %v1272 = vunpack.c.l.b16 %v203
    %v1273 = vunpack.c.h.b16 %v203
    %v1274 = vunpack.c.l.b16 %v204
    %v1275 = vunpack.c.l.b16 %v205
    %v1276 = vunpack.c.h.b16 %v205
    %v1277 = vunpack.c.l.b16 %v206
    %v1278 = vunpack.c.l.b16 %v207
    %v1279 = vunpack.c.h.b16 %v207
    %v1280 = vunpack.c.l.b16 %v208
    %v1281 = vunpack.c.l.b16 %v209
    %v1282 = vunpack.c.h.b16 %v209
    %v1283 = vunpack.c.l.b16 %v210
    %v1284 = vunpack.c.l.b16 %v211
    %v1285 = vunpack.c.h.b16 %v211
    %v1286 = vunpack.c.l.b16 %v212
    %v1287 = vunpack.c.l.b16 %v213
    %v1288 = vunpack.c.h.b16 %v213
    %v1289 = vunpack.c.l.b16 %v214
    %v1290 = vunpack.c.l.b16 %v215
    %v1291 = vunpack.c.h.b16 %v215
    %v1292 = vunpack.c.l.b16 %v216
    %v1293 = vunpack.c.l.b16 %v217
    %v1294 = vunpack.c.h.b16 %v217
    %v1295 = vunpack.c.l.b16 %v218
    %v1296 = vunpack.c.l.b16 %v219
    %v1297 = vunpack.c.h.b16 %v219
    %v1298 = vunpack.c.l.b16 %v220
    %v1299 = vunpack.c.l.b16 %v221
    %v1300 = vunpack.c.h.b16 %v221
    %v1301 = vunpack.c.l.b16 %v222
    %v1302 = vunpack.c.l.b16 %v223
    %v1303 = vunpack.c.h.b16 %v223
    %v1304 = vunpack.c.l.b16 %v224
    %v1305 = vunpack.c.l.b16 %v225
    %v1306 = vunpack.c.h.b16 %v225
    %v1307 = vunpack.c.l.b16 %v226
    %v1308 = vunpack.c.l.b16 %v227
    %v1309 = vunpack.c.h.b16 %v227
    %v1310 = vunpack.c.l.b16 %v228
    %v1311 = vunpack.c.l.b16 %v229
    %v1312 = vunpack.c.h.b16 %v229
    %v1313 = vunpack.c.l.b16 %v230
    %v1314 = vunpack.c.l.b16 %v231
    %v1315 = vunpack.c.h.b16 %v231
    %v1316 = vunpack.c.l.b16 %v232
    %v1317 = vunpack.c.l.b16 %v233
    %v1318 = vunpack.c.h.b16 %v233
    %v1319 = vunpack.c.l.b16 %v234
    %v1320 = vunpack.c.l.b16 %v235
    %v1321 = vunpack.c.h.b16 %v235
    %v1322 = vunpack.c.l.b16 %v236
    %v1323 = vunpack.c.l.b16 %v237
    %v1324 = vunpack.c.h.b16 %v237
    %v1325 = vunpack.c.l.b16 %v238
    %v1326 = vunpack.c.l.b16 %v239
    %v1327 = vunpack.c.h.b16 %v239
    %v1328 = vunpack.c.l.b16 %v240
    %v1329 = vunpack.c.l.b16 %v241
    %v1330 = vunpack.c.h.b16 %v241
    %v1331 = vunpack.c.l.b16 %v242
    %v1332 = vunpack.c.l.b16 %v243
    %v1333 = vunpack.c.h.b16 %v243
    %v1334 = vunpack.c.l.b16 %v244
    %v1335 = vunpack.c.l.b16 %v245
    %v1336 = vunpack.c.h.b16 %v245
    %v1337 = vunpack.c.l.b16 %v246
    %v1338 = vunpack.c.l.b16 %v247
    %v1339 = vunpack.c.h.b16 %v247
    %v1340 = vunpack.c.l.b16 %v248
    %v1341 = vunpack.c.l.b16 %v249
    %v1342 = vunpack.c.h.b16 %v249
    %v1343 = vunpack.c.l.b16 %v250
    %v1344 = vunpack.c.l.b16 %v251
    %v1345 = vunpack.c.h.b16 %v251
    %v1346 = vunpack.c.l.b16 %v252
    %v1347 = vunpack.c.l.b16 %v253
    %v1348 = vunpack.c.h.b16 %v253
    %v1349 = vunpack.c.l.b16 %v254
    %v1350 = vunpack.c.l.b16 %v255
    %v1351 = vunpack.c.h.b16 %v255
    %v1352 = vunpack.c.l.b16 %v256
    %v1353 = vunpack.c.l.b16 %v257
    %v1354 = vunpack.c.h.b16 %v257
    %v1355 = vunpack.c.l.b16 %v258
    %v1356 = vunpack.c.l.b16 %v259
    %v1357 = vunpack.c.h.b16 %v259
    %v1358 = vunpack.c.l.b16 %v260
    %v1359 = vunpack.c.l.b16 %v261
    %v1360 = vunpack.c.h.b16 %v261
    %v1361 = vunpack.c.l.b16 %v262
    %v1362 = vunpack.c.l.b16 %v263
    %v1363 = vunpack.c.h.b16 %v263
    %v1364 = vunpack.c.l.b16 %v264
    %v1365 = vunpack.c.l.b16 %v265
    %v1366 = vunpack.c.h.b16 %v265
    %v1367 = vunpack.c.l.b16 %v266
    %v1368 = vunpack.c.l.b16 %v267
    %v1369 = vunpack.c.h.b16 %v267
    %v1370 = vunpack.c.l.b16 %v268
    %v1371 = vunpack.c.l.b16 %v269
    %v1372 = vunpack.c.h.b16 %v269
    %v1373 = vunpack.c.l.b16 %v270
    %v1374 = vunpack.c.l.b16 %v271
    %v1375 = vunpack.c.h.b16 %v271
    %v1376 = vunpack.c.l.b16 %v272
    %v1377 = vunpack.c.l.b16 %v273
    %v1378 = vunpack.c.h.b16 %v273
    %v1379 = vunpack.c.l.b16 %v274
    %v1380 = vunpack.c.l.b16 %v275
    %v1381 = vunpack.c.h.b16 %v275
    %v1382 = vunpack.c.l.b16 %v276
    %v1383 = vunpack.c.l.b16 %v277
    %v1384 = vunpack.c.h.b16 %v277
    %v1385 = vunpack.c.l.b16 %v278
    %v1386 = vunpack.c.l.b16 %v279
    %v1387 = vunpack.c.h.b16 %v279
    %v1388 = vunpack.c.l.b16 %v280
    %v1389 = vunpack.c.l.b16 %v281
    %v1390 = vunpack.c.h.b16 %v281
    %v1391 = vunpack.c.l.b16 %v282
    %v1392 = vunpack.c.l.b16 %v283
    %v1393 = vunpack.c.h.b16 %v283
    %v1394 = vunpack.c.l.b16 %v284
    %v1395 = vunpack.c.l.b16 %v285
    %v1396 = vunpack.c.h.b16 %v285
    %v1397 = vunpack.c.l.b16 %v286
    %v1398 = vunpack.c.l.b16 %v287
    %v1399 = vunpack.c.h.b16 %v287
    %v1400 = vunpack.c.l.b16 %v288
    %v1401 = vunpack.c.l.b16 %v289
    %v1402 = vunpack.c.h.b16 %v289
    %v1403 = vunpack.c.l.b16 %v290
    %v1404 = vunpack.c.l.b16 %v291
    %v1405 = vunpack.c.h.b16 %v291
    %v1406 = vunpack.c.l.b16 %v292
    %v1407 = vunpack.c.l.b16 %v293
    %v1408 = vunpack.c.h.b16 %v293
    %v1409 = vunpack.c.l.b16 %v294
    %v1410 = vunpack.c.l.b16 %v295
    %v1411 = vunpack.c.h.b16 %v295
    %v1412 = vunpack.c.l.b16 %v296
    %v1413 = vunpack.c.l.b16 %v297
    %v1414 = vunpack.c.h.b16 %v297
    %v1415 = vunpack.c.l.b16 %v298
    %v1416 = vunpack.c.l.b16 %v299
    %v1417 = vunpack.c.h.b16 %v299
    %v1418 = vunpack.c.l.b16 %v300
    %v1419 = vunpack.c.l.b16 %v301
    %v1420 = vunpack.c.h.b16 %v301
    %v1421 = vunpack.c.l.b16 %v302
    %v1422 = vunpack.c.l.b16 %v303
    %v1423 = vunpack.c.h.b16 %v303
    %v1424 = vunpack.c.l.b16 %v304
    %v1425 = vunpack.c.l.b16 %v305
    %v1426 = vunpack.c.h.b16 %v305
    %v1427 = vunpack.c.l.b16 %v306
    %v1428 = vunpack.c.l.b16 %v307
    %v1429 = vunpack.c.h.b16 %v307
    %v1430 = vunpack.c.l.b16 %v308
    %v1431 = vunpack.c.l.b16 %v309
    %v1432 = vunpack.c.h.b16 %v309
    %v1433 = vunpack.c.l.b16 %v310
    %v1434 = vunpack.c.l.b16 %v311
    %v1435 = vunpack.c.h.b16 %v311
    %v1436 = vunpack.c.l.b16 %v312
    %v1437 = vunpack.c.l.b16 %v313
    %v1438 = vunpack.c.h.b16 %v313
    %v1439 = vunpack.c.l.b16 %v314
    %v1440 = vunpack.c.l.b16 %v315
    %v1441 = vunpack.c.h.b16 %v315
    %v1442 = vunpack.c.l.b16 %v316
    %v1443 = vunpack.c.l.b16 %v317
    %v1444 = vunpack.c.h.b16 %v317
    %v1445 = vunpack.c.l.b16 %v318
    %v1446 = vunpack.c.l.b16 %v319
    %v1447 = vunpack.c.h.b16 %v319
    %v1448 = vunpack.c.l.b16 %v320
    %v1449 = vunpack.c.l.b16 %v321
    %v1450 = vunpack.c.h.b16 %v321
    %v1451 = vunpack.c.l.b16 %v322
    %v1452 = vunpack.c.l.b16 %v323
    %v1453 = vunpack.c.h.b16 %v323
    %v1454 = vunpack.c.l.b16 %v324
    %v1455 = vunpack.c.l.b16 %v325
    %v1456 = vunpack.c.h.b16 %v325
    %v1457 = vunpack.c.l.b16 %v326
    %v1458 = vunpack.c.l.b16 %v327
    %v1459 = vunpack.c.h.b16 %v327
    %v1460 = vunpack.c.l.b16 %v328
    %v1461 = vunpack.c.l.b16 %v329
    %v1462 = vunpack.c.h.b16 %v329
    %v1463 = vunpack.c.l.b16 %v330
    %v1464 = vunpack.c.l.b16 %v331
    %v1465 = vunpack.c.h.b16 %v331
    %v1466 = vunpack.c.l.b16 %v332
    %v1467 = vunpack.c.l.b16 %v333
    %v1468 = vunpack.c.h.b16 %v333
    %v1469 = vunpack.c.l.b16 %v334
    %v1470 = vunpack.c.l.b16 %v335
    %v1471 = vunpack.c.h.b16 %v335
    %v1472 = vunpack.c.l.b16 %v336
    %v1473 = vunpack.c.l.b16 %v337
    %v1474 = vunpack.c.h.b16 %v337
    %v1475 = vunpack.c.l.b16 %v338
    %v1476 = vunpack.c.l.b16 %v339
    %v1477 = vunpack.c.h.b16 %v339
    %v1478 = vunpack.c.l.b16 %v340
    %v1479 = vunpack.c.l.b16 %v341
    %v1480 = vunpack.c.h.b16 %v341
    %v1481 = vunpack.c.l.b16 %v342
    %v1482 = vunpack.c.l.b16 %v343
    %v1483 = vunpack.c.h.b16 %v343
    %v1484 = vunpack.c.l.b16 %v344
    %v1485 = vunpack.c.l.b16 %v345
    %v1486 = vunpack.c.h.b16 %v345
    %v1487 = vunpack.c.l.b16 %v346
    %v1488 = vunpack.c.l.b16 %v347
    %v1489 = vunpack.c.h.b16 %v347
    %v1490 = vunpack.c.l.b16 %v348
    %v1491 = vunpack.c.l.b16 %v349
    %v1492 = vunpack.c.h.b16 %v349
    %v1493 = vunpack.c.l.b16 %v350
    %v1494 = vunpack.c.l.b16 %v351
    %v1495 = vunpack.c.h.b16 %v351
    %v1496 = vunpack.c.l.b16 %v352
    %v1497 = vunpack.c.l.b16 %v353
    %v1498 = vunpack.c.h.b16 %v353
    %v1499 = vunpack.c.l.b16 %v354
    %v1500 = vunpack.c.l.b16 %v355
    %v1501 = vunpack.c.h.b16 %v355
    %v1502 = vunpack.c.l.b16 %v356
    %v1503 = vunpack.c.l.b16 %v357
    %v1504 = vunpack.c.h.b16 %v357
    %v1505 = vunpack.c.l.b16 %v358
    %v1506 = vunpack.c.l.b16 %v359
    %v1507 = vunpack.c.h.b16 %v359
    %v1508 = vunpack.c.l.b16 %v360
    %v1509 = vunpack.c.l.b16 %v361
    %v1510 = vunpack.c.h.b16 %v361
    %v1511 = vunpack.c.l.b16 %v362
    %v1512 = vunpack.c.l.b16 %v363
    %v1513 = vunpack.c.h.b16 %v363
    %v1514 = vunpack.c.l.b16 %v364
    %v1515 = vunpack.c.l.b16 %v365
    %v1516 = vunpack.c.h.b16 %v365
    %v1517 = vunpack.c.l.b16 %v366
    %v1518 = vunpack.c.l.b16 %v367
    %v1519 = vunpack.c.h.b16 %v367
    %v1520 = vunpack.c.l.b16 %v368
    %v1521 = vunpack.c.l.b16 %v369
    %v1522 = vunpack.c.h.b16 %v369
    %v1523 = vunpack.c.l.b16 %v370
    %v1524 = vunpack.c.l.b16 %v371
    %v1525 = vunpack.c.h.b16 %v371
    %v1526 = vunpack.c.l.b16 %v372
    %v1527 = vunpack.c.l.b16 %v373
    %v1528 = vunpack.c.h.b16 %v373
    %v1529 = vunpack.c.l.b16 %v374
    %v1530 = vunpack.c.l.b16 %v375
    %v1531 = vunpack.c.h.b16 %v375
    %v1532 = vunpack.c.l.b16 %v376
    %v1533 = vunpack.c.l.b16 %v377
    %v1534 = vunpack.c.h.b16 %v377
    %v1535 = vunpack.c.l.b16 %v378
    %v1536 = vunpack.c.l.b16 %v379
    %v1537 = vunpack.c.h.b16 %v379
    %v1538 = vunpack.c.l.b16 %v380
    %v1539 = vunpack.c.l.b16 %v381
    %v1540 = vunpack.c.h.b16 %v381
    %v1541 = vunpack.c.l.b16 %v382
    %v1542 = vunpack.c.l.b16 %v383
    %v1543 = vunpack.c.h.b16 %v383
    %v1544 = vunpack.c.l.b16 %v384
    %v1545 = vunpack.c.l.b16 %v385
    %v1546 = vunpack.c.h.b16 %v385
    %v1547 = vunpack.c.l.b16 %v386
    %v1548 = vunpack.c.l.b16 %v387
    %v1549 = vunpack.c.h.b16 %v387
    %v1550 = vunpack.c.l.b16 %v388
    %v1551 = vunpack.c.l.b16 %v389
    %v1552 = vunpack.c.h.b16 %v389
    %v1553 = vunpack.c.l.b16 %v390
    %v1554 = vunpack.c.l.b16 %v391
    %v1555 = vunpack.c.h.b16 %v391
    %v1556 = vunpack.c.l.b16 %v392
    %v1557 = vunpack.c.l.b16 %v393
    %v1558 = vunpack.c.h.b16 %v393
    %v1559 = vunpack.c.l.b16 %v394
    %v1560 = vunpack.c.l.b16 %v395
    %v1561 = vunpack.c.h.b16 %v395
    %v1562 = vunpack.c.l.b16 %v396
    %v1563 = vunpack.c.l.b16 %v397
    %v1564 = vunpack.c.h.b16 %v397
    %v1565 = vunpack.c.l.b16 %v398
    %v1566 = vunpack.c.l.b16 %v399
    %v1567 = vunpack.c.h.b16 %v399
    %v1568 = vunpack.c.l.b16 %v400
    %v1569 = vunpack.c.l.b16 %v401
    %v1570 = vunpack.c.h.b16 %v401
    %v1571 = vunpack.c.l.b16 %v402
    %v1572 = vunpack.c.l.b16 %v403
    %v1573 = vunpack.c.h.b16 %v403
    %v1574 = vunpack.c.l.b16 %v404
    %v1575 = vunpack.c.l.b16 %v405
    %v1576 = vunpack.c.h.b16 %v405
    %v1577 = vunpack.c.l.b16 %v406
    %v1578 = vunpack.c.l.b16 %v407
    %v1579 = vunpack.c.h.b16 %v407
    %v1580 = vunpack.c.l.b16 %v408
    %v1581 = vunpack.c.l.b16 %v409
    %v1582 = vunpack.c.h.b16 %v409
    %v1583 = vunpack.c.l.b16 %v410
    %v1584 = vunpack.c.l.b16 %v411
    %v1585 = vunpack.c.h.b16 %v411
    %v1586 = vunpack.c.l.b16 %v412
    %v1587 = vunpack.c.l.b16 %v413
    %v1588 = vunpack.c.h.b16 %v413
    %v1589 = vunpack.c.l.b16 %v414
    %v1590 = vunpack.c.l.b16 %v415
    %v1591 = vunpack.c.h.b16 %v415
    %v1592 = vunpack.c.l.b16 %v416
    %v1593 = vunpack.c.l.b16 %v417
    %v1594 = vunpack.c.h.b16 %v417
    %v1595 = vunpack.c.l.b16 %v418
    %v1596 = vunpack.c.l.b16 %v419
    %v1597 = vunpack.c.h.b16 %v419
    %v1598 = vunpack.c.l.b16 %v420
    %v1599 = vunpack.c.l.b16 %v421
    %v1600 = vunpack.c.h.b16 %v421
    %v1601 = vunpack.c.l.b16 %v422
    %v1602 = vunpack.c.l.b16 %v423
    %v1603 = vunpack.c.h.b16 %v423
    %v1604 = vunpack.c.l.b16 %v424
    %v1605 = vunpack.c.l.b16 %v425
    %v1606 = vunpack.c.h.b16 %v425
    %v1607 = vunpack.c.l.b16 %v426
    %v1608 = vunpack.c.l.b16 %v427
    %v1609 = vunpack.c.h.b16 %v427
    %v1610 = vunpack.c.l.b16 %v428
    %v1611 = vunpack.c.l.b16 %v429
    %v1612 = vunpack.c.h.b16 %v429
    %v1613 = vunpack.c.l.b16 %v430
    %v1614 = vunpack.c.l.b16 %v431
    %v1615 = vunpack.c.h.b16 %v431
    %v1616 = vunpack.c.l.b16 %v432
    %v1617 = vunpack.c.l.b16 %v433
    %v1618 = vunpack.c.h.b16 %v433
    %v1619 = vunpack.c.l.b16 %v434
    %v1620 = vunpack.c.l.b16 %v435
    %v1621 = vunpack.c.h.b16 %v435
    %v1622 = vunpack.c.l.b16 %v436
    %v1623 = vunpack.c.l.b16 %v437
    %v1624 = vunpack.c.h.b16 %v437
    %v1625 = vunpack.c.l.b16 %v438
    %v1626 = vunpack.c.l.b16 %v439
    %v1627 = vunpack.c.h.b16 %v439
    %v1628 = vunpack.c.l.b16 %v440
    %v1629 = vunpack.c.l.b16 %v441
    %v1630 = vunpack.c.h.b16 %v441
    %v1631 = vunpack.c.l.b16 %v442
    %v1632 = vunpack.c.l.b16 %v443
    %v1633 = vunpack.c.h.b16 %v443
    %v1634 = vunpack.c.l.b16 %v444
    %v1635 = vunpack.c.l.b16 %v445
    %v1636 = vunpack.c.h.b16 %v445
    %v1637 = vunpack.c.l.b16 %v446
    %v1638 = vunpack.c.l.b16 %v447
    %v1639 = vunpack.c.h.b16 %v447
    %v1640 = vunpack.c.l.b16 %v448
    %v1641 = vunpack.c.l.b16 %v449
    %v1642 = vunpack.c.h.b16 %v449
    %v1643 = vunpack.c.l.b16 %v450
    %v1644 = vunpack.c.l.b16 %v451
    %v1645 = vunpack.c.h.b16 %v451
    %v1646 = vunpack.c.l.b16 %v452
    %v1647 = vunpack.c.l.b16 %v453
    %v1648 = vunpack.c.h.b16 %v453
    %v1649 = vunpack.c.l.b16 %v454
    %v1650 = vunpack.c.l.b16 %v455
    %v1651 = vunpack.c.h.b16 %v455
    %v1652 = vunpack.c.l.b16 %v456
    %v1653 = vunpack.c.l.b16 %v457
    %v1654 = vunpack.c.h.b16 %v457
    %v1655 = vunpack.c.l.b16 %v458
    %v1656 = vunpack.c.l.b16 %v459
    %v1657 = vunpack.c.h.b16 %v459
    %v1658 = vunpack.c.l.b16 %v460
    %v1659 = vunpack.c.l.b16 %v461
    %v1660 = vunpack.c.h.b16 %v461
    %v1661 = vunpack.c.l.b16 %v462
    %v1662 = vunpack.c.l.b16 %v463
    %v1663 = vunpack.c.h.b16 %v463
    %v1664 = vunpack.c.l.b16 %v464
    %v1665 = vunpack.c.l.b16 %v465
    %v1666 = vunpack.c.h.b16 %v465
    %v1667 = vunpack.c.l.b16 %v466
    %v1668 = vunpack.c.l.b16 %v467
    %v1669 = vunpack.c.h.b16 %v467
    %v1670 = vunpack.c.l.b16 %v468
    %v1671 = vunpack.c.l.b16 %v469
    %v1672 = vunpack.c.h.b16 %v469
    %v1673 = vunpack.c.l.b16 %v470
    %v1674 = vunpack.c.l.b16 %v471
    %v1675 = vunpack.c.h.b16 %v471
    %v1676 = vunpack.c.l.b16 %v472
    %v1677 = vunpack.c.l.b16 %v473
    %v1678 = vunpack.c.h.b16 %v473
    %v1679 = vunpack.c.l.b16 %v474
    %v1680 = vunpack.c.l.b16 %v475
    %v1681 = vunpack.c.h.b16 %v475
    %v1682 = vunpack.c.l.b16 %v476
    %v1683 = vunpack.c.l.b16 %v477
    %v1684 = vunpack.c.h.b16 %v477
    %v1685 = vunpack.c.l.b16 %v478
    %v1686 = vunpack.c.l.b16 %v479
    %v1687 = vunpack.c.h.b16 %v479
    %v1688 = vunpack.c.l.b16 %v480
    %v1689 = vunpack.c.l.b16 %v481
    %v1690 = vunpack.c.h.b16 %v481
    %v1691 = vunpack.c.l.b16 %v482
    %v1692 = vunpack.c.l.b16 %v483
    %v1693 = vunpack.c.h.b16 %v483
    %v1694 = vunpack.c.l.b16 %v484
    %v1695 = vunpack.c.l.b16 %v485
    %v1696 = vunpack.c.h.b16 %v485
    %v1697 = vunpack.c.l.b16 %v486
    %v1698 = vunpack.c.l.b16 %v487
    %v1699 = vunpack.c.h.b16 %v487
    %v1700 = vunpack.c.l.b16 %v488
    %v1701 = vunpack.c.l.b16 %v489
    %v1702 = vunpack.c.h.b16 %v489
    %v1703 = vunpack.c.l.b16 %v490
    %v1704 = vunpack.c.l.b16 %v491
    %v1705 = vunpack.c.h.b16 %v491
    %v1706 = vunpack.c.l.b16 %v492
    %v1707 = vunpack.c.l.b16 %v493
    %v1708 = vunpack.c.h.b16 %v493
    %v1709 = vunpack.c.l.b16 %v494
    %v1710 = vunpack.c.l.b16 %v495
    %v1711 = vunpack.c.h.b16 %v495
    %v1712 = vunpack.c.l.b16 %v496
    %v1713 = vunpack.c.l.b16 %v497
    %v1714 = vunpack.c.h.b16 %v497
    %v1715 = vunpack.c.l.b16 %v498
    %v1716 = vunpack.c.l.b16 %v499
    %v1717 = vunpack.c.h.b16 %v499
    %v1718 = vunpack.c.l.b16 %v500
    %v1719 = vunpack.c.l.b16 %v501
    %v1720 = vunpack.c.h.b16 %v501
    %v1721 = vunpack.c.l.b16 %v502
    %v1722 = vunpack.c.l.b16 %v503
    %v1723 = vunpack.c.h.b16 %v503
    %v1724 = vunpack.c.l.b16 %v504
    %v1725 = vunpack.c.l.b16 %v505
    %v1726 = vunpack.c.h.b16 %v505
    %v1727 = vunpack.c.l.b16 %v506
    %v1728 = vunpack.c.l.b16 %v507
    %v1729 = vunpack.c.h.b16 %v507
    %v1730 = vunpack.c.l.b16 %v508
    %v1731 = vunpack.c.l.b16 %v509
    %v1732 = vunpack.c.h.b16 %v509
    %v1733 = vunpack.c.l.b16 %v510
    %v1734 = vunpack.c.l.b16 %v511
    %v1735 = vunpack.c.h.b16 %v511
    %v1736 = vunpack.c.l.b16 %v512
    %v1737 = vunpack.c.l.b16 %v513
    %v1738 = vunpack.c.h.b16 %v513
    %v1739 = vunpack.c.l.b16 %v514
    %v1740 = vunpack.c.l.b16 %v515
    %v1741 = vunpack.c.h.b16 %v515
    %v1742 = vunpack.c.l.b16 %v516
    %v1743 = vunpack.c.l.b16 %v517
    %v1744 = vunpack.c.h.b16 %v517
    %v1745 = vunpack.c.l.b16 %v518
    %v1746 = vunpack.c.l.b16 %v519
    %v1747 = vunpack.c.h.b16 %v519
    %v1748 = vunpack.c.l.b16 %v520
    %v1749 = vunpack.c.l.b16 %v521
    %v1750 = vunpack.c.h.b16 %v521
    %v1751 = vunpack.c.l.b16 %v522
    %v1752 = vunpack.c.l.b16 %v523
    %v1753 = vunpack.c.h.b16 %v523
    %v1754 = vunpack.c.l.b16 %v524
    %v1755 = vunpack.c.l.b16 %v525
    %v1756 = vunpack.c.h.b16 %v525
    %v1757 = vunpack.c.l.b16 %v526
    %v1758 = vunpack.c.l.b16 %v527
    %v1759 = vunpack.c.h.b16 %v527
    %v1760 = vunpack.c.l.b16 %v528
    %v1761 = vunpack.c.l.b16 %v529
    %v1762 = vunpack.c.h.b16 %v529
    %v1763 = vunpack.c.l.b16 %v530
    %v1764 = vunpack.c.l.b16 %v531
    %v1765 = vunpack.c.h.b16 %v531
    %v1766 = vunpack.c.l.b16 %v532
    %v1767 = vunpack.c.l.b16 %v533
    %v1768 = vunpack.c.h.b16 %v533
    %v1769 = vunpack.c.l.b16 %v534
    %v1770 = vunpack.c.l.b16 %v535
    %v1771 = vunpack.c.h.b16 %v535
    %v1772 = vunpack.c.l.b16 %v536
    %v1773 = vunpack.c.l.b16 %v537
    %v1774 = vunpack.c.h.b16 %v537
    %v1775 = vunpack.c.l.b16 %v538
    %v1776 = vunpack.c.l.b16 %v539
    %v1777 = vunpack.c.h.b16 %v539
    %v1778 = vunpack.c.l.b16 %v540
    %v1779 = vunpack.c.l.b16 %v541
    %v1780 = vunpack.c.h.b16 %v541
    %v1781 = vunpack.c.l.b16 %v542
    %v1782 = vunpack.c.l.b16 %v543
    %v1783 = vunpack.c.h.b16 %v543
    %v1784 = vunpack.c.l.b16 %v544
    %v1785 = vunpack.c.l.b16 %v545
    %v1786 = vunpack.c.h.b16 %v545
    %v1787 = vunpack.c.l.b16 %v546
    %v1788 = vunpack.c.l.b16 %v547
    %v1789 = vunpack.c.h.b16 %v547
    %v1790 = vunpack.c.l.b16 %v548
    %v1791 = vunpack.c.l.b16 %v549
    %v1792 = vunpack.c.h.b16 %v549
    %v1793 = vunpack.c.l.b16 %v550
    %v1794 = vunpack.c.l.b16 %v551
    %v1795 = vunpack.c.h.b16 %v551
    %v1796 = vunpack.c.l.b16 %v552
    %v1797 = vunpack.c.l.b16 %v553
    %v1798 = vunpack.c.h.b16 %v553
    %v1799 = vunpack.c.l.b16 %v554
    %v1800 = vunpack.c.l.b16 %v555
    %v1801 = vunpack.c.h.b16 %v555
    %v1802 = vunpack.c.l.b16 %v556
    %v1803 = vunpack.c.l.b16 %v557
    %v1804 = vunpack.c.h.b16 %v557
    %v1805 = vunpack.c.l.b16 %v558
    %v1806 = vunpack.c.l.b16 %v559
    %v1807 = vunpack.c.h.b16 %v559
    %v1808 = vunpack.c.l.b16 %v560
    %v1809 = vunpack.c.l.b16 %v561
    %v1810 = vunpack.c.h.b16 %v561
    %v1811 = vunpack.c.l.b16 %v562
    %v1812 = vunpack.c.l.b16 %v563
    %v1813 = vunpack.c.h.b16 %v563
    %v1814 = vunpack.c.l.b16 %v564
    %v1815 = vunpack.c.l.b16 %v565
    %v1816 = vunpack.c.h.b16 %v565
    %v1817 = vunpack.c.l.b16 %v566
    %v1818 = vunpack.c.l.b16 %v567
    %v1819 = vunpack.c.h.b16 %v567
    %v1820 = vunpack.c.l.b16 %v568
    %v1821 = vunpack.c.l.b16 %v569
    %v1822 = vunpack.c.h.b16 %v569
    %v1823 = vunpack.c.l.b16 %v570
    %v1824 = vunpack.c.l.b16 %v571
    %v1825 = vunpack.c.h.b16 %v571
    %v1826 = vunpack.c.l.b16 %v572
    %v1827 = vunpack.c.l.b16 %v573
    %v1828 = vunpack.c.h.b16 %v573
    %v1829 = vunpack.c.l.b16 %v574
    %v1830 = vunpack.c.l.b16 %v575
    %v1831 = vunpack.c.h.b16 %v575
    %v1832 = vunpack.c.l.b16 %v576
    %v1833 = vunpack.c.l.b16 %v577
    %v1834 = vunpack.c.h.b16 %v577
    %v1835 = vunpack.c.l.b16 %v578
    %v1836 = vunpack.c.l.b16 %v579
    %v1837 = vunpack.c.h.b16 %v579
    %v1838 = vunpack.c.l.b16 %v580
    %v1839 = vunpack.c.l.b16 %v581
    %v1840 = vunpack.c.h.b16 %v581
    %v1841 = vunpack.c.l.b16 %v582
    %v1842 = vunpack.c.l.b16 %v583
    %v1843 = vunpack.c.h.b16 %v583
    %v1844 = vunpack.c.l.b16 %v584
    %v1845 = vunpack.c.l.b16 %v585
    %v1846 = vunpack.c.h.b16 %v585
    %v1847 = vunpack.c.l.b16 %v586
    %v1848 = vunpack.c.l.b16 %v587
    %v1849 = vunpack.c.h.b16 %v587
    %v1850 = vunpack.c.l.b16 %v588
    %v1851 = vunpack.c.l.b16 %v589
    %v1852 = vunpack.c.h.b16 %v589
    %v1853 = vunpack.c.l.b16 %v590
    %v1854 = vunpack.c.l.b16 %v591
    %v1855 = vunpack.c.h.b16 %v591
    %v1856 = vunpack.c.l.b16 %v592
    %v1857 = vunpack.c.l.b16 %v593
    %v1858 = vunpack.c.h.b16 %v593
    %v1859 = vunpack.c.l.b16 %v594
    %v1860 = vunpack.c.l.b16 %v595
    %v1861 = vunpack.c.h.b16 %v595
    %v1862 = vunpack.c.l.b16 %v596
    %v1863 = vunpack.c.l.b16 %v597
    %v1864 = vunpack.c.h.b16 %v597
    %v1865 = vunpack.c.l.b16 %v598
    %v1866 = vunpack.c.l.b16 %v599
    %v1867 = vunpack.c.h.b16 %v599
    %v1868 = vunpack.c.l.b16 %v600
    %v1869 = vunpack.c.l.b16 %v601
    %v1870 = vunpack.c.h.b16 %v601
    %v1871 = vunpack.c.l.b16 %v602
    %v1872 = vunpack.c.l.b16 %v603
    %v1873 = vunpack.c.h.b16 %v603
    %v1874 = vunpack.c.l.b16 %v604
    %v1875 = vunpack.c.l.b16 %v605
    %v1876 = vunpack.c.h.b16 %v605
    %v1877 = vunpack.c.l.b16 %v606
    %v1878 = vunpack.c.l.b16 %v607
    %v1879 = vunpack.c.h.b16 %v607
    %v1880 = vunpack.c.l.b16 %v608
    %v1881 = vunpack.c.l.b16 %v609
    %v1882 = vunpack.c.h.b16 %v609
    %v1883 = vunpack.c.l.b16 %v610
    %v1884 = vunpack.c.l.b16 %v611
    %v1885 = vunpack.c.h.b16 %v611
    %v1886 = vunpack.c.l.b16 %v612
    %v1887 = vunpack.c.l.b16 %v613
    %v1888 = vunpack.c.h.b16 %v613
    %v1889 = vunpack.c.l.b16 %v614
    %v1890 = vunpack.c.l.b16 %v615
    %v1891 = vunpack.c.h.b16 %v615
    %v1892 = vunpack.c.l.b16 %v616
    %v1893 = vunpack.c.l.b16 %v617
    %v1894 = vunpack.c.h.b16 %v617
    %v1895 = vunpack.c.l.b16 %v618
    %v1896 = vunpack.c.l.b16 %v619
    %v1897 = vunpack.c.h.b16 %v619
    %v1898 = vunpack.c.l.b16 %v620
    %v1899 = vunpack.c.l.b16 %v621
    %v1900 = vunpack.c.h.b16 %v621
    %v1901 = vunpack.c.l.b16 %v622
    %v1902 = vunpack.c.l.b16 %v623
    %v1903 = vunpack.c.h.b16 %v623
    %v1904 = vunpack.c.l.b16 %v624
    %v1905 = vunpack.c.l.b16 %v625
    %v1906 = vunpack.c.h.b16 %v625
    %v1907 = vunpack.c.l.b16 %v626
    %v1908 = vunpack.c.l.b16 %v627
    %v1909 = vunpack.c.h.b16 %v627
    %v1910 = vunpack.c.l.b16 %v628
    %v1911 = vunpack.c.l.b16 %v629
    %v1912 = vunpack.c.h.b16 %v629
    %v1913 = vunpack.c.l.b16 %v630
    %v1914 = vunpack.c.l.b16 %v631
    %v1915 = vunpack.c.h.b16 %v631
    %v1916 = vunpack.c.l.b16 %v632
    %v1917 = vunpack.c.l.b16 %v633
    %v1918 = vunpack.c.h.b16 %v633
    %v1919 = vunpack.c.l.b16 %v634
    %v1920 = vunpack.c.l.b16 %v635
    %v1921 = vunpack.c.h.b16 %v635
    %v1922 = vunpack.c.l.b16 %v636
    %v1923 = vunpack.c.l.b16 %v637
    %v1924 = vunpack.c.h.b16 %v637
    %v1925 = vunpack.c.l.b16 %v638
    %v1926 = vunpack.c.l.b16 %v639
    %v1927 = vunpack.c.h.b16 %v639
    %v1928 = vunpack.c.l.b16 %v640
    %v1929 = vunpack.c.l.b16 %v641
    %v1930 = vunpack.c.h.b16 %v641
    %v1931 = vunpack.c.l.b16 %v642
    %v1932 = vunpack.c.l.b16 %v643
    %v1933 = vunpack.c.h.b16 %v643
    %v1934 = vunpack.c.l.b16 %v644
    %v1935 = vunpack.c.l.b16 %v645
    %v1936 = vunpack.c.h.b16 %v645
    %v1937 = vunpack.c.l.b16 %v646
    %v1938 = vunpack.c.l.b16 %v647
    %v1939 = vunpack.c.h.b16 %v647
    %v1940 = vunpack.c.l.b16 %v648
    %v1941 = vunpack.c.l.b16 %v649
    %v1942 = vunpack.c.h.b16 %v649
    %v1943 = vunpack.c.l.b16 %v650
    %v1944 = vunpack.c.l.b16 %v651
    %v1945 = vunpack.c.h.b16 %v651
    %v1946 = vunpack.c.l.b16 %v652
    %v1947 = vunpack.c.l.b16 %v653
    %v1948 = vunpack.c.h.b16 %v653
    %v1949 = vunpack.c.l.b16 %v654
    %v1950 = vunpack.c.l.b16 %v655
    %v1951 = vunpack.c.h.b16 %v655
    %v1952 = vunpack.c.l.b16 %v656
    %v1953 = vunpack.c.l.b16 %v657
    %v1954 = vunpack.c.h.b16 %v657
    %v1955 = vunpack.c.l.b16 %v658
    %v1956 = vpack.c.b16 %v1191, %v1188
    %v1957 = vpack.c.b16 %v1192, %v1189
    %v1958 = vpack.c.b16 %v1193, %v1190
    %v1959 = vpack.c.b16 %v1197, %v1194
    %v1960 = vpack.c.b16 %v1198, %v1195
    %v1961 = vpack.c.b16 %v1199, %v1196
    %v1962 = vpack.c.b16 %v1203, %v1200
    %v1963 = vpack.c.b16 %v1204, %v1201
    %v1964 = vpack.c.b16 %v1205, %v1202
    %v1965 = vpack.c.b16 %v1209, %v1206
    %v1966 = vpack.c.b16 %v1210, %v1207
    %v1967 = vpack.c.b16 %v1211, %v1208
    %v1968 = vpack.c.b16 %v1215, %v1212
    %v1969 = vpack.c.b16 %v1216, %v1213
    %v1970 = vpack.c.b16 %v1217, %v1214
    %v1971 = vpack.c.b16 %v1221, %v1218
    %v1972 = vpack.c.b16 %v1222, %v1219
    %v1973 = vpack.c.b16 %v1223, %v1220
    %v1974 = vpack.c.b16 %v1227, %v1224
    %v1975 = vpack.c.b16 %v1228, %v1225
    %v1976 = vpack.c.b16 %v1229, %v1226
    %v1977 = vpack.c.b16 %v1233, %v1230
    %v1978 = vpack.c.b16 %v1234, %v1231
    %v1979 = vpack.c.b16 %v1235, %v1232
    %v1980 = vpack.c.b16 %v1239, %v1236
    %v1981 = vpack.c.b16 %v1240, %v1237
    %v1982 = vpack.c.b16 %v1241, %v1238
    %v1983 = vpack.c.b16 %v1245, %v1242
    %v1984 = vpack.c.b16 %v1246, %v1243
    %v1985 = vpack.c.b16 %v1247, %v1244
    %v1986 = vpack.c.b16 %v1251, %v1248
    %v1987 = vpack.c.b16 %v1252, %v1249
    %v1988 = vpack.c.b16 %v1253, %v1250
    %v1989 = vpack.c.b16 %v1257, %v1254
    %v1990 = vpack.c.b16 %v1258, %v1255
    %v1991 = vpack.c.b16 %v1259, %v1256
    %v1992 = vpack.c.b16 %v1263, %v1260
    %v1993 = vpack.c.b16 %v1264, %v1261
    %v1994 = vpack.c.b16 %v1265, %v1262
    %v1995 = vpack.c.b16 %v1269, %v1266
    %v1996 = vpack.c.b16 %v1270, %v1267
    %v1997 = vpack.c.b16 %v1271, %v1268
    %v1998 = vpack.c.b16 %v1275, %v1272
    %v1999 = vpack.c.b16 %v1276, %v1273
    %v2000 = vpack.c.b16 %v1277, %v1274
    %v2001 = vpack.c.b16 %v1281, %v1278
    %v2002 = vpack.c.b16 %v1282, %v1279
    %v2003 = vpack.c.b16 %v1283, %v1280
    %v2004 = vpack.c.b16 %v1287, %v1284
    %v2005 = vpack.c.b16 %v1288, %v1285
    %v2006 = vpack.c.b16 %v1289, %v1286
    %v2007 = vpack.c.b16 %v1293, %v1290
    %v2008 = vpack.c.b16 %v1294, %v1291
    %v2009 = vpack.c.b16 %v1295, %v1292
    %v2010 = vpack.c.b16 %v1299, %v1296
    %v2011 = vpack.c.b16 %v1300, %v1297
    %v2012 = vpack.c.b16 %v1301, %v1298
    %v2013 = vpack.c.b16 %v1305, %v1302
    %v2014 = vpack.c.b16 %v1306, %v1303
    %v2015 = vpack.c.b16 %v1307, %v1304
    %v2016 = vpack.c.b16 %v1311, %v1308
    %v2017 = vpack.c.b16 %v1312, %v1309
    %v2018 = vpack.c.b16 %v1313, %v1310
    %v2019 = vpack.c.b16 %v1317, %v1314
    %v2020 = vpack.c.b16 %v1318, %v1315
    %v2021 = vpack.c.b16 %v1319, %v1316
    %v2022 = vpack.c.b16 %v1323, %v1320
    %v2023 = vpack.c.b16 %v1324, %v1321
    %v2024 = vpack.c.b16 %v1325, %v1322
    %v2025 = vpack.c.b16 %v1329, %v1326
    %v2026 = vpack.c.b16 %v1330, %v1327
    %v2027 = vpack.c.b16 %v1331, %v1328
    %v2028 = vpack.c.b16 %v1335, %v1332
    %v2029 = vpack.c.b16 %v1336, %v1333
    %v2030 = vpack.c.b16 %v1337, %v1334
    %v2031 = vpack.c.b16 %v1341, %v1338
    %v2032 = vpack.c.b16 %v1342, %v1339
    %v2033 = vpack.c.b16 %v1343, %v1340
    %v2034 = vpack.c.b16 %v1347, %v1344
    %v2035 = vpack.c.b16 %v1348, %v1345
    %v2036 = vpack.c.b16 %v1349, %v1346
    %v2037 = vpack.c.b16 %v1353, %v1350
    %v2038 = vpack.c.b16 %v1354, %v1351
    %v2039 = vpack.c.b16 %v1355, %v1352
    %v2040 = vpack.c.b16 %v1359, %v1356
    %v2041 = vpack.c.b16 %v1360, %v1357
    %v2042 = vpack.c.b16 %v1361, %v1358
    %v2043 = vpack.c.b16 %v1365, %v1362
    %v2044 = vpack.c.b16 %v1366, %v1363
    %v2045 = vpack.c.b16 %v1367, %v1364
    %v2046 = vpack.c.b16 %v1371, %v1368
    %v2047 = vpack.c.b16 %v1372, %v1369
    %v2048 = vpack.c.b16 %v1373, %v1370
    %v2049 = vpack.c.b16 %v1377, %v1374
    %v2050 = vpack.c.b16 %v1378, %v1375
    %v2051 = vpack.c.b16 %v1379, %v1376
    %v2052 = vpack.c.b16 %v1383, %v1380
    %v2053 = vpack.c.b16 %v1384, %v1381
    %v2054 = vpack.c.b16 %v1385, %v1382
    %v2055 = vpack.c.b16 %v1389, %v1386
    %v2056 = vpack.c.b16 %v1390, %v1387
    %v2057 = vpack.c.b16 %v1391, %v1388
    %v2058 = vpack.c.b16 %v1395, %v1392
    %v2059 = vpack.c.b16 %v1396, %v1393
    %v2060 = vpack.c.b16 %v1397, %v1394
    %v2061 = vpack.c.b16 %v1401, %v1398
    %v2062 = vpack.c.b16 %v1402, %v1399
    %v2063 = vpack.c.b16 %v1403, %v1400
    %v2064 = vpack.c.b16 %v1407, %v1404
    %v2065 = vpack.c.b16 %v1408, %v1405
    %v2066 = vpack.c.b16 %v1409, %v1406
    %v2067 = vpack.c.b16 %v1413, %v1410
    %v2068 = vpack.c.b16 %v1414, %v1411
    %v2069 = vpack.c.b16 %v1415, %v1412
    %v2070 = vpack.c.b16 %v1419, %v1416
    %v2071 = vpack.c.b16 %v1420, %v1417
    %v2072 = vpack.c.b16 %v1421, %v1418
    %v2073 = vpack.c.b16 %v1425, %v1422
    %v2074 = vpack.c.b16 %v1426, %v1423
    %v2075 = vpack.c.b16 %v1427, %v1424
    %v2076 = vpack.c.b16 %v1431, %v1428
    %v2077 = vpack.c.b16 %v1432, %v1429
    %v2078 = vpack.c.b16 %v1433, %v1430
    %v2079 = vpack.c.b16 %v1437, %v1434
    %v2080 = vpack.c.b16 %v1438, %v1435
    %v2081 = vpack.c.b16 %v1439, %v1436
    %v2082 = vpack.c.b16 %v1443, %v1440
    %v2083 = vpack.c.b16 %v1444, %v1441
    %v2084 = vpack.c.b16 %v1445, %v1442
    %v2085 = vpack.c.b16 %v1449, %v1446
    %v2086 = vpack.c.b16 %v1450, %v1447
    %v2087 = vpack.c.b16 %v1451, %v1448
    %v2088 = vpack.c.b16 %v1455, %v1452
    %v2089 = vpack.c.b16 %v1456, %v1453
    %v2090 = vpack.c.b16 %v1457, %v1454
    %v2091 = vpack.c.b16 %v1461, %v1458
    %v2092 = vpack.c.b16 %v1462, %v1459
    %v2093 = vpack.c.b16 %v1463, %v1460
    %v2094 = vpack.c.b16 %v1467, %v1464
    %v2095 = vpack.c.b16 %v1468, %v1465
    %v2096 = vpack.c.b16 %v1469, %v1466
    %v2097 = vpack.c.b16 %v1473, %v1470
    %v2098 = vpack.c.b16 %v1474, %v1471
    %v2099 = vpack.c.b16 %v1475, %v1472
    %v2100 = vpack.c.b16 %v1479, %v1476
    %v2101 = vpack.c.b16 %v1480, %v1477
    %v2102 = vpack.c.b16 %v1481, %v1478
    %v2103 = vpack.c.b16 %v1485, %v1482
    %v2104 = vpack.c.b16 %v1486, %v1483
    %v2105 = vpack.c.b16 %v1487, %v1484
    %v2106 = vpack.c.b16 %v1491, %v1488
    %v2107 = vpack.c.b16 %v1492, %v1489
    %v2108 = vpack.c.b16 %v1493, %v1490
    %v2109 = vpack.c.b16 %v1497, %v1494
    %v2110 = vpack.c.b16 %v1498, %v1495
    %v2111 = vpack.c.b16 %v1499, %v1496
    %v2112 = vpack.c.b16 %v1503, %v1500
    %v2113 = vpack.c.b16 %v1504, %v1501
    %v2114 = vpack.c.b16 %v1505, %v1502
    %v2115 = vpack.c.b16 %v1509, %v1506
    %v2116 = vpack.c.b16 %v1510, %v1507
    %v2117 = vpack.c.b16 %v1511, %v1508
    %v2118 = vpack.c.b16 %v1515, %v1512
    %v2119 = vpack.c.b16 %v1516, %v1513
    %v2120 = vpack.c.b16 %v1517, %v1514
    %v2121 = vpack.c.b16 %v1521, %v1518
    %v2122 = vpack.c.b16 %v1522, %v1519
    %v2123 = vpack.c.b16 %v1523, %v1520
    %v2124 = vpack.c.b16 %v1527, %v1524
    %v2125 = vpack.c.b16 %v1528, %v1525
    %v2126 = vpack.c.b16 %v1529, %v1526
    %v2127 = vpack.c.b16 %v1533, %v1530
    %v2128 = vpack.c.b16 %v1534, %v1531
    %v2129 = vpack.c.b16 %v1535, %v1532
    %v2130 = vpack.c.b16 %v1539, %v1536
    %v2131 = vpack.c.b16 %v1540, %v1537
    %v2132 = vpack.c.b16 %v1541, %v1538
    %v2133 = vpack.c.b16 %v1545, %v1542
    %v2134 = vpack.c.b16 %v1546, %v1543
    %v2135 = vpack.c.b16 %v1547, %v1544
    %v2136 = vpack.c.b16 %v1551, %v1548
    %v2137 = vpack.c.b16 %v1552, %v1549
    %v2138 = vpack.c.b16 %v1553, %v1550
    %v2139 = vpack.c.b16 %v1557, %v1554
    %v2140 = vpack.c.b16 %v1558, %v1555
    %v2141 = vpack.c.b16 %v1559, %v1556
    %v2142 = vpack.c.b16 %v1563, %v1560
    %v2143 = vpack.c.b16 %v1564, %v1561
    %v2144 = vpack.c.b16 %v1565, %v1562
    %v2145 = vpack.c.b16 %v1569, %v1566
    %v2146 = vpack.c.b16 %v1570, %v1567
    %v2147 = vpack.c.b16 %v1571, %v1568
    %v2148 = vpack.c.b16 %v1575, %v1572
    %v2149 = vpack.c.b16 %v1576, %v1573
    %v2150 = vpack.c.b16 %v1577, %v1574
    %v2151 = vpack.c.b16 %v1581, %v1578
    %v2152 = vpack.c.b16 %v1582, %v1579
    %v2153 = vpack.c.b16 %v1583, %v1580
    %v2154 = vpack.c.b16 %v1587, %v1584
    %v2155 = vpack.c.b16 %v1588, %v1585
    %v2156 = vpack.c.b16 %v1589, %v1586
    %v2157 = vpack.c.b16 %v1593, %v1590
    %v2158 = vpack.c.b16 %v1594, %v1591
    %v2159 = vpack.c.b16 %v1595, %v1592
    %v2160 = vpack.c.b16 %v1599, %v1596
    %v2161 = vpack.c.b16 %v1600, %v1597
    %v2162 = vpack.c.b16 %v1601, %v1598
    %v2163 = vpack.c.b16 %v1605, %v1602
    %v2164 = vpack.c.b16 %v1606, %v1603
    %v2165 = vpack.c.b16 %v1607, %v1604
    %v2166 = vpack.c.b16 %v1611, %v1608
    %v2167 = vpack.c.b16 %v1612, %v1609
    %v2168 = vpack.c.b16 %v1613, %v1610
    %v2169 = vpack.c.b16 %v1617, %v1614
    %v2170 = vpack.c.b16 %v1618, %v1615
    %v2171 = vpack.c.b16 %v1619, %v1616
    %v2172 = vpack.c.b16 %v1623, %v1620
    %v2173 = vpack.c.b16 %v1624, %v1621
    %v2174 = vpack.c.b16 %v1625, %v1622
    %v2175 = vpack.c.b16 %v1629, %v1626
    %v2176 = vpack.c.b16 %v1630, %v1627
    %v2177 = vpack.c.b16 %v1631, %v1628
    %v2178 = vpack.c.b16 %v1635, %v1632
    %v2179 = vpack.c.b16 %v1636, %v1633
    %v2180 = vpack.c.b16 %v1637, %v1634
    %v2181 = vpack.c.b16 %v1641, %v1638
    %v2182 = vpack.c.b16 %v1642, %v1639
    %v2183 = vpack.c.b16 %v1643, %v1640
    %v2184 = vpack.c.b16 %v1647, %v1644
    %v2185 = vpack.c.b16 %v1648, %v1645
    %v2186 = vpack.c.b16 %v1649, %v1646
    %v2187 = vpack.c.b16 %v1653, %v1650
    %v2188 = vpack.c.b16 %v1654, %v1651
    %v2189 = vpack.c.b16 %v1655, %v1652
    %v2190 = vpack.c.b16 %v1659, %v1656
    %v2191 = vpack.c.b16 %v1660, %v1657
    %v2192 = vpack.c.b16 %v1661, %v1658
    %v2193 = vpack.c.b16 %v1665, %v1662
    %v2194 = vpack.c.b16 %v1666, %v1663
    %v2195 = vpack.c.b16 %v1667, %v1664
    %v2196 = vpack.c.b16 %v1671, %v1668
    %v2197 = vpack.c.b16 %v1672, %v1669
    %v2198 = vpack.c.b16 %v1673, %v1670
    %v2199 = vpack.c.b16 %v1677, %v1674
    %v2200 = vpack.c.b16 %v1678, %v1675
    %v2201 = vpack.c.b16 %v1679, %v1676
    %v2202 = vpack.c.b16 %v1683, %v1680
    %v2203 = vpack.c.b16 %v1684, %v1681
    %v2204 = vpack.c.b16 %v1685, %v1682
    %v2205 = vpack.c.b16 %v1689, %v1686
    %v2206 = vpack.c.b16 %v1690, %v1687
    %v2207 = vpack.c.b16 %v1691, %v1688
    %v2208 = vpack.c.b16 %v1695, %v1692
    %v2209 = vpack.c.b16 %v1696, %v1693
    %v2210 = vpack.c.b16 %v1697, %v1694
    %v2211 = vpack.c.b16 %v1701, %v1698
    %v2212 = vpack.c.b16 %v1702, %v1699
    %v2213 = vpack.c.b16 %v1703, %v1700
    %v2214 = vpack.c.b16 %v1707, %v1704
    %v2215 = vpack.c.b16 %v1708, %v1705
    %v2216 = vpack.c.b16 %v1709, %v1706
    %v2217 = vpack.c.b16 %v1713, %v1710
    %v2218 = vpack.c.b16 %v1714, %v1711
    %v2219 = vpack.c.b16 %v1715, %v1712
    %v2220 = vpack.c.b16 %v1719, %v1716
    %v2221 = vpack.c.b16 %v1720, %v1717
    %v2222 = vpack.c.b16 %v1721, %v1718
    %v2223 = vpack.c.b16 %v1725, %v1722
    %v2224 = vpack.c.b16 %v1726, %v1723
    %v2225 = vpack.c.b16 %v1727, %v1724
    %v2226 = vpack.c.b16 %v1731, %v1728
    %v2227 = vpack.c.b16 %v1732, %v1729
    %v2228 = vpack.c.b16 %v1733, %v1730
    %v2229 = vpack.c.b16 %v1737, %v1734
    %v2230 = vpack.c.b16 %v1738, %v1735
    %v2231 = vpack.c.b16 %v1739, %v1736
    %v2232 = vpack.c.b16 %v1743, %v1740
    %v2233 = vpack.c.b16 %v1744, %v1741
    %v2234 = vpack.c.b16 %v1745, %v1742
    %v2235 = vpack.c.b16 %v1749, %v1746
    %v2236 = vpack.c.b16 %v1750, %v1747
    %v2237 = vpack.c.b16 %v1751, %v1748
    %v2238 = vpack.c.b16 %v1755, %v1752
    %v2239 = vpack.c.b16 %v1756, %v1753
    %v2240 = vpack.c.b16 %v1757, %v1754
    %v2241 = vpack.c.b16 %v1761, %v1758
    %v2242 = vpack.c.b16 %v1762, %v1759
    %v2243 = vpack.c.b16 %v1763, %v1760
    %v2244 = vpack.c.b16 %v1767, %v1764
    %v2245 = vpack.c.b16 %v1768, %v1765
    %v2246 = vpack.c.b16 %v1769, %v1766
    %v2247 = vpack.c.b16 %v1773, %v1770
    %v2248 = vpack.c.b16 %v1774, %v1771
    %v2249 = vpack.c.b16 %v1775, %v1772
    %v2250 = vpack.c.b16 %v1779, %v1776
    %v2251 = vpack.c.b16 %v1780, %v1777
    %v2252 = vpack.c.b16 %v1781, %v1778
    %v2253 = vpack.c.b16 %v1785, %v1782
    %v2254 = vpack.c.b16 %v1786, %v1783
    %v2255 = vpack.c.b16 %v1787, %v1784
    %v2256 = vpack.c.b16 %v1791, %v1788
    %v2257 = vpack.c.b16 %v1792, %v1789
    %v2258 = vpack.c.b16 %v1793, %v1790
    %v2259 = vpack.c.b16 %v1797, %v1794
    %v2260 = vpack.c.b16 %v1798, %v1795
    %v2261 = vpack.c.b16 %v1799, %v1796
    %v2262 = vpack.c.b16 %v1803, %v1800
    %v2263 = vpack.c.b16 %v1804, %v1801
    %v2264 = vpack.c.b16 %v1805, %v1802
    %v2265 = vpack.c.b16 %v1809, %v1806
    %v2266 = vpack.c.b16 %v1810, %v1807
    %v2267 = vpack.c.b16 %v1811, %v1808
    %v2268 = vpack.c.b16 %v1815, %v1812
    %v2269 = vpack.c.b16 %v1816, %v1813
    %v2270 = vpack.c.b16 %v1817, %v1814
    %v2271 = vpack.c.b16 %v1821, %v1818
    %v2272 = vpack.c.b16 %v1822, %v1819
    %v2273 = vpack.c.b16 %v1823, %v1820
    %v2274 = vpack.c.b16 %v1827, %v1824
    %v2275 = vpack.c.b16 %v1828, %v1825
    %v2276 = vpack.c.b16 %v1829, %v1826
    %v2277 = vpack.c.b16 %v1833, %v1830
    %v2278 = vpack.c.b16 %v1834, %v1831
    %v2279 = vpack.c.b16 %v1835, %v1832
    %v2280 = vpack.c.b16 %v1839, %v1836
    %v2281 = vpack.c.b16 %v1840, %v1837
    %v2282 = vpack.c.b16 %v1841, %v1838
    %v2283 = vpack.c.b16 %v1845, %v1842
    %v2284 = vpack.c.b16 %v1846, %v1843
    %v2285 = vpack.c.b16 %v1847, %v1844
    %v2286 = vpack.c.b16 %v1851, %v1848
    %v2287 = vpack.c.b16 %v1852, %v1849
    %v2288 = vpack.c.b16 %v1853, %v1850
    %v2289 = vpack.c.b16 %v1857, %v1854
    %v2290 = vpack.c.b16 %v1858, %v1855
    %v2291 = vpack.c.b16 %v1859, %v1856
    %v2292 = vpack.c.b16 %v1863, %v1860
    %v2293 = vpack.c.b16 %v1864, %v1861
    %v2294 = vpack.c.b16 %v1865, %v1862
    %v2295 = vpack.c.b16 %v1869, %v1866
    %v2296 = vpack.c.b16 %v1870, %v1867
    %v2297 = vpack.c.b16 %v1871, %v1868
    %v2298 = vpack.c.b16 %v1875, %v1872
    %v2299 = vpack.c.b16 %v1876, %v1873
    %v2300 = vpack.c.b16 %v1877, %v1874
    %v2301 = vpack.c.b16 %v1881, %v1878
    %v2302 = vpack.c.b16 %v1882, %v1879
    %v2303 = vpack.c.b16 %v1883, %v1880
    %v2304 = vpack.c.b16 %v1887, %v1884
    %v2305 = vpack.c.b16 %v1888, %v1885
    %v2306 = vpack.c.b16 %v1889, %v1886
    %v2307 = vpack.c.b16 %v1893, %v1890
    %v2308 = vpack.c.b16 %v1894, %v1891
    %v2309 = vpack.c.b16 %v1895, %v1892
    %v2310 = vpack.c.b16 %v1899, %v1896
    %v2311 = vpack.c.b16 %v1900, %v1897
    %v2312 = vpack.c.b16 %v1901, %v1898
    %v2313 = vpack.c.b16 %v1905, %v1902
    %v2314 = vpack.c.b16 %v1906, %v1903
    %v2315 = vpack.c.b16 %v1907, %v1904
    %v2316 = vpack.c.b16 %v1911, %v1908
    %v2317 = vpack.c.b16 %v1912, %v1909
    %v2318 = vpack.c.b16 %v1913, %v1910
    %v2319 = vpack.c.b16 %v1917, %v1914
    %v2320 = vpack.c.b16 %v1918, %v1915
    %v2321 = vpack.c.b16 %v1919, %v1916
    %v2322 = vpack.c.b16 %v1923, %v1920
    %v2323 = vpack.c.b16 %v1924, %v1921
    %v2324 = vpack.c.b16 %v1925, %v1922
    %v2325 = vpack.c.b16 %v1929, %v1926
    %v2326 = vpack.c.b16 %v1930, %v1927
    %v2327 = vpack.c.b16 %v1931, %v1928
    %v2328 = vpack.c.b16 %v1935, %v1932
    %v2329 = vpack.c.b16 %v1936, %v1933
    %v2330 = vpack.c.b16 %v1937, %v1934
    %v2331 = vpack.c.b16 %v1941, %v1938
    %v2332 = vpack.c.b16 %v1942, %v1939
    %v2333 = vpack.c.b16 %v1943, %v1940
    %v2334 = vpack.c.b16 %v1947, %v1944
    %v2335 = vpack.c.b16 %v1948, %v1945
    %v2336 = vpack.c.b16 %v1949, %v1946
    %v2337 = vpack.c.b16 %v1953, %v1950
    %v2338 = vpack.c.b16 %v1954, %v1951
    %v2339 = vpack.c.b16 %v1955, %v1952
    %2724 = vmatprep.subr.bf16.mxu0 %v1978
    %2725 = vmatpush1.bf16.msra.mxu0 %v1977
    %2726 = vmatprep.subr.bf16.mxu0 %v1975
    %2727 = vmatpush1.bf16.msra.mxu0 %v1974
    %2728 = vmatprep.subr.bf16.mxu0 %v1972
    %2729 = vmatpush1.bf16.msra.mxu0 %v1971
    %2730 = vmatprep.subr.bf16.mxu0 %v1969
    %2731 = vmatpush1.bf16.msra.mxu0 %v1968
    %2732 = vmatprep.subr.bf16.mxu0 %v1966
    %2733 = vmatpush1.bf16.msra.mxu0 %v1965
    %2734 = vmatprep.subr.bf16.mxu0 %v1963
    %2735 = vmatpush1.bf16.msra.mxu0 %v1962
    %2736 = vmatprep.subr.bf16.mxu0 %v1960
    %2737 = vmatpush1.bf16.msra.mxu0 %v1959
    %2738 = vmatprep.subr.bf16.mxu0 %v1957
    %2739 = vmatpush1.bf16.msra.mxu0 %v1956
    %2740 = vmatprep.subr.bf16.mxu0 %v2002
    %2741 = vmatpush2.bf16.msra.mxu0 %v2001
    %2742 = vmatprep.subr.bf16.mxu0 %v1999
    %2743 = vmatpush2.bf16.msra.mxu0 %v1998
    %2744 = vmatprep.subr.bf16.mxu0 %v1996
    %2745 = vmatpush2.bf16.msra.mxu0 %v1995
    %2746 = vmatprep.subr.bf16.mxu0 %v1993
    %2747 = vmatpush2.bf16.msra.mxu0 %v1992
    %2748 = vmatprep.subr.bf16.mxu0 %v1990
    %2749 = vmatpush2.bf16.msra.mxu0 %v1989
    %2750 = vmatprep.subr.bf16.mxu0 %v1987
    %2751 = vmatpush2.bf16.msra.mxu0 %v1986
    %2752 = vmatprep.subr.bf16.mxu0 %v1984
    %2753 = vmatpush2.bf16.msra.mxu0 %v1983
    %2754 = vmatprep.subr.bf16.mxu0 %v1981
    %2755 = vmatpush2.bf16.msra.mxu0 %v1980
    %2756 = vmatprep.mubr.bf16.mxu0 %v132
    %2757 = vmatmul.mubr.bf16.gmra.mxu0 %v131
    %v2758 = vpop.f32.mrf.mxu0
    %v2759 = vadd.f32 %v664, %v2758
    %v2760 = vpop.f32.mrf.mxu0
    %v2761 = vadd.f32 %v668, %v2760
    %v2762 = vpop.f32.mrf.mxu0
    %v2763 = vpop.f32.mrf.mxu0
    %2764 = vdwg.mxu0
    %2765 = vmatprep.subr.bf16.mxu0 %v2026
    %2766 = vmatpush1.bf16.msra.mxu0 %v2025
    %2767 = vmatprep.subr.bf16.mxu0 %v2023
    %2768 = vmatpush1.bf16.msra.mxu0 %v2022
    %2769 = vmatprep.subr.bf16.mxu0 %v2020
    %2770 = vmatpush1.bf16.msra.mxu0 %v2019
    %2771 = vmatprep.subr.bf16.mxu0 %v2017
    %2772 = vmatpush1.bf16.msra.mxu0 %v2016
    %2773 = vmatprep.subr.bf16.mxu0 %v2014
    %2774 = vmatpush1.bf16.msra.mxu0 %v2013
    %2775 = vmatprep.subr.bf16.mxu0 %v2011
    %2776 = vmatpush1.bf16.msra.mxu0 %v2010
    %2777 = vmatprep.subr.bf16.mxu0 %v2008
    %2778 = vmatpush1.bf16.msra.mxu0 %v2007
    %2779 = vmatprep.subr.bf16.mxu0 %v2005
    %2780 = vmatpush1.bf16.msra.mxu0 %v2004
    %2781 = vmatprep.subr.bf16.mxu0 %v2050
    %2782 = vmatpush2.bf16.msra.mxu0 %v2049
    %2783 = vmatprep.subr.bf16.mxu0 %v2047
    %2784 = vmatpush2.bf16.msra.mxu0 %v2046
    %2785 = vmatprep.subr.bf16.mxu0 %v2044
    %2786 = vmatpush2.bf16.msra.mxu0 %v2043
    %2787 = vmatprep.subr.bf16.mxu0 %v2041
    %2788 = vmatpush2.bf16.msra.mxu0 %v2040
    %2789 = vmatprep.subr.bf16.mxu0 %v2038
    %2790 = vmatpush2.bf16.msra.mxu0 %v2037
    %2791 = vmatprep.subr.bf16.mxu0 %v2035
    %2792 = vmatpush2.bf16.msra.mxu0 %v2034
    %2793 = vmatprep.subr.bf16.mxu0 %v2032
    %2794 = vmatpush2.bf16.msra.mxu0 %v2031
    %2795 = vmatprep.subr.bf16.mxu0 %v2029
    %2796 = vmatpush2.bf16.msra.mxu0 %v2028
    %2797 = vmatprep.mubr.bf16.mxu0 %v134
    %2798 = vmatmul.mubr.bf16.gmra.mxu0 %v133
    %v2799 = vpop.f32.mrf.mxu0
    %v2800 = vadd.f32 %v2759, %v2799
    %v2801 = vpop.f32.mrf.mxu0
    %v2802 = vadd.f32 %v2761, %v2801
    %v2803 = vpop.f32.mrf.mxu0
    %v2804 = vpop.f32.mrf.mxu0
    %2805 = vdwg.mxu0
    %2806 = vmatprep.subr.bf16.mxu0 %v2074
    %2807 = vmatpush1.bf16.msra.mxu0 %v2073
    %2808 = vmatprep.subr.bf16.mxu0 %v2071
    %2809 = vmatpush1.bf16.msra.mxu0 %v2070
    %2810 = vmatprep.subr.bf16.mxu0 %v2068
    %2811 = vmatpush1.bf16.msra.mxu0 %v2067
    %2812 = vmatprep.subr.bf16.mxu0 %v2065
    %2813 = vmatpush1.bf16.msra.mxu0 %v2064
    %2814 = vmatprep.subr.bf16.mxu0 %v2062
    %2815 = vmatpush1.bf16.msra.mxu0 %v2061
    %2816 = vmatprep.subr.bf16.mxu0 %v2059
    %2817 = vmatpush1.bf16.msra.mxu0 %v2058
    %2818 = vmatprep.subr.bf16.mxu0 %v2056
    %2819 = vmatpush1.bf16.msra.mxu0 %v2055
    %2820 = vmatprep.subr.bf16.mxu0 %v2053
    %2821 = vmatpush1.bf16.msra.mxu0 %v2052
    %2822 = vmatprep.subr.bf16.mxu0 %v2098
    %2823 = vmatpush2.bf16.msra.mxu0 %v2097
    %2824 = vmatprep.subr.bf16.mxu0 %v2095
    %2825 = vmatpush2.bf16.msra.mxu0 %v2094
    %2826 = vmatprep.subr.bf16.mxu0 %v2092
    %2827 = vmatpush2.bf16.msra.mxu0 %v2091
    %2828 = vmatprep.subr.bf16.mxu0 %v2089
    %2829 = vmatpush2.bf16.msra.mxu0 %v2088
    %2830 = vmatprep.subr.bf16.mxu0 %v2086
    %2831 = vmatpush2.bf16.msra.mxu0 %v2085
    %2832 = vmatprep.subr.bf16.mxu0 %v2083
    %2833 = vmatpush2.bf16.msra.mxu0 %v2082
    %2834 = vmatprep.subr.bf16.mxu0 %v2080
    %2835 = vmatpush2.bf16.msra.mxu0 %v2079
    %2836 = vmatprep.subr.bf16.mxu0 %v2077
    %2837 = vmatpush2.bf16.msra.mxu0 %v2076
    %2838 = vmatprep.mubr.bf16.mxu0 %v136
    %2839 = vmatmul.mubr.bf16.gmra.mxu0 %v135
    %v2840 = vpop.f32.mrf.mxu0
    %v2841 = vadd.f32 %v2800, %v2840
    %v2842 = vpop.f32.mrf.mxu0
    %v2843 = vadd.f32 %v2802, %v2842
    %v2844 = vpop.f32.mrf.mxu0
    %v2845 = vpop.f32.mrf.mxu0
    %2846 = vdwg.mxu0
    %2847 = vmatprep.subr.bf16.mxu0 %v2122
    %2848 = vmatpush1.bf16.msra.mxu0 %v2121
    %2849 = vmatprep.subr.bf16.mxu0 %v2119
    %2850 = vmatpush1.bf16.msra.mxu0 %v2118
    %2851 = vmatprep.subr.bf16.mxu0 %v2116
    %2852 = vmatpush1.bf16.msra.mxu0 %v2115
    %2853 = vmatprep.subr.bf16.mxu0 %v2113
    %2854 = vmatpush1.bf16.msra.mxu0 %v2112
    %2855 = vmatprep.subr.bf16.mxu0 %v2110
    %2856 = vmatpush1.bf16.msra.mxu0 %v2109
    %2857 = vmatprep.subr.bf16.mxu0 %v2107
    %2858 = vmatpush1.bf16.msra.mxu0 %v2106
    %2859 = vmatprep.subr.bf16.mxu0 %v2104
    %2860 = vmatpush1.bf16.msra.mxu0 %v2103
    %2861 = vmatprep.subr.bf16.mxu0 %v2101
    %2862 = vmatpush1.bf16.msra.mxu0 %v2100
    %2863 = vmatprep.subr.bf16.mxu0 %v2146
    %2864 = vmatpush2.bf16.msra.mxu0 %v2145
    %2865 = vmatprep.subr.bf16.mxu0 %v2143
    %2866 = vmatpush2.bf16.msra.mxu0 %v2142
    %2867 = vmatprep.subr.bf16.mxu0 %v2140
    %2868 = vmatpush2.bf16.msra.mxu0 %v2139
    %2869 = vmatprep.subr.bf16.mxu0 %v2137
    %2870 = vmatpush2.bf16.msra.mxu0 %v2136
    %2871 = vmatprep.subr.bf16.mxu0 %v2134
    %2872 = vmatpush2.bf16.msra.mxu0 %v2133
    %2873 = vmatprep.subr.bf16.mxu0 %v2131
    %2874 = vmatpush2.bf16.msra.mxu0 %v2130
    %2875 = vmatprep.subr.bf16.mxu0 %v2128
    %2876 = vmatpush2.bf16.msra.mxu0 %v2127
    %2877 = vmatprep.subr.bf16.mxu0 %v2125
    %2878 = vmatpush2.bf16.msra.mxu0 %v2124
    %2879 = vmatprep.mubr.bf16.mxu0 %v138
    %2880 = vmatmul.mubr.bf16.gmra.mxu0 %v137
    %v2881 = vpop.f32.mrf.mxu0
    %v2882 = vadd.f32 %v2841, %v2881
    %v2883 = vpop.f32.mrf.mxu0
    %v2884 = vadd.f32 %v2843, %v2883
    %v2885 = vpop.f32.mrf.mxu0
    %v2886 = vpop.f32.mrf.mxu0
    %2887 = vdwg.mxu0
    %2888 = vmatprep.subr.bf16.mxu0 %v2170
    %2889 = vmatpush1.bf16.msra.mxu0 %v2169
    %2890 = vmatprep.subr.bf16.mxu0 %v2167
    %2891 = vmatpush1.bf16.msra.mxu0 %v2166
    %2892 = vmatprep.subr.bf16.mxu0 %v2164
    %2893 = vmatpush1.bf16.msra.mxu0 %v2163
    %2894 = vmatprep.subr.bf16.mxu0 %v2161
    %2895 = vmatpush1.bf16.msra.mxu0 %v2160
    %2896 = vmatprep.subr.bf16.mxu0 %v2158
    %2897 = vmatpush1.bf16.msra.mxu0 %v2157
    %2898 = vmatprep.subr.bf16.mxu0 %v2155
    %2899 = vmatpush1.bf16.msra.mxu0 %v2154
    %2900 = vmatprep.subr.bf16.mxu0 %v2152
    %2901 = vmatpush1.bf16.msra.mxu0 %v2151
    %2902 = vmatprep.subr.bf16.mxu0 %v2149
    %2903 = vmatpush1.bf16.msra.mxu0 %v2148
    %2904 = vmatprep.subr.bf16.mxu0 %v2194
    %2905 = vmatpush2.bf16.msra.mxu0 %v2193
    %2906 = vmatprep.subr.bf16.mxu0 %v2191
    %2907 = vmatpush2.bf16.msra.mxu0 %v2190
    %2908 = vmatprep.subr.bf16.mxu0 %v2188
    %2909 = vmatpush2.bf16.msra.mxu0 %v2187
    %2910 = vmatprep.subr.bf16.mxu0 %v2185
    %2911 = vmatpush2.bf16.msra.mxu0 %v2184
    %2912 = vmatprep.subr.bf16.mxu0 %v2182
    %2913 = vmatpush2.bf16.msra.mxu0 %v2181
    %2914 = vmatprep.subr.bf16.mxu0 %v2179
    %2915 = vmatpush2.bf16.msra.mxu0 %v2178
    %2916 = vmatprep.subr.bf16.mxu0 %v2176
    %2917 = vmatpush2.bf16.msra.mxu0 %v2175
    %2918 = vmatprep.subr.bf16.mxu0 %v2173
    %2919 = vmatpush2.bf16.msra.mxu0 %v2172
    %2920 = vmatprep.mubr.bf16.mxu0 %v140
    %2921 = vmatmul.mubr.bf16.gmra.mxu0 %v139
    %v2922 = vpop.f32.mrf.mxu0
    %v2923 = vadd.f32 %v2882, %v2922
    %v2924 = vpop.f32.mrf.mxu0
    %v2925 = vadd.f32 %v2884, %v2924
    %v2926 = vpop.f32.mrf.mxu0
    %v2927 = vpop.f32.mrf.mxu0
    %2928 = vdwg.mxu0
    %2929 = vmatprep.subr.bf16.mxu0 %v2218
    %2930 = vmatpush1.bf16.msra.mxu0 %v2217
    %2931 = vmatprep.subr.bf16.mxu0 %v2215
    %2932 = vmatpush1.bf16.msra.mxu0 %v2214
    %2933 = vmatprep.subr.bf16.mxu0 %v2212
    %2934 = vmatpush1.bf16.msra.mxu0 %v2211
    %2935 = vmatprep.subr.bf16.mxu0 %v2209
    %2936 = vmatpush1.bf16.msra.mxu0 %v2208
    %2937 = vmatprep.subr.bf16.mxu0 %v2206
    %2938 = vmatpush1.bf16.msra.mxu0 %v2205
    %2939 = vmatprep.subr.bf16.mxu0 %v2203
    %2940 = vmatpush1.bf16.msra.mxu0 %v2202
    %2941 = vmatprep.subr.bf16.mxu0 %v2200
    %2942 = vmatpush1.bf16.msra.mxu0 %v2199
    %2943 = vmatprep.subr.bf16.mxu0 %v2197
    %2944 = vmatpush1.bf16.msra.mxu0 %v2196
    %2945 = vmatprep.subr.bf16.mxu0 %v2242
    %2946 = vmatpush2.bf16.msra.mxu0 %v2241
    %2947 = vmatprep.subr.bf16.mxu0 %v2239
    %2948 = vmatpush2.bf16.msra.mxu0 %v2238
    %2949 = vmatprep.subr.bf16.mxu0 %v2236
    %2950 = vmatpush2.bf16.msra.mxu0 %v2235
    %2951 = vmatprep.subr.bf16.mxu0 %v2233
    %2952 = vmatpush2.bf16.msra.mxu0 %v2232
    %2953 = vmatprep.subr.bf16.mxu0 %v2230
    %2954 = vmatpush2.bf16.msra.mxu0 %v2229
    %2955 = vmatprep.subr.bf16.mxu0 %v2227
    %2956 = vmatpush2.bf16.msra.mxu0 %v2226
    %2957 = vmatprep.subr.bf16.mxu0 %v2224
    %2958 = vmatpush2.bf16.msra.mxu0 %v2223
    %2959 = vmatprep.subr.bf16.mxu0 %v2221
    %2960 = vmatpush2.bf16.msra.mxu0 %v2220
    %2961 = vmatprep.mubr.bf16.mxu0 %v142
    %2962 = vmatmul.mubr.bf16.gmra.mxu0 %v141
    %v2963 = vpop.f32.mrf.mxu0
    %v2964 = vadd.f32 %v2923, %v2963
    %v2965 = vpop.f32.mrf.mxu0
    %v2966 = vadd.f32 %v2925, %v2965
    %v2967 = vpop.f32.mrf.mxu0
    %v2968 = vpop.f32.mrf.mxu0
    %2969 = vdwg.mxu0
    %2970 = vmatprep.subr.bf16.mxu0 %v2266
    %2971 = vmatpush1.bf16.msra.mxu0 %v2265
    %2972 = vmatprep.subr.bf16.mxu0 %v2263
    %2973 = vmatpush1.bf16.msra.mxu0 %v2262
    %2974 = vmatprep.subr.bf16.mxu0 %v2260
    %2975 = vmatpush1.bf16.msra.mxu0 %v2259
    %2976 = vmatprep.subr.bf16.mxu0 %v2257
    %2977 = vmatpush1.bf16.msra.mxu0 %v2256
    %2978 = vmatprep.subr.bf16.mxu0 %v2254
    %2979 = vmatpush1.bf16.msra.mxu0 %v2253
    %2980 = vmatprep.subr.bf16.mxu0 %v2251
    %2981 = vmatpush1.bf16.msra.mxu0 %v2250
    %2982 = vmatprep.subr.bf16.mxu0 %v2248
    %2983 = vmatpush1.bf16.msra.mxu0 %v2247
    %2984 = vmatprep.subr.bf16.mxu0 %v2245
    %2985 = vmatpush1.bf16.msra.mxu0 %v2244
    %2986 = vmatprep.subr.bf16.mxu0 %v2290
    %2987 = vmatpush2.bf16.msra.mxu0 %v2289
    %2988 = vmatprep.subr.bf16.mxu0 %v2287
    %2989 = vmatpush2.bf16.msra.mxu0 %v2286
    %2990 = vmatprep.subr.bf16.mxu0 %v2284
    %2991 = vmatpush2.bf16.msra.mxu0 %v2283
    %2992 = vmatprep.subr.bf16.mxu0 %v2281
    %2993 = vmatpush2.bf16.msra.mxu0 %v2280
    %2994 = vmatprep.subr.bf16.mxu0 %v2278
    %2995 = vmatpush2.bf16.msra.mxu0 %v2277
    %2996 = vmatprep.subr.bf16.mxu0 %v2275
    %2997 = vmatpush2.bf16.msra.mxu0 %v2274
    %2998 = vmatprep.subr.bf16.mxu0 %v2272
    %2999 = vmatpush2.bf16.msra.mxu0 %v2271
    %3000 = vmatprep.subr.bf16.mxu0 %v2269
    %3001 = vmatpush2.bf16.msra.mxu0 %v2268
    %3002 = vmatprep.mubr.bf16.mxu0 %v144
    %3003 = vmatmul.mubr.bf16.gmra.mxu0 %v143
    %v3004 = vpop.f32.mrf.mxu0
    %v3005 = vadd.f32 %v2964, %v3004
    %v3006 = vpop.f32.mrf.mxu0
    %v3007 = vadd.f32 %v2966, %v3006
    %v3008 = vpop.f32.mrf.mxu0
    %v3009 = vpop.f32.mrf.mxu0
    %3010 = vdwg.mxu0
    %3011 = vmatprep.subr.bf16.mxu0 %v2314
    %3012 = vmatpush1.bf16.msra.mxu0 %v2313
    %3013 = vmatprep.subr.bf16.mxu0 %v2311
    %3014 = vmatpush1.bf16.msra.mxu0 %v2310
    %3015 = vmatprep.subr.bf16.mxu0 %v2308
    %3016 = vmatpush1.bf16.msra.mxu0 %v2307
    %3017 = vmatprep.subr.bf16.mxu0 %v2305
    %3018 = vmatpush1.bf16.msra.mxu0 %v2304
    %3019 = vmatprep.subr.bf16.mxu0 %v2302
    %3020 = vmatpush1.bf16.msra.mxu0 %v2301
    %3021 = vmatprep.subr.bf16.mxu0 %v2299
    %3022 = vmatpush1.bf16.msra.mxu0 %v2298
    %3023 = vmatprep.subr.bf16.mxu0 %v2296
    %3024 = vmatpush1.bf16.msra.mxu0 %v2295
    %3025 = vmatprep.subr.bf16.mxu0 %v2293
    %3026 = vmatpush1.bf16.msra.mxu0 %v2292
    %3027 = vmatprep.subr.bf16.mxu0 %v2338
    %3028 = vmatpush2.bf16.msra.mxu0 %v2337
    %3029 = vmatprep.subr.bf16.mxu0 %v2335
    %3030 = vmatpush2.bf16.msra.mxu0 %v2334
    %3031 = vmatprep.subr.bf16.mxu0 %v2332
    %3032 = vmatpush2.bf16.msra.mxu0 %v2331
    %3033 = vmatprep.subr.bf16.mxu0 %v2329
    %3034 = vmatpush2.bf16.msra.mxu0 %v2328
    %3035 = vmatprep.subr.bf16.mxu0 %v2326
    %3036 = vmatpush2.bf16.msra.mxu0 %v2325
    %3037 = vmatprep.subr.bf16.mxu0 %v2323
    %3038 = vmatpush2.bf16.msra.mxu0 %v2322
    %3039 = vmatprep.subr.bf16.mxu0 %v2320
    %3040 = vmatpush2.bf16.msra.mxu0 %v2319
    %3041 = vmatprep.subr.bf16.mxu0 %v2317
    %3042 = vmatpush2.bf16.msra.mxu0 %v2316
    %3043 = vmatprep.mubr.bf16.mxu0 %v146
    %3044 = vmatmul.mubr.bf16.gmra.mxu0 %v145
    %v3045 = vpop.f32.mrf.mxu0
    %v3046 = vadd.f32 %v3005, %v3045
    %v3047 = vpop.f32.mrf.mxu0
    %v3048 = vadd.f32 %v3007, %v3047
    %v3049 = vpop.f32.mrf.mxu0
    %v3050 = vpop.f32.mrf.mxu0
    %3051 = vdwg.mxu0
    %3052 = vmatprep.subr.bf16.mxu0 0
    %3053 = vmatpush1.bf16.msra.mxu0 %v1979
    %3054 = vmatprep.subr.bf16.mxu0 0
    %3055 = vmatpush1.bf16.msra.mxu0 %v1976
    %3056 = vmatprep.subr.bf16.mxu0 0
    %3057 = vmatpush1.bf16.msra.mxu0 %v1973
    %3058 = vmatprep.subr.bf16.mxu0 0
    %3059 = vmatpush1.bf16.msra.mxu0 %v1970
    %3060 = vmatprep.subr.bf16.mxu0 0
    %3061 = vmatpush1.bf16.msra.mxu0 %v1967
    %3062 = vmatprep.subr.bf16.mxu0 0
    %3063 = vmatpush1.bf16.msra.mxu0 %v1964
    %3064 = vmatprep.subr.bf16.mxu0 0
    %3065 = vmatpush1.bf16.msra.mxu0 %v1961
    %3066 = vmatprep.subr.bf16.mxu0 0
    %3067 = vmatpush1.bf16.msra.mxu0 %v1958
    %3068 = vmatprep.subr.bf16.mxu0 0
    %3069 = vmatpush2.bf16.msra.mxu0 %v2003
    %3070 = vmatprep.subr.bf16.mxu0 0
    %3071 = vmatpush2.bf16.msra.mxu0 %v2000
    %3072 = vmatprep.subr.bf16.mxu0 0
    %3073 = vmatpush2.bf16.msra.mxu0 %v1997
    %3074 = vmatprep.subr.bf16.mxu0 0
    %3075 = vmatpush2.bf16.msra.mxu0 %v1994
    %3076 = vmatprep.subr.bf16.mxu0 0
    %3077 = vmatpush2.bf16.msra.mxu0 %v1991
    %3078 = vmatprep.subr.bf16.mxu0 0
    %3079 = vmatpush2.bf16.msra.mxu0 %v1988
    %3080 = vmatprep.subr.bf16.mxu0 0
    %3081 = vmatpush2.bf16.msra.mxu0 %v1985
    %3082 = vmatprep.subr.bf16.mxu0 0
    %3083 = vmatpush2.bf16.msra.mxu0 %v1982
    %3084 = vmatprep.mubr.bf16.mxu0 %v132
    %3085 = vmatmul.mubr.bf16.gmra.mxu0 %v131
    %v3086 = vpop.f32.mrf.mxu0
    %v3087 = vadd.f32 %v672, %v3086
    %v3088 = vpop.f32.mrf.mxu0
    %v3089 = vpop.f32.mrf.mxu0
    %v3090 = vpop.f32.mrf.mxu0
    %3091 = vdwg.mxu0
    %3092 = vmatprep.subr.bf16.mxu0 0
    %3093 = vmatpush1.bf16.msra.mxu0 %v2027
    %3094 = vmatprep.subr.bf16.mxu0 0
    %3095 = vmatpush1.bf16.msra.mxu0 %v2024
    %3096 = vmatprep.subr.bf16.mxu0 0
    %3097 = vmatpush1.bf16.msra.mxu0 %v2021
    %3098 = vmatprep.subr.bf16.mxu0 0
    %3099 = vmatpush1.bf16.msra.mxu0 %v2018
    %3100 = vmatprep.subr.bf16.mxu0 0
    %3101 = vmatpush1.bf16.msra.mxu0 %v2015
    %3102 = vmatprep.subr.bf16.mxu0 0
    %3103 = vmatpush1.bf16.msra.mxu0 %v2012
    %3104 = vmatprep.subr.bf16.mxu0 0
    %3105 = vmatpush1.bf16.msra.mxu0 %v2009
    %3106 = vmatprep.subr.bf16.mxu0 0
    %3107 = vmatpush1.bf16.msra.mxu0 %v2006
    %3108 = vmatprep.subr.bf16.mxu0 0
    %3109 = vmatpush2.bf16.msra.mxu0 %v2051
    %3110 = vmatprep.subr.bf16.mxu0 0
    %3111 = vmatpush2.bf16.msra.mxu0 %v2048
    %3112 = vmatprep.subr.bf16.mxu0 0
    %3113 = vmatpush2.bf16.msra.mxu0 %v2045
    %3114 = vmatprep.subr.bf16.mxu0 0
    %3115 = vmatpush2.bf16.msra.mxu0 %v2042
    %3116 = vmatprep.subr.bf16.mxu0 0
    %3117 = vmatpush2.bf16.msra.mxu0 %v2039
    %3118 = vmatprep.subr.bf16.mxu0 0
    %3119 = vmatpush2.bf16.msra.mxu0 %v2036
    %3120 = vmatprep.subr.bf16.mxu0 0
    %3121 = vmatpush2.bf16.msra.mxu0 %v2033
    %3122 = vmatprep.subr.bf16.mxu0 0
    %3123 = vmatpush2.bf16.msra.mxu0 %v2030
    %3124 = vmatprep.mubr.bf16.mxu0 %v134
    %3125 = vmatmul.mubr.bf16.gmra.mxu0 %v133
    %v3126 = vpop.f32.mrf.mxu0
    %v3127 = vadd.f32 %v3087, %v3126
    %v3128 = vpop.f32.mrf.mxu0
    %v3129 = vpop.f32.mrf.mxu0
    %v3130 = vpop.f32.mrf.mxu0
    %3131 = vdwg.mxu0
    %3132 = vmatprep.subr.bf16.mxu0 0
    %3133 = vmatpush1.bf16.msra.mxu0 %v2075
    %3134 = vmatprep.subr.bf16.mxu0 0
    %3135 = vmatpush1.bf16.msra.mxu0 %v2072
    %3136 = vmatprep.subr.bf16.mxu0 0
    %3137 = vmatpush1.bf16.msra.mxu0 %v2069
    %3138 = vmatprep.subr.bf16.mxu0 0
    %3139 = vmatpush1.bf16.msra.mxu0 %v2066
    %3140 = vmatprep.subr.bf16.mxu0 0
    %3141 = vmatpush1.bf16.msra.mxu0 %v2063
    %3142 = vmatprep.subr.bf16.mxu0 0
    %3143 = vmatpush1.bf16.msra.mxu0 %v2060
    %3144 = vmatprep.subr.bf16.mxu0 0
    %3145 = vmatpush1.bf16.msra.mxu0 %v2057
    %3146 = vmatprep.subr.bf16.mxu0 0
    %3147 = vmatpush1.bf16.msra.mxu0 %v2054
    %3148 = vmatprep.subr.bf16.mxu0 0
    %3149 = vmatpush2.bf16.msra.mxu0 %v2099
    %3150 = vmatprep.subr.bf16.mxu0 0
    %3151 = vmatpush2.bf16.msra.mxu0 %v2096
    %3152 = vmatprep.subr.bf16.mxu0 0
    %3153 = vmatpush2.bf16.msra.mxu0 %v2093
    %3154 = vmatprep.subr.bf16.mxu0 0
    %3155 = vmatpush2.bf16.msra.mxu0 %v2090
    %3156 = vmatprep.subr.bf16.mxu0 0
    %3157 = vmatpush2.bf16.msra.mxu0 %v2087
    %3158 = vmatprep.subr.bf16.mxu0 0
    %3159 = vmatpush2.bf16.msra.mxu0 %v2084
    %3160 = vmatprep.subr.bf16.mxu0 0
    %3161 = vmatpush2.bf16.msra.mxu0 %v2081
    %3162 = vmatprep.subr.bf16.mxu0 0
    %3163 = vmatpush2.bf16.msra.mxu0 %v2078
    %3164 = vmatprep.mubr.bf16.mxu0 %v136
    %3165 = vmatmul.mubr.bf16.gmra.mxu0 %v135
    %v3166 = vpop.f32.mrf.mxu0
    %v3167 = vadd.f32 %v3127, %v3166
    %v3168 = vpop.f32.mrf.mxu0
    %v3169 = vpop.f32.mrf.mxu0
    %v3170 = vpop.f32.mrf.mxu0
    %3171 = vdwg.mxu0
    %3172 = vmatprep.subr.bf16.mxu0 0
    %3173 = vmatpush1.bf16.msra.mxu0 %v2123
    %3174 = vmatprep.subr.bf16.mxu0 0
    %3175 = vmatpush1.bf16.msra.mxu0 %v2120
    %3176 = vmatprep.subr.bf16.mxu0 0
    %3177 = vmatpush1.bf16.msra.mxu0 %v2117
    %3178 = vmatprep.subr.bf16.mxu0 0
    %3179 = vmatpush1.bf16.msra.mxu0 %v2114
    %3180 = vmatprep.subr.bf16.mxu0 0
    %3181 = vmatpush1.bf16.msra.mxu0 %v2111
    %3182 = vmatprep.subr.bf16.mxu0 0
    %3183 = vmatpush1.bf16.msra.mxu0 %v2108
    %3184 = vmatprep.subr.bf16.mxu0 0
    %3185 = vmatpush1.bf16.msra.mxu0 %v2105
    %3186 = vmatprep.subr.bf16.mxu0 0
    %3187 = vmatpush1.bf16.msra.mxu0 %v2102
    %3188 = vmatprep.subr.bf16.mxu0 0
    %3189 = vmatpush2.bf16.msra.mxu0 %v2147
    %3190 = vmatprep.subr.bf16.mxu0 0
    %3191 = vmatpush2.bf16.msra.mxu0 %v2144
    %3192 = vmatprep.subr.bf16.mxu0 0
    %3193 = vmatpush2.bf16.msra.mxu0 %v2141
    %3194 = vmatprep.subr.bf16.mxu0 0
    %3195 = vmatpush2.bf16.msra.mxu0 %v2138
    %3196 = vmatprep.subr.bf16.mxu0 0
    %3197 = vmatpush2.bf16.msra.mxu0 %v2135
    %3198 = vmatprep.subr.bf16.mxu0 0
    %3199 = vmatpush2.bf16.msra.mxu0 %v2132
    %3200 = vmatprep.subr.bf16.mxu0 0
    %3201 = vmatpush2.bf16.msra.mxu0 %v2129
    %3202 = vmatprep.subr.bf16.mxu0 0
    %3203 = vmatpush2.bf16.msra.mxu0 %v2126
    %3204 = vmatprep.mubr.bf16.mxu0 %v138
    %3205 = vmatmul.mubr.bf16.gmra.mxu0 %v137
    %v3206 = vpop.f32.mrf.mxu0
    %v3207 = vadd.f32 %v3167, %v3206
    %v3208 = vpop.f32.mrf.mxu0
    %v3209 = vpop.f32.mrf.mxu0
    %v3210 = vpop.f32.mrf.mxu0
    %3211 = vdwg.mxu0
    %3212 = vmatprep.subr.bf16.mxu0 0
    %3213 = vmatpush1.bf16.msra.mxu0 %v2171
    %3214 = vmatprep.subr.bf16.mxu0 0
    %3215 = vmatpush1.bf16.msra.mxu0 %v2168
    %3216 = vmatprep.subr.bf16.mxu0 0
    %3217 = vmatpush1.bf16.msra.mxu0 %v2165
    %3218 = vmatprep.subr.bf16.mxu0 0
    %3219 = vmatpush1.bf16.msra.mxu0 %v2162
    %3220 = vmatprep.subr.bf16.mxu0 0
    %3221 = vmatpush1.bf16.msra.mxu0 %v2159
    %3222 = vmatprep.subr.bf16.mxu0 0
    %3223 = vmatpush1.bf16.msra.mxu0 %v2156
    %3224 = vmatprep.subr.bf16.mxu0 0
    %3225 = vmatpush1.bf16.msra.mxu0 %v2153
    %3226 = vmatprep.subr.bf16.mxu0 0
    %3227 = vmatpush1.bf16.msra.mxu0 %v2150
    %3228 = vmatprep.subr.bf16.mxu0 0
    %3229 = vmatpush2.bf16.msra.mxu0 %v2195
    %3230 = vmatprep.subr.bf16.mxu0 0
    %3231 = vmatpush2.bf16.msra.mxu0 %v2192
    %3232 = vmatprep.subr.bf16.mxu0 0
    %3233 = vmatpush2.bf16.msra.mxu0 %v2189
    %3234 = vmatprep.subr.bf16.mxu0 0
    %3235 = vmatpush2.bf16.msra.mxu0 %v2186
    %3236 = vmatprep.subr.bf16.mxu0 0
    %3237 = vmatpush2.bf16.msra.mxu0 %v2183
    %3238 = vmatprep.subr.bf16.mxu0 0
    %3239 = vmatpush2.bf16.msra.mxu0 %v2180
    %3240 = vmatprep.subr.bf16.mxu0 0
    %3241 = vmatpush2.bf16.msra.mxu0 %v2177
    %3242 = vmatprep.subr.bf16.mxu0 0
    %3243 = vmatpush2.bf16.msra.mxu0 %v2174
    %3244 = vmatprep.mubr.bf16.mxu0 %v140
    %3245 = vmatmul.mubr.bf16.gmra.mxu0 %v139
    %v3246 = vpop.f32.mrf.mxu0
    %v3247 = vadd.f32 %v3207, %v3246
    %v3248 = vpop.f32.mrf.mxu0
    %v3249 = vpop.f32.mrf.mxu0
    %v3250 = vpop.f32.mrf.mxu0
    %3251 = vdwg.mxu0
    %3252 = vmatprep.subr.bf16.mxu0 0
    %3253 = vmatpush1.bf16.msra.mxu0 %v2219
    %3254 = vmatprep.subr.bf16.mxu0 0
    %3255 = vmatpush1.bf16.msra.mxu0 %v2216
    %3256 = vmatprep.subr.bf16.mxu0 0
    %3257 = vmatpush1.bf16.msra.mxu0 %v2213
    %3258 = vmatprep.subr.bf16.mxu0 0
    %3259 = vmatpush1.bf16.msra.mxu0 %v2210
    %3260 = vmatprep.subr.bf16.mxu0 0
    %3261 = vmatpush1.bf16.msra.mxu0 %v2207
    %3262 = vmatprep.subr.bf16.mxu0 0
    %3263 = vmatpush1.bf16.msra.mxu0 %v2204
    %3264 = vmatprep.subr.bf16.mxu0 0
    %3265 = vmatpush1.bf16.msra.mxu0 %v2201
    %3266 = vmatprep.subr.bf16.mxu0 0
    %3267 = vmatpush1.bf16.msra.mxu0 %v2198
    %3268 = vmatprep.subr.bf16.mxu0 0
    %3269 = vmatpush2.bf16.msra.mxu0 %v2243
    %3270 = vmatprep.subr.bf16.mxu0 0
    %3271 = vmatpush2.bf16.msra.mxu0 %v2240
    %3272 = vmatprep.subr.bf16.mxu0 0
    %3273 = vmatpush2.bf16.msra.mxu0 %v2237
    %3274 = vmatprep.subr.bf16.mxu0 0
    %3275 = vmatpush2.bf16.msra.mxu0 %v2234
    %3276 = vmatprep.subr.bf16.mxu0 0
    %3277 = vmatpush2.bf16.msra.mxu0 %v2231
    %3278 = vmatprep.subr.bf16.mxu0 0
    %3279 = vmatpush2.bf16.msra.mxu0 %v2228
    %3280 = vmatprep.subr.bf16.mxu0 0
    %3281 = vmatpush2.bf16.msra.mxu0 %v2225
    %3282 = vmatprep.subr.bf16.mxu0 0
    %3283 = vmatpush2.bf16.msra.mxu0 %v2222
    %3284 = vmatprep.mubr.bf16.mxu0 %v142
    %3285 = vmatmul.mubr.bf16.gmra.mxu0 %v141
    %v3286 = vpop.f32.mrf.mxu0
    %v3287 = vadd.f32 %v3247, %v3286
    %v3288 = vpop.f32.mrf.mxu0
    %v3289 = vpop.f32.mrf.mxu0
    %v3290 = vpop.f32.mrf.mxu0
    %3291 = vdwg.mxu0
    %3292 = vmatprep.subr.bf16.mxu0 0
    %3293 = vmatpush1.bf16.msra.mxu0 %v2267
    %3294 = vmatprep.subr.bf16.mxu0 0
    %3295 = vmatpush1.bf16.msra.mxu0 %v2264
    %3296 = vmatprep.subr.bf16.mxu0 0
    %3297 = vmatpush1.bf16.msra.mxu0 %v2261
    %3298 = vmatprep.subr.bf16.mxu0 0
    %3299 = vmatpush1.bf16.msra.mxu0 %v2258
    %3300 = vmatprep.subr.bf16.mxu0 0
    %3301 = vmatpush1.bf16.msra.mxu0 %v2255
    %3302 = vmatprep.subr.bf16.mxu0 0
    %3303 = vmatpush1.bf16.msra.mxu0 %v2252
    %3304 = vmatprep.subr.bf16.mxu0 0
    %3305 = vmatpush1.bf16.msra.mxu0 %v2249
    %3306 = vmatprep.subr.bf16.mxu0 0
    %3307 = vmatpush1.bf16.msra.mxu0 %v2246
    %3308 = vmatprep.subr.bf16.mxu0 0
    %3309 = vmatpush2.bf16.msra.mxu0 %v2291
    %3310 = vmatprep.subr.bf16.mxu0 0
    %3311 = vmatpush2.bf16.msra.mxu0 %v2288
    %3312 = vmatprep.subr.bf16.mxu0 0
    %3313 = vmatpush2.bf16.msra.mxu0 %v2285
    %3314 = vmatprep.subr.bf16.mxu0 0
    %3315 = vmatpush2.bf16.msra.mxu0 %v2282
    %3316 = vmatprep.subr.bf16.mxu0 0
    %3317 = vmatpush2.bf16.msra.mxu0 %v2279
    %3318 = vmatprep.subr.bf16.mxu0 0
    %3319 = vmatpush2.bf16.msra.mxu0 %v2276
    %3320 = vmatprep.subr.bf16.mxu0 0
    %3321 = vmatpush2.bf16.msra.mxu0 %v2273
    %3322 = vmatprep.subr.bf16.mxu0 0
    %3323 = vmatpush2.bf16.msra.mxu0 %v2270
    %3324 = vmatprep.mubr.bf16.mxu0 %v144
    %3325 = vmatmul.mubr.bf16.gmra.mxu0 %v143
    %v3326 = vpop.f32.mrf.mxu0
    %v3327 = vadd.f32 %v3287, %v3326
    %v3328 = vpop.f32.mrf.mxu0
    %v3329 = vpop.f32.mrf.mxu0
    %v3330 = vpop.f32.mrf.mxu0
    %3331 = vdwg.mxu0
    %3332 = vmatprep.subr.bf16.mxu0 0
    %3333 = vmatpush1.bf16.msra.mxu0 %v2315
    %3334 = vmatprep.subr.bf16.mxu0 0
    %3335 = vmatpush1.bf16.msra.mxu0 %v2312
    %3336 = vmatprep.subr.bf16.mxu0 0
    %3337 = vmatpush1.bf16.msra.mxu0 %v2309
    %3338 = vmatprep.subr.bf16.mxu0 0
    %3339 = vmatpush1.bf16.msra.mxu0 %v2306
    %3340 = vmatprep.subr.bf16.mxu0 0
    %3341 = vmatpush1.bf16.msra.mxu0 %v2303
    %3342 = vmatprep.subr.bf16.mxu0 0
    %3343 = vmatpush1.bf16.msra.mxu0 %v2300
    %3344 = vmatprep.subr.bf16.mxu0 0
    %3345 = vmatpush1.bf16.msra.mxu0 %v2297
    %3346 = vmatprep.subr.bf16.mxu0 0
    %3347 = vmatpush1.bf16.msra.mxu0 %v2294
    %3348 = vmatprep.subr.bf16.mxu0 0
    %3349 = vmatpush2.bf16.msra.mxu0 %v2339
    %3350 = vmatprep.subr.bf16.mxu0 0
    %3351 = vmatpush2.bf16.msra.mxu0 %v2336
    %3352 = vmatprep.subr.bf16.mxu0 0
    %3353 = vmatpush2.bf16.msra.mxu0 %v2333
    %3354 = vmatprep.subr.bf16.mxu0 0
    %3355 = vmatpush2.bf16.msra.mxu0 %v2330
    %3356 = vmatprep.subr.bf16.mxu0 0
    %3357 = vmatpush2.bf16.msra.mxu0 %v2327
    %3358 = vmatprep.subr.bf16.mxu0 0
    %3359 = vmatpush2.bf16.msra.mxu0 %v2324
    %3360 = vmatprep.subr.bf16.mxu0 0
    %3361 = vmatpush2.bf16.msra.mxu0 %v2321
    %3362 = vmatprep.subr.bf16.mxu0 0
    %3363 = vmatpush2.bf16.msra.mxu0 %v2318
    %3364 = vmatprep.mubr.bf16.mxu0 %v146
    %3365 = vmatmul.mubr.bf16.gmra.mxu0 %v145
    %v3366 = vpop.f32.mrf.mxu0
    %v3367 = vadd.f32 %v3327, %v3366
    %v3368 = vpop.f32.mrf.mxu0
    %v3369 = vpop.f32.mrf.mxu0
    %v3370 = vpop.f32.mrf.mxu0
    %3371 = vdwg.mxu0
    %v3372 = vpack.c.bf16 %v3046, %v3046
    %v3373 = vpack.c.bf16 %v3048, %v3048
    %v3374 = vpack.c.bf16 %v3367, %v3367
    %v3375 = vmax.bf16 %v3372, 0
    %v3376 = vmax.bf16 %v3373, 0
    %v3377 = vmax.bf16 %v3374, 0
    %v3378 = vld [vmem:[#allocation8] sm:$0xf]
    %v3379 = vld [vmem:[#allocation8 + $0x4] sm:$0xf]
    %v3380 = vld [vmem:[#allocation8 + $0x8] sm:$0xf]
    %v3381 = vld [vmem:[#allocation8 + $0xc] sm:$0xf]
    %v3382 = vld [vmem:[#allocation8 + $0x10] sm:$0xf]
    %v3383 = vld [vmem:[#allocation8 + $0x14] sm:$0xf]
    %v3384 = vld [vmem:[#allocation8 + $0x18] sm:$0xf]
    %v3385 = vld [vmem:[#allocation8 + $0x1c] sm:$0xf]
    %v3386 = vld [vmem:[#allocation8 + $0x20] sm:$0xf]
    %v3387 = vld [vmem:[#allocation8 + $0x24] sm:$0xf]
    %v3388 = vld [vmem:[#allocation8 + $0x28] sm:$0xf]
    %v3389 = vld [vmem:[#allocation8 + $0x2c] sm:$0xf]
    %v3390 = vld [vmem:[#allocation8 + $0x30] sm:$0xf]
    %v3391 = vld [vmem:[#allocation8 + $0x34] sm:$0xf]
    %v3392 = vld [vmem:[#allocation8 + $0x38] sm:$0xf]
    %v3393 = vld [vmem:[#allocation8 + $0x3c] sm:$0xf]
    %v3394 = vld [vmem:[#allocation8 + $0x40] sm:$0xf]
    %v3395 = vld [vmem:[#allocation8 + $0x44] sm:$0xf]
    %v3396 = vld [vmem:[#allocation8 + $0x48] sm:$0xf]
    %v3397 = vld [vmem:[#allocation8 + $0x4c] sm:$0xf]
    %v3398 = vld [vmem:[#allocation8 + $0x50] sm:$0xf]
    %v3399 = vld [vmem:[#allocation8 + $0x54] sm:$0xf]
    %v3400 = vld [vmem:[#allocation8 + $0x58] sm:$0xf]
    %v3401 = vld [vmem:[#allocation8 + $0x5c] sm:$0xf]
    %v3402 = vld [vmem:[#allocation8 + $0x60] sm:$0xf]
    %v3403 = vld [vmem:[#allocation8 + $0x64] sm:$0xf]
    %v3404 = vld [vmem:[#allocation8 + $0x68] sm:$0xf]
    %v3405 = vld [vmem:[#allocation8 + $0x6c] sm:$0xf]
    %v3406 = vld [vmem:[#allocation8 + $0x70] sm:$0xf]
    %v3407 = vld [vmem:[#allocation8 + $0x74] sm:$0xf]
    %v3408 = vld [vmem:[#allocation8 + $0x78] sm:$0xf]
    %v3409 = vld [vmem:[#allocation8 + $0x7c] sm:$0xf]
    %v3410 = vld [vmem:[#allocation8 + $0x80] sm:$0xf]
    %v3411 = vld [vmem:[#allocation8 + $0x84] sm:$0xf]
    %v3412 = vld [vmem:[#allocation8 + $0x88] sm:$0xf]
    %v3413 = vld [vmem:[#allocation8 + $0x8c] sm:$0xf]
    %v3414 = vld [vmem:[#allocation8 + $0x90] sm:$0xf]
    %v3415 = vld [vmem:[#allocation8 + $0x94] sm:$0xf]
    %v3416 = vld [vmem:[#allocation8 + $0x98] sm:$0xf]
    %v3417 = vld [vmem:[#allocation8 + $0x9c] sm:$0xf]
    %v3418 = vld [vmem:[#allocation8 + $0xa0] sm:$0xf]
    %v3419 = vld [vmem:[#allocation8 + $0xa4] sm:$0xf]
    %v3420 = vld [vmem:[#allocation8 + $0xa8] sm:$0xf]
    %v3421 = vld [vmem:[#allocation8 + $0xac] sm:$0xf]
    %v3422 = vld [vmem:[#allocation8 + $0xb0] sm:$0xf]
    %v3423 = vld [vmem:[#allocation8 + $0xb4] sm:$0xf]
    %v3424 = vld [vmem:[#allocation8 + $0xb8] sm:$0xf]
    %v3425 = vld [vmem:[#allocation8 + $0xbc] sm:$0xf]
    %v3426 = vld [vmem:[#allocation10] sm:$0x1]
    %v3428 = vlaneseq
    %v3429 = vshrl.u32 %v3428, 7
    %v3430 = vsub.s32 0, %v3429
    %v3431 = vrot.slane %v3426, %v3430
    %v3481 = vunpack.c.l.b16 %v3378
    %v3482 = vunpack.c.l.b16 %v3379
    %v3483 = vunpack.c.l.b16 %v3380
    %v3484 = vunpack.c.l.b16 %v3381
    %v3485 = vunpack.c.l.b16 %v3382
    %v3486 = vunpack.c.l.b16 %v3383
    %v3487 = vunpack.c.l.b16 %v3384
    %v3488 = vunpack.c.l.b16 %v3385
    %v3489 = vunpack.c.l.b16 %v3386
    %v3490 = vunpack.c.l.b16 %v3387
    %v3491 = vunpack.c.l.b16 %v3388
    %v3492 = vunpack.c.l.b16 %v3389
    %v3493 = vunpack.c.l.b16 %v3390
    %v3494 = vunpack.c.l.b16 %v3391
    %v3495 = vunpack.c.l.b16 %v3392
    %v3496 = vunpack.c.l.b16 %v3393
    %v3497 = vunpack.c.l.b16 %v3394
    %v3498 = vunpack.c.l.b16 %v3395
    %v3499 = vunpack.c.l.b16 %v3396
    %v3500 = vunpack.c.l.b16 %v3397
    %v3501 = vunpack.c.l.b16 %v3398
    %v3502 = vunpack.c.l.b16 %v3399
    %v3503 = vunpack.c.l.b16 %v3400
    %v3504 = vunpack.c.l.b16 %v3401
    %v3505 = vunpack.c.l.b16 %v3402
    %v3506 = vunpack.c.l.b16 %v3403
    %v3507 = vunpack.c.l.b16 %v3404
    %v3508 = vunpack.c.l.b16 %v3405
    %v3509 = vunpack.c.l.b16 %v3406
    %v3510 = vunpack.c.l.b16 %v3407
    %v3511 = vunpack.c.l.b16 %v3408
    %v3512 = vunpack.c.l.b16 %v3409
    %v3513 = vunpack.c.l.b16 %v3410
    %v3514 = vunpack.c.l.b16 %v3411
    %v3515 = vunpack.c.l.b16 %v3412
    %v3516 = vunpack.c.l.b16 %v3413
    %v3517 = vunpack.c.l.b16 %v3414
    %v3518 = vunpack.c.l.b16 %v3415
    %v3519 = vunpack.c.l.b16 %v3416
    %v3520 = vunpack.c.l.b16 %v3417
    %v3521 = vunpack.c.l.b16 %v3418
    %v3522 = vunpack.c.l.b16 %v3419
    %v3523 = vunpack.c.l.b16 %v3420
    %v3524 = vunpack.c.l.b16 %v3421
    %v3525 = vunpack.c.l.b16 %v3422
    %v3526 = vunpack.c.l.b16 %v3423
    %v3527 = vunpack.c.l.b16 %v3424
    %v3528 = vunpack.c.l.b16 %v3425
    %v3529 = vpack.c.b16 %v3482, %v3481
    %v3530 = vpack.c.b16 %v3484, %v3483
    %v3531 = vpack.c.b16 %v3486, %v3485
    %v3532 = vpack.c.b16 %v3488, %v3487
    %v3533 = vpack.c.b16 %v3490, %v3489
    %v3534 = vpack.c.b16 %v3492, %v3491
    %v3535 = vpack.c.b16 %v3494, %v3493
    %v3536 = vpack.c.b16 %v3496, %v3495
    %v3537 = vpack.c.b16 %v3498, %v3497
    %v3538 = vpack.c.b16 %v3500, %v3499
    %v3539 = vpack.c.b16 %v3502, %v3501
    %v3540 = vpack.c.b16 %v3504, %v3503
    %v3541 = vpack.c.b16 %v3506, %v3505
    %v3542 = vpack.c.b16 %v3508, %v3507
    %v3543 = vpack.c.b16 %v3510, %v3509
    %v3544 = vpack.c.b16 %v3512, %v3511
    %v3545 = vpack.c.b16 %v3514, %v3513
    %v3546 = vpack.c.b16 %v3516, %v3515
    %v3547 = vpack.c.b16 %v3518, %v3517
    %v3548 = vpack.c.b16 %v3520, %v3519
    %v3549 = vpack.c.b16 %v3522, %v3521
    %v3550 = vpack.c.b16 %v3524, %v3523
    %v3551 = vpack.c.b16 %v3526, %v3525
    %v3552 = vpack.c.b16 %v3528, %v3527
    %3577 = vmatprep.subr.bf16.mxu0 0
    %3578 = vmatpush1.bf16.msra.mxu0 %v3536
    %3579 = vmatprep.subr.bf16.mxu0 0
    %3580 = vmatpush1.bf16.msra.mxu0 %v3535
    %3581 = vmatprep.subr.bf16.mxu0 0
    %3582 = vmatpush1.bf16.msra.mxu0 %v3534
    %3583 = vmatprep.subr.bf16.mxu0 0
    %3584 = vmatpush1.bf16.msra.mxu0 %v3533
    %3585 = vmatprep.subr.bf16.mxu0 0
    %3586 = vmatpush1.bf16.msra.mxu0 %v3532
    %3587 = vmatprep.subr.bf16.mxu0 0
    %3588 = vmatpush1.bf16.msra.mxu0 %v3531
    %3589 = vmatprep.subr.bf16.mxu0 0
    %3590 = vmatpush1.bf16.msra.mxu0 %v3530
    %3591 = vmatprep.subr.bf16.mxu0 0
    %3592 = vmatpush1.bf16.msra.mxu0 %v3529
    %3593 = vmatprep.subr.bf16.mxu0 0
    %3594 = vmatpush2.bf16.msra.mxu0 %v3544
    %3595 = vmatprep.subr.bf16.mxu0 0
    %3596 = vmatpush2.bf16.msra.mxu0 %v3543
    %3597 = vmatprep.subr.bf16.mxu0 0
    %3598 = vmatpush2.bf16.msra.mxu0 %v3542
    %3599 = vmatprep.subr.bf16.mxu0 0
    %3600 = vmatpush2.bf16.msra.mxu0 %v3541
    %3601 = vmatprep.subr.bf16.mxu0 0
    %3602 = vmatpush2.bf16.msra.mxu0 %v3540
    %3603 = vmatprep.subr.bf16.mxu0 0
    %3604 = vmatpush2.bf16.msra.mxu0 %v3539
    %3605 = vmatprep.subr.bf16.mxu0 0
    %3606 = vmatpush2.bf16.msra.mxu0 %v3538
    %3607 = vmatprep.subr.bf16.mxu0 0
    %3608 = vmatpush2.bf16.msra.mxu0 %v3537
    %3609 = vmatprep.mubr.bf16.mxu0 %v3376
    %3610 = vmatmul.mubr.bf16.gmra.mxu0 %v3375
    %v3611 = vpop.f32.mrf.mxu0
    %v3612 = vadd.f32 %v3431, %v3611
    %v3613 = vpop.f32.mrf.mxu0
    %v3614 = vpop.f32.mrf.mxu0
    %v3615 = vpop.f32.mrf.mxu0
    %3616 = vdwg.mxu0
    %3617 = vmatprep.subr.bf16.mxu0 0
    %3618 = vmatpush1.bf16.msra.mxu0 %v3552
    %3619 = vmatprep.subr.bf16.mxu0 0
    %3620 = vmatpush1.bf16.msra.mxu0 %v3551
    %3621 = vmatprep.subr.bf16.mxu0 0
    %3622 = vmatpush1.bf16.msra.mxu0 %v3550
    %3623 = vmatprep.subr.bf16.mxu0 0
    %3624 = vmatpush1.bf16.msra.mxu0 %v3549
    %3625 = vmatprep.subr.bf16.mxu0 0
    %3626 = vmatpush1.bf16.msra.mxu0 %v3548
    %3627 = vmatprep.subr.bf16.mxu0 0
    %3628 = vmatpush1.bf16.msra.mxu0 %v3547
    %3629 = vmatprep.subr.bf16.mxu0 0
    %3630 = vmatpush1.bf16.msra.mxu0 %v3546
    %3631 = vmatprep.subr.bf16.mxu0 0
    %3632 = vmatpush1.bf16.msra.mxu0 %v3545
    %3633 = vmatprep.subr.bf16.mxu0 0
    %3634 = vmatpush2.bf16.msra.mxu0 0
    %3635 = vmatprep.subr.bf16.mxu0 0
    %3636 = vmatpush2.bf16.msra.mxu0 0
    %3637 = vmatprep.subr.bf16.mxu0 0
    %3638 = vmatpush2.bf16.msra.mxu0 0
    %3639 = vmatprep.subr.bf16.mxu0 0
    %3640 = vmatpush2.bf16.msra.mxu0 0
    %3641 = vmatprep.subr.bf16.mxu0 0
    %3642 = vmatpush2.bf16.msra.mxu0 0
    %3643 = vmatprep.subr.bf16.mxu0 0
    %3644 = vmatpush2.bf16.msra.mxu0 0
    %3645 = vmatprep.subr.bf16.mxu0 0
    %3646 = vmatpush2.bf16.msra.mxu0 0
    %3647 = vmatprep.subr.bf16.mxu0 0
    %3648 = vmatpush2.bf16.msra.mxu0 0
    %3649 = vmatprep.mubr.bf16.mxu0 0
    %3650 = vmatmul.mubr.bf16.gmra.mxu0 %v3377
    %v3651 = vpop.f32.mrf.mxu0
    %v3652 = vadd.f32 %v3612, %v3651
    %v3653 = vpop.f32.mrf.mxu0
    %v3654 = vpop.f32.mrf.mxu0
    %v3655 = vpop.f32.mrf.mxu0
    %3656 = vdwg.mxu0
    %v3657 = vpack.c.bf16 %v3652, %v3652
    %v3658 = vmax.bf16 %v3657, 0
    %v3659 = vld [vmem:[#allocation11] sm:$0xf]
    %v3660 = vld [vmem:[#allocation11 + $0x4] sm:$0xf]
    %v3661 = vld [vmem:[#allocation11 + $0x8] sm:$0xf]
    %v3662 = vld [vmem:[#allocation11 + $0xc] sm:$0xf]
    %v3663 = vld [vmem:[#allocation11 + $0x10] sm:$0xf]
    %v3664 = vld [vmem:[#allocation11 + $0x14] sm:$0xf]
    %v3665 = vld [vmem:[#allocation11 + $0x18] sm:$0xf]
    %v3666 = vld [vmem:[#allocation11 + $0x1c] sm:$0xf]
    %v3667 = vld [vmem:[#allocation11 + $0x20] sm:$0xf]
    %v3668 = vld [vmem:[#allocation11 + $0x24] sm:$0xf]
    %v3669 = vld [vmem:[#allocation11 + $0x28] sm:$0xf]
    %v3670 = vld [vmem:[#allocation11 + $0x2c] sm:$0xf]
    %v3671 = vld [vmem:[#allocation11 + $0x30] sm:$0xf]
    %v3672 = vld [vmem:[#allocation11 + $0x34] sm:$0xf]
    %v3673 = vld [vmem:[#allocation11 + $0x38] sm:$0xf]
    %v3674 = vld [vmem:[#allocation11 + $0x3c] sm:$0xf]
    %v3675 = vld [vmem:[#allocation13] sm:$0x1]
    %v3677 = vlaneseq
    %v3678 = vshrl.u32 %v3677, 7
    %v3679 = vsub.s32 0, %v3678
    %v3680 = vrot.slane %v3675, %v3679
    %v3698 = vunpack.c.l.b16 %v3659
    %v3699 = vunpack.c.l.b16 %v3660
    %v3700 = vunpack.c.l.b16 %v3661
    %v3701 = vunpack.c.l.b16 %v3662
    %v3702 = vunpack.c.l.b16 %v3663
    %v3703 = vunpack.c.l.b16 %v3664
    %v3704 = vunpack.c.l.b16 %v3665
    %v3705 = vunpack.c.l.b16 %v3666
    %v3706 = vunpack.c.l.b16 %v3667
    %v3707 = vunpack.c.l.b16 %v3668
    %v3708 = vunpack.c.l.b16 %v3669
    %v3709 = vunpack.c.l.b16 %v3670
    %v3710 = vunpack.c.l.b16 %v3671
    %v3711 = vunpack.c.l.b16 %v3672
    %v3712 = vunpack.c.l.b16 %v3673
    %v3713 = vunpack.c.l.b16 %v3674
    %v3714 = vpack.c.b16 %v3699, %v3698
    %v3715 = vpack.c.b16 %v3701, %v3700
    %v3716 = vpack.c.b16 %v3703, %v3702
    %v3717 = vpack.c.b16 %v3705, %v3704
    %v3718 = vpack.c.b16 %v3707, %v3706
    %v3719 = vpack.c.b16 %v3709, %v3708
    %v3720 = vpack.c.b16 %v3711, %v3710
    %v3721 = vpack.c.b16 %v3713, %v3712
    %3730 = vmatprep.subr.bf16.mxu0 0
    %3731 = vmatpush1.bf16.msra.mxu0 %v3721
    %3732 = vmatprep.subr.bf16.mxu0 0
    %3733 = vmatpush1.bf16.msra.mxu0 %v3720
    %3734 = vmatprep.subr.bf16.mxu0 0
    %3735 = vmatpush1.bf16.msra.mxu0 %v3719
    %3736 = vmatprep.subr.bf16.mxu0 0
    %3737 = vmatpush1.bf16.msra.mxu0 %v3718
    %3738 = vmatprep.subr.bf16.mxu0 0
    %3739 = vmatpush1.bf16.msra.mxu0 %v3717
    %3740 = vmatprep.subr.bf16.mxu0 0
    %3741 = vmatpush1.bf16.msra.mxu0 %v3716
    %3742 = vmatprep.subr.bf16.mxu0 0
    %3743 = vmatpush1.bf16.msra.mxu0 %v3715
    %3744 = vmatprep.subr.bf16.mxu0 0
    %3745 = vmatpush1.bf16.msra.mxu0 %v3714
    %3746 = vmatprep.subr.bf16.mxu0 0
    %3747 = vmatpush2.bf16.msra.mxu0 0
    %3748 = vmatprep.subr.bf16.mxu0 0
    %3749 = vmatpush2.bf16.msra.mxu0 0
    %3750 = vmatprep.subr.bf16.mxu0 0
    %3751 = vmatpush2.bf16.msra.mxu0 0
    %3752 = vmatprep.subr.bf16.mxu0 0
    %3753 = vmatpush2.bf16.msra.mxu0 0
    %3754 = vmatprep.subr.bf16.mxu0 0
    %3755 = vmatpush2.bf16.msra.mxu0 0
    %3756 = vmatprep.subr.bf16.mxu0 0
    %3757 = vmatpush2.bf16.msra.mxu0 0
    %3758 = vmatprep.subr.bf16.mxu0 0
    %3759 = vmatpush2.bf16.msra.mxu0 0
    %3760 = vmatprep.subr.bf16.mxu0 0
    %3761 = vmatpush2.bf16.msra.mxu0 0
    %3762 = vmatprep.mubr.bf16.mxu0 0
    %3763 = vmatmul.mubr.bf16.gmra.mxu0 %v3658
    %v3764 = vpop.f32.mrf.mxu0
    %v3765 = vadd.f32 %v3680, %v3764
    %v3766 = vpop.f32.mrf.mxu0
    %v3767 = vpop.f32.mrf.mxu0
    %v3768 = vpop.f32.mrf.mxu0
    %3769 = vdwg.mxu0
    %v3770 = vpack.c.bf16 %v3765, %v3765
    %3771 = vst [vmem:[#allocation14] sm:$0xf] %v3770
    // Predicated region
    $region58: #{tpu_custom_call.1} parent=1 // pred_check
      _
    $region59: #{tpu_custom_call.1} parent=1 // pred_check_branch
      %3773 = sbr.rel (0) target = $region61
    $region60: #{tpu_custom_call.1} parent=1 // pred_region
      %s3775 = ssub.s32 64, 64
      %3776 = vsyncadd [#allocation4], %s3775
      %s3778 = sshll.u32 [#allocation14], 4
      %s3779 = int_to_ptr.vmem [resolvable:$true] %s3778
      %3781 = dma.vmem_to_hbm [thread:$0]  %s3779, 64, %s7, [#allocation4]
    $region61: #{tpu_custom_call.1} parent=1 // pred_fallthru
      _
    // Predicated region
    $region62: #{tpu_custom_call.1} parent=1 // pred_check
      _
    $region63: #{tpu_custom_call.1} parent=1 // pred_check_branch
      %3783 = sbr.rel (0) target = $region65
    $region64: #{tpu_custom_call.1} parent=1 // pred_region
      %3784 = dma.done [#allocation4], 64
    $region65: #{tpu_custom_call.1} parent=1 // pred_fallthru
      _
    %3785 = vsyncpa [#allocation3], 1
    %3786 = vsyncpa [#allocation6], 1
    %3787 = vsyncpa [#allocation9], 1
    %3788 = vsyncpa [#allocation12], 1
    %3789 = vsyncpa [#allocation4], 1

</llo_original>
